<compile_context>
chip_gen: v5e
topology: v5e:2x2
jax: 0.10.0
libtpu: 0.0.40
codegen_flags: <defaults>
</compile_context>

<pallas_src>
import functools

import jax
import jax.numpy as jnp
from jax.experimental import pallas as pl
from jax.experimental.pallas import tpu as pltpu


def _round_up(x, m):
    return ((x + m - 1) // m) * m


def _tpu_params():
    """(MXU M tile, VMEM limit) per TPU generation, with headroom below physical VMEM."""
    mxu_m, vmem_phys = 256, 64 * 2 ** 20                  # conservative (v7x-like) defaults
    try:
        kind = jax.devices()[0].device_kind.lower()
        if "v5 lite" in kind or "v5e" in kind or "v5litepod" in kind:
            mxu_m, vmem_phys = 128, 128 * 2 ** 20         # v5e: 128-wide MXU, 128 MiB VMEM
        elif "v6" in kind:
            mxu_m, vmem_phys = 256, 128 * 2 ** 20         # v6e
        elif "v7" in kind:
            mxu_m, vmem_phys = 256, 64 * 2 ** 20          # v7x: only 64 MiB per TensorCore
        elif "v4" in kind or "v5" in kind:
            mxu_m, vmem_phys = 128, 128 * 2 ** 20         # v4 / v5p
    except Exception:
        pass
    try:  # use the real capacity when the query is available
        vmem_phys = int(getattr(pltpu.get_tpu_info(), "vmem_capacity_bytes", vmem_phys))
    except Exception:
        pass
    vmem_limit = max(min((vmem_phys * 3) // 4, 100 * 2 ** 20), 32 * 2 ** 20)
    return mxu_m, vmem_limit


def _cout_tiling(cout, mxu_m):
    # Pad Cout up to a multiple of the MXU M dimension so every matmul uses full MXU rows
    # (small-Cout layers otherwise run at a few % utilization); padded rows are zero-weight
    # and sliced off after the call.
    cout_p = _round_up(max(cout, 1), mxu_m)
    return mxu_m, cout_p


def _fused_conv_in_relu_kernel(w_ref, x_ref, gb_ref, mask_ref, o_ref, *,
                               ksize, stride, owe, inv_p, negative_slope):
    # w_ref:    (k*k, tc, Cin)  bf16  per-tap conv weights (Cout tile rows, zero-padded)
    # x_ref:    (s*s, Cin, L)   bf16  stride-phase-split, row-flattened padded input (1 sample)
    # gb_ref:   (tc, 2)         f32   per-sample conditional gamma (col 0) / beta (col 1)
    # mask_ref: (1, P_pad)      f32   1.0 on valid output columns, 0.0 on pad / wrap columns
    # o_ref:    (tc, P_pad)     f32   output tile; also used as the matmul accumulator
    eps = jnp.float32(1e-5)
    p_pad = o_ref.shape[1]

    # Conv as k*k tap matmuls accumulated directly into the output block (no im2col buffer,
    # no extra f32 scratch).  Conv bias is intentionally omitted: the instance-norm mean
    # subtraction cancels it exactly and leaves the variance unchanged.
    for t in range(ksize * ksize):
        i, j = t // ksize, t % ksize
        pidx = (i % stride) * stride + (j % stride)      # which stride phase
        off = (i // stride) * owe + (j // stride)        # flat shift inside that phase
        contrib = jnp.dot(w_ref[t], x_ref[pidx, :, off:off + p_pad],
                          preferred_element_type=jnp.float32)
        if t == 0:
            o_ref[...] = contrib
        else:
            o_ref[...] += contrib

    # Zero the padded / wrap-around columns so they drop out of the statistics.
    o_ref[...] *= mask_ref[...]

    # Single-pass statistics over the spatial (lane) axis, all f32, true pixel count.
    # TODO(synk): switch to a two-pass / Welford variance if layers with a large DC
    # component make the E[y^2] - mean^2 cancellation an issue.
    s1 = jnp.sum(o_ref[...], axis=1, keepdims=True)
    s2 = jnp.sum(o_ref[...] * o_ref[...], axis=1, keepdims=True)
    mean = s1 * inv_p
    var = jnp.maximum(s2 * inv_p - mean * mean, 0.0)     # biased var, matches InstanceNorm

    # Fold normalization + conditional affine into one in-place scale/shift pass.
    scale = gb_ref[:, 0:1] * jax.lax.rsqrt(var + eps)    # (tc, 1)
    shift = gb_ref[:, 1:2] - mean * scale                # (tc, 1)
    if negative_slope == 0.0:
        o_ref[...] = jnp.maximum(o_ref[...] * scale + shift, 0.0)          # ReLU
    else:
        y = o_ref[...] * scale + shift
        o_ref[...] = jnp.where(y >= 0.0, y, negative_slope * y)            # LeakyReLU(0.02)


def conv_instance_relu(x, label, weight, bias, gamma_emb, beta_emb, *,
                       stride=2, activation="relu", matmul_dtype=jnp.bfloat16):
    """x: (N, Cin, H, W) f32; weight: (Cout, Cin, k, k); bias: (Cout,)
    gamma_emb/beta_emb: (labels, Cout); label: (N,) int32.  Returns (N, Cout, OH, OW) f32.

    Policy: conv operands run in bf16 on the MXU (f32 accumulation); pass
    matmul_dtype=jnp.float32 for full-precision operands.  `bias` is accepted for API
    parity but never enters the kernel: the instance-norm mean subtraction cancels it."""
    del bias
    N, Cin, H, W = x.shape
    Cout, _, k, _ = weight.shape
    pad = k // 2
    s = stride

    # reflection padding (wrapper glue)
    xp = jnp.pad(x, ((0, 0), (0, 0), (pad, pad), (pad, pad)), mode="reflect")
    Hp, Wp = H + 2 * pad, W + 2 * pad
    OH = (Hp - k) // s + 1
    OW = (Wp - k) // s + 1
    max_d = (k - 1) // s
    OHe, OWe = OH + max_d, OW + max_d

    # ---- stride-phase split (space-to-depth): 1x activation data, no k^2 im2col blow-up ----
    phases = []
    for pi in range(s):
        for pj in range(s):
            ph = xp[:, :, pi::s, pj::s][:, :, :OHe, :OWe]
            ph = jnp.pad(ph, ((0, 0), (0, 0),
                              (0, OHe - ph.shape[2]), (0, OWe - ph.shape[3])))
            phases.append(ph)
    xph = jnp.stack(phases, axis=1).reshape(N, s * s, Cin, OHe * OWe)

    p_true = OH * OW
    p_pad = _round_up(OH * OWe, 128)            # lane-dense (unmasked) output stores
    max_off = max_d * OWe + max_d               # largest in-kernel tap offset
    L = _round_up(max_off + p_pad, 128)         # flat phase length incl. tap shift headroom
    xph = jnp.pad(xph, ((0, 0), (0, 0), (0, 0), (0, L - OHe * OWe))).astype(matmul_dtype)

    # valid-column mask over the flattened extended spatial axis (zero-pads stats exactly)
    q = jnp.arange(p_pad)
    mask = ((q < OH * OWe) & ((q % OWe) < OW)).astype(jnp.float32).reshape(1, p_pad)

    # ---- weights: per-tap (k*k, Cout_padded, Cin); Cout zero-padded to the MXU M tile ----
    mxu_m, vmem_limit = _tpu_params()
    tc, cout_p = _cout_tiling(Cout, mxu_m)
    nct = cout_p // tc
    w_taps = jnp.transpose(weight, (2, 3, 0, 1)).reshape(k * k, Cout, Cin)
    w_taps = jnp.pad(w_taps, ((0, 0), (0, cout_p - Cout), (0, 0))).astype(matmul_dtype)

    # gamma/beta gathered per sample and packed into a single (Cout_p, 2) block per sample
    gamma = gamma_emb[label].astype(jnp.float32)                 # (N, Cout)
    beta = beta_emb[label].astype(jnp.float32)                   # (N, Cout)
    gb = jnp.stack([gamma, beta], axis=-1)                       # (N, Cout, 2)
    gb = jnp.pad(gb, ((0, 0), (0, cout_p - Cout), (0, 0)))

    negative_slope = 0.0 if activation == "relu" else 0.02
    kernel = functools.partial(_fused_conv_in_relu_kernel, ksize=k, stride=s, owe=OWe,
                               inv_p=1.0 / p_true, negative_slope=negative_slope)

    bytes_in = jnp.dtype(matmul_dtype).itemsize
    cost = pl.CostEstimate(
        flops=2 * N * cout_p * p_pad * Cin * k * k,
        transcendentals=N * cout_p,
        bytes_accessed=(N * s * s * Cin * L * bytes_in + k * k * cout_p * Cin * bytes_in
                        + N * cout_p * 2 * 4 + p_pad * 4 + N * cout_p * p_pad * 4),
    )

    # TODO(synk): add a Cin (reduction, 'arbitrary', last) grid axis with pl.when-gated
    # stats for layers where the per-sample phase block exceeds the per-generation VMEM
    # budget; sweep pl.Buffered(3) on the weight/gamma-beta streams on v5e/v6e.
    out = pl.pallas_call(
        kernel,
        out_shape=jax.ShapeDtypeStruct((N, cout_p, p_pad), jnp.float32),
        grid_spec=pltpu.PrefetchScalarGridSpec(
            num_scalar_prefetch=0,
            grid=(N, nct),
            in_specs=[
                pl.BlockSpec((k * k, tc, Cin), lambda n, c: (0, c, 0)),          # weights
                pl.BlockSpec((None, s * s, Cin, L), lambda n, c: (n, 0, 0, 0)),  # phases (resident over c)
                pl.BlockSpec((None, tc, 2), lambda n, c: (n, c, 0)),             # gamma/beta
                pl.BlockSpec((1, p_pad), lambda n, c: (0, 0)),                   # valid-column mask
            ],
            out_specs=pl.BlockSpec((None, tc, p_pad), lambda n, c: (n, c, 0)),
        ),
        compiler_params=pltpu.CompilerParams(
            dimension_semantics=("parallel", "arbitrary"),   # megacore shards the batch axis
            vmem_limit_bytes=vmem_limit,
        ),
        cost_estimate=cost,
    )(w_taps, xph, gb, mask)

    # (N, Cout_p, P_pad) -> (N, Cout, OH, OW): slices + reshape only, no transpose.
    out = out[:, :Cout, :OH * OWe].reshape(N, Cout, OH, OWe)[:, :, :, :OW]
    return out


def _reference(x, label, weight, bias, gamma_emb, beta_emb, *, stride=2,
               activation="relu", matmul_dtype=jnp.float32):
    """Pure-JAX reference of the module.  `matmul_dtype` lets the reference use the same
    conv-operand precision as the kernel (stats / affine / activation stay f32)."""
    k = weight.shape[2]
    pad = k // 2
    xp = jnp.pad(x, ((0, 0), (0, 0), (pad, pad), (pad, pad)), mode="reflect")
    y = jax.lax.conv_general_dilated(
        xp.astype(matmul_dtype), weight.astype(matmul_dtype), (stride, stride), "VALID",
        dimension_numbers=("NCHW", "OIHW", "NCHW"),
        preferred_element_type=jnp.float32,
    ) + bias.reshape(1, -1, 1, 1)
    mean = y.mean(axis=(2, 3), keepdims=True)
    var = y.var(axis=(2, 3), keepdims=True)            # biased, matches InstanceNorm
    yn = (y - mean) / jnp.sqrt(var + 1e-5)
    g = gamma_emb[label][:, :, None, None]
    b = beta_emb[label][:, :, None, None]
    out = yn * g + b
    if activation == "relu":
        return jnp.maximum(out, 0.0)
    return jnp.where(out >= 0.0, out, 0.02 * out)


if __name__ == "__main__":
    # small shapes consistent with the module: NCHW input, stride-2 conv
    N, Cin, H, W = 2, 4, 16, 16
    Cout, ksize, stride, n_labels = 8, 3, 2, 3

    key = jax.random.PRNGKey(0)
    kx, kw, kb, kg, kbe = jax.random.split(key, 5)
    x = jax.random.normal(kx, (N, Cin, H, W), dtype=jnp.float32)
    weight = 0.1 * jax.random.normal(kw, (Cout, Cin, ksize, ksize), dtype=jnp.float32)
    bias = 0.05 * jax.random.normal(kb, (Cout,), dtype=jnp.float32)
    gamma_emb = 1.0 + 0.1 * jax.random.normal(kg, (n_labels, Cout), dtype=jnp.float32)
    beta_emb = 0.1 * jax.random.normal(kbe, (n_labels, Cout), dtype=jnp.float32)
    label = jnp.array([0, 2], dtype=jnp.int32)

    out = conv_instance_relu(x, label, weight, bias, gamma_emb, beta_emb, stride=stride)
    out = jax.block_until_ready(out)

    # Reference at the same (bf16) conv-operand precision -> tight tolerance validates the
    # kernel logic (phase split, tap offsets, norm stats, affine fold, ReLU) exactly.
    ref = _reference(x, label, weight, bias, gamma_emb, beta_emb, stride=stride,
                     matmul_dtype=jnp.bfloat16)
    assert out.shape == ref.shape, (out.shape, ref.shape)
    assert jnp.allclose(out, ref, atol=1e-3, rtol=1e-3), float(jnp.max(jnp.abs(out - ref)))

    print("KERNEL_OK")
</pallas_src>

<mosaic_0001>
module attributes {stable_mosaic.version = 11 : i64} {
  func.func @_fused_conv_in_relu_kernel(%arg0: i32, %arg1: i32, %arg2: memref<9x256x4xbf16, #tpu.memory_space<vmem>>, %arg3: memref<1x4x4x256xbf16, #tpu.memory_space<vmem>>, %arg4: memref<1x256x2xf32, #tpu.memory_space<vmem>>, %arg5: memref<1x128xf32, #tpu.memory_space<vmem>>, %arg6: memref<1x256x128xf32, #tpu.memory_space<vmem>>) attributes {dimension_semantics = [#tpu.dimension_semantics<parallel>, #tpu.dimension_semantics<arbitrary>], iteration_bounds = array<i64: 2, 1>, scalar_prefetch = 0 : i64, scratch_operands = 0 : i64, tpu.core_type = #tpu.core_type<tc>, window_params = [{transform_indices = @transform_0, window_bounds = array<i64: 9, 256, 4>}, {transform_indices = @transform_1, window_bounds = array<i64: 1, 4, 4, 256>}, {transform_indices = @transform_2, window_bounds = array<i64: 1, 256, 2>}, {pipeline_mode = #tpu.pipeline_mode<synchronous>, transform_indices = @transform_3, window_bounds = array<i64: 1, 128>}, {transform_indices = @transform_4, window_bounds = array<i64: 1, 256, 128>}]} {
    %c0 = arith.constant 0 : index
    %c0_0 = arith.constant 0 : index
    %c0_1 = arith.constant 0 : index
    %0 = vector.load %arg2[%c0, %c0_0, %c0_1] : memref<9x256x4xbf16, #tpu.memory_space<vmem>>, vector<1x256x4xbf16>
    %1 = vector.shape_cast %0 : vector<1x256x4xbf16> to vector<256x4xbf16>
    %c0_2 = arith.constant 0 : index
    %c0_3 = arith.constant 0 : index
    %c0_4 = arith.constant 0 : index
    %c0_5 = arith.constant 0 : index
    %2 = vector.load %arg3[%c0_2, %c0_3, %c0_4, %c0_5] : memref<1x4x4x256xbf16, #tpu.memory_space<vmem>>, vector<1x1x4x128xbf16>
    %3 = vector.shape_cast %2 : vector<1x1x4x128xbf16> to vector<4x128xbf16>
    %cst = arith.constant dense<0.000000e+00> : vector<256x128xf32>
    %4 = tpu.matmul %1, %3, %cst {dimension_numbers = #tpu.dot_dimension_numbers<[1], [0], [0], [1], [0, 0, 1, 1], [], []>} : vector<256x4xbf16>, vector<4x128xbf16>, vector<256x128xf32> -> vector<256x128xf32>
    %c0_6 = arith.constant 0 : index
    %c0_7 = arith.constant 0 : index
    %c0_8 = arith.constant 0 : index
    %5 = vector.load %arg6[%c0_6, %c0_7, %c0_8] : memref<1x256x128xf32, #tpu.memory_space<vmem>>, vector<1x256x128xf32>
    %6 = vector.shape_cast %5 : vector<1x256x128xf32> to vector<256x128xf32>
    %7 = vector.shape_cast %4 : vector<256x128xf32> to vector<1x256x128xf32>
    tpu.vector_store %arg6[%c0_6, %c0_7, %c0_8], %7 {strides = array<i32>} : memref<1x256x128xf32, #tpu.memory_space<vmem>>, vector<1x256x128xf32>,
    %c1 = arith.constant 1 : index
    %c0_9 = arith.constant 0 : index
    %c0_10 = arith.constant 0 : index
    %8 = vector.load %arg2[%c1, %c0_9, %c0_10] : memref<9x256x4xbf16, #tpu.memory_space<vmem>>, vector<1x256x4xbf16>
    %9 = vector.shape_cast %8 : vector<1x256x4xbf16> to vector<256x4xbf16>
    %c0_11 = arith.constant 0 : index
    %c1_12 = arith.constant 1 : index
    %c0_13 = arith.constant 0 : index
    %c0_14 = arith.constant 0 : index
    %10 = vector.load %arg3[%c0_11, %c1_12, %c0_13, %c0_14] : memref<1x4x4x256xbf16, #tpu.memory_space<vmem>>, vector<1x1x4x128xbf16>
    %11 = vector.shape_cast %10 : vector<1x1x4x128xbf16> to vector<4x128xbf16>
    %cst_15 = arith.constant dense<0.000000e+00> : vector<256x128xf32>
    %12 = tpu.matmul %9, %11, %cst_15 {dimension_numbers = #tpu.dot_dimension_numbers<[1], [0], [0], [1], [0, 0, 1, 1], [], []>} : vector<256x4xbf16>, vector<4x128xbf16>, vector<256x128xf32> -> vector<256x128xf32>
    %c0_16 = arith.constant 0 : index
    %c0_17 = arith.constant 0 : index
    %c0_18 = arith.constant 0 : index
    %13 = vector.load %arg6[%c0_16, %c0_17, %c0_18] : memref<1x256x128xf32, #tpu.memory_space<vmem>>, vector<1x256x128xf32>
    %14 = vector.shape_cast %13 : vector<1x256x128xf32> to vector<256x128xf32>
    %15 = arith.addf %14, %12 : vector<256x128xf32>
    %c0_19 = arith.constant 0 : index
    %c0_20 = arith.constant 0 : index
    %c0_21 = arith.constant 0 : index
    %16 = vector.load %arg6[%c0_19, %c0_20, %c0_21] : memref<1x256x128xf32, #tpu.memory_space<vmem>>, vector<1x256x128xf32>
    %17 = vector.shape_cast %16 : vector<1x256x128xf32> to vector<256x128xf32>
    %18 = vector.shape_cast %15 : vector<256x128xf32> to vector<1x256x128xf32>
    tpu.vector_store %arg6[%c0_19, %c0_20, %c0_21], %18 {strides = array<i32>} : memref<1x256x128xf32, #tpu.memory_space<vmem>>, vector<1x256x128xf32>,
    %c2 = arith.constant 2 : index
    %c0_22 = arith.constant 0 : index
    %c0_23 = arith.constant 0 : index
    %19 = vector.load %arg2[%c2, %c0_22, %c0_23] : memref<9x256x4xbf16, #tpu.memory_space<vmem>>, vector<1x256x4xbf16>
    %20 = vector.shape_cast %19 : vector<1x256x4xbf16> to vector<256x4xbf16>
    %c0_24 = arith.constant 0 : index
    %c0_25 = arith.constant 0 : index
    %c0_26 = arith.constant 0 : index
    %c1_27 = arith.constant 1 : index
    %21 = vector.load %arg3[%c0_24, %c0_25, %c0_26, %c1_27] : memref<1x4x4x256xbf16, #tpu.memory_space<vmem>>, vector<1x1x4x128xbf16>
    %22 = vector.shape_cast %21 : vector<1x1x4x128xbf16> to vector<4x128xbf16>
    %cst_28 = arith.constant dense<0.000000e+00> : vector<256x128xf32>
    %23 = tpu.matmul %20, %22, %cst_28 {dimension_numbers = #tpu.dot_dimension_numbers<[1], [0], [0], [1], [0, 0, 1, 1], [], []>} : vector<256x4xbf16>, vector<4x128xbf16>, vector<256x128xf32> -> vector<256x128xf32>
    %c0_29 = arith.constant 0 : index
    %c0_30 = arith.constant 0 : index
    %c0_31 = arith.constant 0 : index
    %24 = vector.load %arg6[%c0_29, %c0_30, %c0_31] : memref<1x256x128xf32, #tpu.memory_space<vmem>>, vector<1x256x128xf32>
    %25 = vector.shape_cast %24 : vector<1x256x128xf32> to vector<256x128xf32>
    %26 = arith.addf %25, %23 : vector<256x128xf32>
    %c0_32 = arith.constant 0 : index
    %c0_33 = arith.constant 0 : index
    %c0_34 = arith.constant 0 : index
    %27 = vector.load %arg6[%c0_32, %c0_33, %c0_34] : memref<1x256x128xf32, #tpu.memory_space<vmem>>, vector<1x256x128xf32>
    %28 = vector.shape_cast %27 : vector<1x256x128xf32> to vector<256x128xf32>
    %29 = vector.shape_cast %26 : vector<256x128xf32> to vector<1x256x128xf32>
    tpu.vector_store %arg6[%c0_32, %c0_33, %c0_34], %29 {strides = array<i32>} : memref<1x256x128xf32, #tpu.memory_space<vmem>>, vector<1x256x128xf32>,
    %c3 = arith.constant 3 : index
    %c0_35 = arith.constant 0 : index
    %c0_36 = arith.constant 0 : index
    %30 = vector.load %arg2[%c3, %c0_35, %c0_36] : memref<9x256x4xbf16, #tpu.memory_space<vmem>>, vector<1x256x4xbf16>
    %31 = vector.shape_cast %30 : vector<1x256x4xbf16> to vector<256x4xbf16>
    %c0_37 = arith.constant 0 : index
    %c2_38 = arith.constant 2 : index
    %c0_39 = arith.constant 0 : index
    %c0_40 = arith.constant 0 : index
    %32 = vector.load %arg3[%c0_37, %c2_38, %c0_39, %c0_40] : memref<1x4x4x256xbf16, #tpu.memory_space<vmem>>, vector<1x1x4x128xbf16>
    %33 = vector.shape_cast %32 : vector<1x1x4x128xbf16> to vector<4x128xbf16>
    %cst_41 = arith.constant dense<0.000000e+00> : vector<256x128xf32>
    %34 = tpu.matmul %31, %33, %cst_41 {dimension_numbers = #tpu.dot_dimension_numbers<[1], [0], [0], [1], [0, 0, 1, 1], [], []>} : vector<256x4xbf16>, vector<4x128xbf16>, vector<256x128xf32> -> vector<256x128xf32>
    %c0_42 = arith.constant 0 : index
    %c0_43 = arith.constant 0 : index
    %c0_44 = arith.constant 0 : index
    %35 = vector.load %arg6[%c0_42, %c0_43, %c0_44] : memref<1x256x128xf32, #tpu.memory_space<vmem>>, vector<1x256x128xf32>
    %36 = vector.shape_cast %35 : vector<1x256x128xf32> to vector<256x128xf32>
    %37 = arith.addf %36, %34 : vector<256x128xf32>
    %c0_45 = arith.constant 0 : index
    %c0_46 = arith.constant 0 : index
    %c0_47 = arith.constant 0 : index
    %38 = vector.load %arg6[%c0_45, %c0_46, %c0_47] : memref<1x256x128xf32, #tpu.memory_space<vmem>>, vector<1x256x128xf32>
    %39 = vector.shape_cast %38 : vector<1x256x128xf32> to vector<256x128xf32>
    %40 = vector.shape_cast %37 : vector<256x128xf32> to vector<1x256x128xf32>
    tpu.vector_store %arg6[%c0_45, %c0_46, %c0_47], %40 {strides = array<i32>} : memref<1x256x128xf32, #tpu.memory_space<vmem>>, vector<1x256x128xf32>,
    %c4 = arith.constant 4 : index
    %c0_48 = arith.constant 0 : index
    %c0_49 = arith.constant 0 : index
    %41 = vector.load %arg2[%c4, %c0_48, %c0_49] : memref<9x256x4xbf16, #tpu.memory_space<vmem>>, vector<1x256x4xbf16>
    %42 = vector.shape_cast %41 : vector<1x256x4xbf16> to vector<256x4xbf16>
    %c0_50 = arith.constant 0 : index
    %c3_51 = arith.constant 3 : index
    %c0_52 = arith.constant 0 : index
    %c0_53 = arith.constant 0 : index
    %43 = vector.load %arg3[%c0_50, %c3_51, %c0_52, %c0_53] : memref<1x4x4x256xbf16, #tpu.memory_space<vmem>>, vector<1x1x4x128xbf16>
    %44 = vector.shape_cast %43 : vector<1x1x4x128xbf16> to vector<4x128xbf16>
    %cst_54 = arith.constant dense<0.000000e+00> : vector<256x128xf32>
    %45 = tpu.matmul %42, %44, %cst_54 {dimension_numbers = #tpu.dot_dimension_numbers<[1], [0], [0], [1], [0, 0, 1, 1], [], []>} : vector<256x4xbf16>, vector<4x128xbf16>, vector<256x128xf32> -> vector<256x128xf32>
    %c0_55 = arith.constant 0 : index
    %c0_56 = arith.constant 0 : index
    %c0_57 = arith.constant 0 : index
    %46 = vector.load %arg6[%c0_55, %c0_56, %c0_57] : memref<1x256x128xf32, #tpu.memory_space<vmem>>, vector<1x256x128xf32>
    %47 = vector.shape_cast %46 : vector<1x256x128xf32> to vector<256x128xf32>
    %48 = arith.addf %47, %45 : vector<256x128xf32>
    %c0_58 = arith.constant 0 : index
    %c0_59 = arith.constant 0 : index
    %c0_60 = arith.constant 0 : index
    %49 = vector.load %arg6[%c0_58, %c0_59, %c0_60] : memref<1x256x128xf32, #tpu.memory_space<vmem>>, vector<1x256x128xf32>
    %50 = vector.shape_cast %49 : vector<1x256x128xf32> to vector<256x128xf32>
    %51 = vector.shape_cast %48 : vector<256x128xf32> to vector<1x256x128xf32>
    tpu.vector_store %arg6[%c0_58, %c0_59, %c0_60], %51 {strides = array<i32>} : memref<1x256x128xf32, #tpu.memory_space<vmem>>, vector<1x256x128xf32>,
    %c5 = arith.constant 5 : index
    %c0_61 = arith.constant 0 : index
    %c0_62 = arith.constant 0 : index
    %52 = vector.load %arg2[%c5, %c0_61, %c0_62] : memref<9x256x4xbf16, #tpu.memory_space<vmem>>, vector<1x256x4xbf16>
    %53 = vector.shape_cast %52 : vector<1x256x4xbf16> to vector<256x4xbf16>
    %c0_63 = arith.constant 0 : index
    %c2_64 = arith.constant 2 : index
    %c0_65 = arith.constant 0 : index
    %c1_66 = arith.constant 1 : index
    %54 = vector.load %arg3[%c0_63, %c2_64, %c0_65, %c1_66] : memref<1x4x4x256xbf16, #tpu.memory_space<vmem>>, vector<1x1x4x128xbf16>
    %55 = vector.shape_cast %54 : vector<1x1x4x128xbf16> to vector<4x128xbf16>
    %cst_67 = arith.constant dense<0.000000e+00> : vector<256x128xf32>
    %56 = tpu.matmul %53, %55, %cst_67 {dimension_numbers = #tpu.dot_dimension_numbers<[1], [0], [0], [1], [0, 0, 1, 1], [], []>} : vector<256x4xbf16>, vector<4x128xbf16>, vector<256x128xf32> -> vector<256x128xf32>
    %c0_68 = arith.constant 0 : index
    %c0_69 = arith.constant 0 : index
    %c0_70 = arith.constant 0 : index
    %57 = vector.load %arg6[%c0_68, %c0_69, %c0_70] : memref<1x256x128xf32, #tpu.memory_space<vmem>>, vector<1x256x128xf32>
    %58 = vector.shape_cast %57 : vector<1x256x128xf32> to vector<256x128xf32>
    %59 = arith.addf %58, %56 : vector<256x128xf32>
    %c0_71 = arith.constant 0 : index
    %c0_72 = arith.constant 0 : index
    %c0_73 = arith.constant 0 : index
    %60 = vector.load %arg6[%c0_71, %c0_72, %c0_73] : memref<1x256x128xf32, #tpu.memory_space<vmem>>, vector<1x256x128xf32>
    %61 = vector.shape_cast %60 : vector<1x256x128xf32> to vector<256x128xf32>
    %62 = vector.shape_cast %59 : vector<256x128xf32> to vector<1x256x128xf32>
    tpu.vector_store %arg6[%c0_71, %c0_72, %c0_73], %62 {strides = array<i32>} : memref<1x256x128xf32, #tpu.memory_space<vmem>>, vector<1x256x128xf32>,
    %c6 = arith.constant 6 : index
    %c0_74 = arith.constant 0 : index
    %c0_75 = arith.constant 0 : index
    %63 = vector.load %arg2[%c6, %c0_74, %c0_75] : memref<9x256x4xbf16, #tpu.memory_space<vmem>>, vector<1x256x4xbf16>
    %64 = vector.shape_cast %63 : vector<1x256x4xbf16> to vector<256x4xbf16>
    %c0_76 = arith.constant 0 : index
    %c0_77 = arith.constant 0 : index
    %c0_78 = arith.constant 0 : index
    %c9 = arith.constant 9 : index
    %65 = vector.load %arg3[%c0_76, %c0_77, %c0_78, %c9] : memref<1x4x4x256xbf16, #tpu.memory_space<vmem>>, vector<1x1x4x128xbf16>
    %66 = vector.shape_cast %65 : vector<1x1x4x128xbf16> to vector<4x128xbf16>
    %cst_79 = arith.constant dense<0.000000e+00> : vector<256x128xf32>
    %67 = tpu.matmul %64, %66, %cst_79 {dimension_numbers = #tpu.dot_dimension_numbers<[1], [0], [0], [1], [0, 0, 1, 1], [], []>} : vector<256x4xbf16>, vector<4x128xbf16>, vector<256x128xf32> -> vector<256x128xf32>
    %c0_80 = arith.constant 0 : index
    %c0_81 = arith.constant 0 : index
    %c0_82 = arith.constant 0 : index
    %68 = vector.load %arg6[%c0_80, %c0_81, %c0_82] : memref<1x256x128xf32, #tpu.memory_space<vmem>>, vector<1x256x128xf32>
    %69 = vector.shape_cast %68 : vector<1x256x128xf32> to vector<256x128xf32>
    %70 = arith.addf %69, %67 : vector<256x128xf32>
    %c0_83 = arith.constant 0 : index
    %c0_84 = arith.constant 0 : index
    %c0_85 = arith.constant 0 : index
    %71 = vector.load %arg6[%c0_83, %c0_84, %c0_85] : memref<1x256x128xf32, #tpu.memory_space<vmem>>, vector<1x256x128xf32>
    %72 = vector.shape_cast %71 : vector<1x256x128xf32> to vector<256x128xf32>
    %73 = vector.shape_cast %70 : vector<256x128xf32> to vector<1x256x128xf32>
    tpu.vector_store %arg6[%c0_83, %c0_84, %c0_85], %73 {strides = array<i32>} : memref<1x256x128xf32, #tpu.memory_space<vmem>>, vector<1x256x128xf32>,
    %c7 = arith.constant 7 : index
    %c0_86 = arith.constant 0 : index
    %c0_87 = arith.constant 0 : index
    %74 = vector.load %arg2[%c7, %c0_86, %c0_87] : memref<9x256x4xbf16, #tpu.memory_space<vmem>>, vector<1x256x4xbf16>
    %75 = vector.shape_cast %74 : vector<1x256x4xbf16> to vector<256x4xbf16>
    %c0_88 = arith.constant 0 : index
    %c1_89 = arith.constant 1 : index
    %c0_90 = arith.constant 0 : index
    %c9_91 = arith.constant 9 : index
    %76 = vector.load %arg3[%c0_88, %c1_89, %c0_90, %c9_91] : memref<1x4x4x256xbf16, #tpu.memory_space<vmem>>, vector<1x1x4x128xbf16>
    %77 = vector.shape_cast %76 : vector<1x1x4x128xbf16> to vector<4x128xbf16>
    %cst_92 = arith.constant dense<0.000000e+00> : vector<256x128xf32>
    %78 = tpu.matmul %75, %77, %cst_92 {dimension_numbers = #tpu.dot_dimension_numbers<[1], [0], [0], [1], [0, 0, 1, 1], [], []>} : vector<256x4xbf16>, vector<4x128xbf16>, vector<256x128xf32> -> vector<256x128xf32>
    %c0_93 = arith.constant 0 : index
    %c0_94 = arith.constant 0 : index
    %c0_95 = arith.constant 0 : index
    %79 = vector.load %arg6[%c0_93, %c0_94, %c0_95] : memref<1x256x128xf32, #tpu.memory_space<vmem>>, vector<1x256x128xf32>
    %80 = vector.shape_cast %79 : vector<1x256x128xf32> to vector<256x128xf32>
    %81 = arith.addf %80, %78 : vector<256x128xf32>
    %c0_96 = arith.constant 0 : index
    %c0_97 = arith.constant 0 : index
    %c0_98 = arith.constant 0 : index
    %82 = vector.load %arg6[%c0_96, %c0_97, %c0_98] : memref<1x256x128xf32, #tpu.memory_space<vmem>>, vector<1x256x128xf32>
    %83 = vector.shape_cast %82 : vector<1x256x128xf32> to vector<256x128xf32>
    %84 = vector.shape_cast %81 : vector<256x128xf32> to vector<1x256x128xf32>
    tpu.vector_store %arg6[%c0_96, %c0_97, %c0_98], %84 {strides = array<i32>} : memref<1x256x128xf32, #tpu.memory_space<vmem>>, vector<1x256x128xf32>,
    %c8 = arith.constant 8 : index
    %c0_99 = arith.constant 0 : index
    %c0_100 = arith.constant 0 : index
    %85 = vector.load %arg2[%c8, %c0_99, %c0_100] : memref<9x256x4xbf16, #tpu.memory_space<vmem>>, vector<1x256x4xbf16>
    %86 = vector.shape_cast %85 : vector<1x256x4xbf16> to vector<256x4xbf16>
    %c0_101 = arith.constant 0 : index
    %c0_102 = arith.constant 0 : index
    %c0_103 = arith.constant 0 : index
    %c10 = arith.constant 10 : index
    %87 = vector.load %arg3[%c0_101, %c0_102, %c0_103, %c10] : memref<1x4x4x256xbf16, #tpu.memory_space<vmem>>, vector<1x1x4x128xbf16>
    %88 = vector.shape_cast %87 : vector<1x1x4x128xbf16> to vector<4x128xbf16>
    %cst_104 = arith.constant dense<0.000000e+00> : vector<256x128xf32>
    %89 = tpu.matmul %86, %88, %cst_104 {dimension_numbers = #tpu.dot_dimension_numbers<[1], [0], [0], [1], [0, 0, 1, 1], [], []>} : vector<256x4xbf16>, vector<4x128xbf16>, vector<256x128xf32> -> vector<256x128xf32>
    %c0_105 = arith.constant 0 : index
    %c0_106 = arith.constant 0 : index
    %c0_107 = arith.constant 0 : index
    %90 = vector.load %arg6[%c0_105, %c0_106, %c0_107] : memref<1x256x128xf32, #tpu.memory_space<vmem>>, vector<1x256x128xf32>
    %91 = vector.shape_cast %90 : vector<1x256x128xf32> to vector<256x128xf32>
    %92 = arith.addf %91, %89 : vector<256x128xf32>
    %c0_108 = arith.constant 0 : index
    %c0_109 = arith.constant 0 : index
    %c0_110 = arith.constant 0 : index
    %93 = vector.load %arg6[%c0_108, %c0_109, %c0_110] : memref<1x256x128xf32, #tpu.memory_space<vmem>>, vector<1x256x128xf32>
    %94 = vector.shape_cast %93 : vector<1x256x128xf32> to vector<256x128xf32>
    %95 = vector.shape_cast %92 : vector<256x128xf32> to vector<1x256x128xf32>
    tpu.vector_store %arg6[%c0_108, %c0_109, %c0_110], %95 {strides = array<i32>} : memref<1x256x128xf32, #tpu.memory_space<vmem>>, vector<1x256x128xf32>,
    %c0_111 = arith.constant 0 : index
    %c0_112 = arith.constant 0 : index
    %c0_113 = arith.constant 0 : index
    %96 = vector.load %arg6[%c0_111, %c0_112, %c0_113] : memref<1x256x128xf32, #tpu.memory_space<vmem>>, vector<1x256x128xf32>
    %97 = vector.shape_cast %96 : vector<1x256x128xf32> to vector<256x128xf32>
    %c0_114 = arith.constant 0 : index
    %c0_115 = arith.constant 0 : index
    %98 = vector.load %arg5[%c0_114, %c0_115] : memref<1x128xf32, #tpu.memory_space<vmem>>, vector<1x128xf32>
    %99 = vector.broadcast %98 : vector<1x128xf32> to vector<256x128xf32>
    %100 = arith.mulf %97, %99 : vector<256x128xf32>
    %c0_116 = arith.constant 0 : index
    %c0_117 = arith.constant 0 : index
    %c0_118 = arith.constant 0 : index
    %101 = vector.load %arg6[%c0_116, %c0_117, %c0_118] : memref<1x256x128xf32, #tpu.memory_space<vmem>>, vector<1x256x128xf32>
    %102 = vector.shape_cast %101 : vector<1x256x128xf32> to vector<256x128xf32>
    %103 = vector.shape_cast %100 : vector<256x128xf32> to vector<1x256x128xf32>
    tpu.vector_store %arg6[%c0_116, %c0_117, %c0_118], %103 {strides = array<i32>} : memref<1x256x128xf32, #tpu.memory_space<vmem>>, vector<1x256x128xf32>,
    %c0_119 = arith.constant 0 : index
    %c0_120 = arith.constant 0 : index
    %c0_121 = arith.constant 0 : index
    %104 = vector.load %arg6[%c0_119, %c0_120, %c0_121] : memref<1x256x128xf32, #tpu.memory_space<vmem>>, vector<1x256x128xf32>
    %105 = vector.shape_cast %104 : vector<1x256x128xf32> to vector<256x128xf32>
    %cst_122 = arith.constant dense<0.000000e+00> : vector<256xf32>
    %106 = vector.multi_reduction <add>, %105, %cst_122 [1] : vector<256x128xf32> to vector<256xf32>
    %107 = vector.shape_cast %106 : vector<256xf32> to vector<256x1xf32>
    %c0_123 = arith.constant 0 : index
    %c0_124 = arith.constant 0 : index
    %c0_125 = arith.constant 0 : index
    %108 = vector.load %arg6[%c0_123, %c0_124, %c0_125] : memref<1x256x128xf32, #tpu.memory_space<vmem>>, vector<1x256x128xf32>
    %109 = vector.shape_cast %108 : vector<1x256x128xf32> to vector<256x128xf32>
    %c0_126 = arith.constant 0 : index
    %c0_127 = arith.constant 0 : index
    %c0_128 = arith.constant 0 : index
    %110 = vector.load %arg6[%c0_126, %c0_127, %c0_128] : memref<1x256x128xf32, #tpu.memory_space<vmem>>, vector<1x256x128xf32>
    %111 = vector.shape_cast %110 : vector<1x256x128xf32> to vector<256x128xf32>
    %112 = arith.mulf %109, %111 : vector<256x128xf32>
    %cst_129 = arith.constant dense<0.000000e+00> : vector<256xf32>
    %113 = vector.multi_reduction <add>, %112, %cst_129 [1] : vector<256x128xf32> to vector<256xf32>
    %114 = vector.shape_cast %113 : vector<256xf32> to vector<256x1xf32>
    %cst_130 = arith.constant 1.562500e-02 : f32
    %115 = vector.broadcast %cst_130 : f32 to vector<256x1xf32>
    %116 = arith.mulf %107, %115 : vector<256x1xf32>
    %cst_131 = arith.constant 1.562500e-02 : f32
    %117 = vector.broadcast %cst_131 : f32 to vector<256x1xf32>
    %118 = arith.mulf %114, %117 : vector<256x1xf32>
    %119 = arith.mulf %116, %116 : vector<256x1xf32>
    %120 = arith.subf %118, %119 : vector<256x1xf32>
    %cst_132 = arith.constant 0.000000e+00 : f32
    %121 = vector.broadcast %cst_132 : f32 to vector<256x1xf32>
    %122 = arith.maximumf %120, %121 : vector<256x1xf32>
    %c0_133 = arith.constant 0 : index
    %c0_134 = arith.constant 0 : index
    %c0_135 = arith.constant 0 : index
    %123 = vector.load %arg4[%c0_133, %c0_134, %c0_135] : memref<1x256x2xf32, #tpu.memory_space<vmem>>, vector<1x256x1xf32>
    %124 = vector.shape_cast %123 : vector<1x256x1xf32> to vector<256x1xf32>
    %cst_136 = arith.constant 9.99999974E-6 : f32
    %125 = vector.broadcast %cst_136 : f32 to vector<256x1xf32>
    %126 = arith.addf %122, %125 : vector<256x1xf32>
    %127 = math.rsqrt %126 : vector<256x1xf32>
    %128 = arith.mulf %124, %127 : vector<256x1xf32>
    %c0_137 = arith.constant 0 : index
    %c0_138 = arith.constant 0 : index
    %c1_139 = arith.constant 1 : index
    %129 = vector.load %arg4[%c0_137, %c0_138, %c1_139] : memref<1x256x2xf32, #tpu.memory_space<vmem>>, vector<1x256x1xf32>
    %130 = vector.shape_cast %129 : vector<1x256x1xf32> to vector<256x1xf32>
    %131 = arith.mulf %116, %128 : vector<256x1xf32>
    %132 = arith.subf %130, %131 : vector<256x1xf32>
    %c0_140 = arith.constant 0 : index
    %c0_141 = arith.constant 0 : index
    %c0_142 = arith.constant 0 : index
    %133 = vector.load %arg6[%c0_140, %c0_141, %c0_142] : memref<1x256x128xf32, #tpu.memory_space<vmem>>, vector<1x256x128xf32>
    %134 = vector.shape_cast %133 : vector<1x256x128xf32> to vector<256x128xf32>
    %135 = vector.broadcast %128 : vector<256x1xf32> to vector<256x128xf32>
    %136 = arith.mulf %134, %135 : vector<256x128xf32>
    %137 = vector.broadcast %132 : vector<256x1xf32> to vector<256x128xf32>
    %138 = arith.addf %136, %137 : vector<256x128xf32>
    %cst_143 = arith.constant 0.000000e+00 : f32
    %139 = vector.broadcast %cst_143 : f32 to vector<256x128xf32>
    %140 = arith.maximumf %138, %139 : vector<256x128xf32>
    %c0_144 = arith.constant 0 : index
    %c0_145 = arith.constant 0 : index
    %c0_146 = arith.constant 0 : index
    %141 = vector.load %arg6[%c0_144, %c0_145, %c0_146] : memref<1x256x128xf32, #tpu.memory_space<vmem>>, vector<1x256x128xf32>
    %142 = vector.shape_cast %141 : vector<1x256x128xf32> to vector<256x128xf32>
    %143 = vector.shape_cast %140 : vector<256x128xf32> to vector<1x256x128xf32>
    tpu.vector_store %arg6[%c0_144, %c0_145, %c0_146], %143 {strides = array<i32>} : memref<1x256x128xf32, #tpu.memory_space<vmem>>, vector<1x256x128xf32>,
    return
  }
  func.func @transform_0(%arg0: i32, %arg1: i32) -> (i32, i32, i32) {
    %c0_i32 = arith.constant 0 : i32
    %c0_i32_0 = arith.constant 0 : i32
    %c0_i32_1 = arith.constant 0 : i32
    return %c0_i32, %arg1, %c0_i32_0 : i32, i32, i32
  }
  func.func @transform_1(%arg0: i32, %arg1: i32) -> (i32, i32, i32, i32) {
    %c0_i32 = arith.constant 0 : i32
    %c0_i32_0 = arith.constant 0 : i32
    %c0_i32_1 = arith.constant 0 : i32
    %c0_i32_2 = arith.constant 0 : i32
    return %arg0, %c0_i32, %c0_i32_0, %c0_i32_1 : i32, i32, i32, i32
  }
  func.func @transform_2(%arg0: i32, %arg1: i32) -> (i32, i32, i32) {
    %c0_i32 = arith.constant 0 : i32
    %c0_i32_0 = arith.constant 0 : i32
    return %arg0, %arg1, %c0_i32 : i32, i32, i32
  }
  func.func @transform_3(%arg0: i32, %arg1: i32) -> (i32, i32) {
    %c0_i32 = arith.constant 0 : i32
    %c0_i32_0 = arith.constant 0 : i32
    %c0_i32_1 = arith.constant 0 : i32
    return %c0_i32, %c0_i32_0 : i32, i32
  }
  func.func @transform_4(%arg0: i32, %arg1: i32) -> (i32, i32, i32) {
    %c0_i32 = arith.constant 0 : i32
    %c0_i32_0 = arith.constant 0 : i32
    return %arg0, %arg1, %c0_i32 : i32, i32, i32
  }
}

</mosaic_0001>

<llo_original>
// kernel: tpu_custom_call.1
$region0: #{tpu_custom_call.1}
  #allocation0 [shape = 'u32[]', space=smem, size = 0x4, offset = 0x4, fixed_abs, tag = 'smem constant byte address 0x4 - core index']
  #allocation1 [shape = 'u32[72,128]{1,0:T(1,128)}', space=vmem, size = 0x9000, scoped, tag = 'internal scratch']
  %s0 = inlined_call_operand.vmem [shape: bf16[9,256,4], index: 0, kind: input, shape index: {}]
  %s1 = inlined_call_operand.vmem [shape: bf16[2,4,4,256], index: 1, kind: input, shape index: {}]
  %s2 = inlined_call_operand.vmem [shape: f32[2,256,2], index: 2, kind: input, shape index: {}]
  %s3 = inlined_call_operand.vmem [shape: f32[1,128], index: 3, kind: input, shape index: {}]
  %s4 = inlined_call_operand.hbm [shape: f32[2,256,128], index: 4, kind: output, shape index: {}]
  %s5 = sld [smem:[#allocation0]]
  $region49: #{tpu_custom_call.1} parent=0
    _
  %s7 = ssub.s32 1, %s5
  %s8 = scalar_select 0, %s7, %s5
  $region1: #{tpu_custom_call.1} parent=0
    #allocation2 [shape = 'u8[262144]{0}', space=vmem, size = 0x40000, scoped, tag = 'output window, operand 0']
    #allocation3 [shape = 's32[2]{0}', space=sflag, size = 0x8, scoped, tag = 'scoped memory for tpu_custom_call.1']
    %9 = vsyncpa [#allocation3], 0
    %s10 = scalar_lea.sflag [#allocation3], 1
    %11 = vsyncpa %s10, 0
    loop: start=0, step=1, limit=4
    $region2: #{tpu_custom_call.1} parent=1 // loop_pre_header
      _
    $region3: #{tpu_custom_call.1} parent=1 // loop_header
      %s13 = sphi 0, %s17
      %p14 = scmp.ge.s32.totalorder %s13, 4
      %s20 = sphi 0, %s32
      %s21 = sphi 0, %s28
      %s22 = sphi 0, %s20
      %s23 = sphi 0, %s21
      %s24 = sphi 0, %s22
      %s25 = sphi 0, %s23
      %s35 = sphi 0, %s37
      %s38 = sphi 0, %s35
      %s39 = sphi 0, %s38
      %s55 = sphi 0, %s39
      %s61 = sphi 0, %s63
      %s64 = sphi 0, %s61
      %s65 = sphi 0, %s64
      %s81 = sphi 0, %s65
      %s89 = sphi 0, %s91
      %s92 = sphi 0, %s89
      %s93 = sphi 0, %s92
      %s109 = sphi 0, %s93
      %s113 = sphi 0, %s113
      %s115 = sphi 0, %s113
      %s116 = sphi 0, %s115
      %s130 = sphi 0, %s116
      %s138 = sphi 0, %s140
      %s141 = sphi 0, %s138
      %s142 = sphi 0, %s141
      %s158 = sphi 0, %s142
    $region4: #{tpu_custom_call.1} parent=1 // loop_header_branch
      %16 = sbr.rel (%p14) target = $region8
    $region5: #{tpu_custom_call.1} parent=1 // loop_body
      %s18 = ssub.s32 %s13, 1
      %s19 = ssub.s32 %s13, 2
      %s26 = sadd.s32 1, %s21
      %p27 = scmp.ge.s32.totalorder %s26, 1
      %s28 = scalar_select %p27, 0, %s26
      %s29 = sadd.s32 1, %s20
      %s30 = scalar_select %p27, %s29, %s20
      %p31 = scmp.ge.s32.totalorder %s30, 2
      %s32 = scalar_select %p31, 0, %s30
      %s33 = ssub.s32 %s21, %s28
      %p34 = scmp.eq.s32.totalorder %s33, 0
      %s36 = sadd.s32 %s35, 1
      %s37 = scalar_select %p34, %s35, %s36
      %p40 = pneg %p34
      %p41 = scmp.eq.s32.totalorder %s13, 1
      %p42 = por %p40, %p41
      %p43 = scmp.ne.s32.totalorder %s35, %s38
      %p44 = scmp.eq.s32.totalorder %s13, 0
      %p45 = por %p43, %p44
      %p46 = scmp.ne.s32.totalorder %s35, %s38
      %p47 = scmp.eq.s32.totalorder %s18, 1
      %p48 = por %p46, %p47
      %p49 = scmp.ne.s32.totalorder %s38, %s39
      %p50 = scmp.eq.s32.totalorder %s18, 0
      %p51 = por %p49, %p50
      %p52 = scmp.ne.s32.totalorder %s38, %s39
      %p53 = scmp.eq.s32.totalorder %s19, 1
      %p54 = por %p52, %p53
      %p56 = scmp.ne.s32.totalorder %s39, %s55
      %p57 = scmp.eq.s32.totalorder %s19, 0
      %p58 = por %p56, %p57
      %s59 = ssub.s32 %s20, %s32
      %p60 = scmp.eq.s32.totalorder %s59, 0
      %s62 = sadd.s32 %s61, 1
      %s63 = scalar_select %p60, %s61, %s62
      %p66 = pneg %p60
      %p67 = scmp.eq.s32.totalorder %s13, 1
      %p68 = por %p66, %p67
      %p69 = scmp.ne.s32.totalorder %s61, %s64
      %p70 = scmp.eq.s32.totalorder %s13, 0
      %p71 = por %p69, %p70
      %p72 = scmp.ne.s32.totalorder %s61, %s64
      %p73 = scmp.eq.s32.totalorder %s18, 1
      %p74 = por %p72, %p73
      %p75 = scmp.ne.s32.totalorder %s64, %s65
      %p76 = scmp.eq.s32.totalorder %s18, 0
      %p77 = por %p75, %p76
      %p78 = scmp.ne.s32.totalorder %s64, %s65
      %p79 = scmp.eq.s32.totalorder %s19, 1
      %p80 = por %p78, %p79
      %p82 = scmp.ne.s32.totalorder %s65, %s81
      %p83 = scmp.eq.s32.totalorder %s19, 0
      %p84 = por %p82, %p83
      %s85 = ssub.s32 %s20, %s32
      %s86 = ssub.s32 %s21, %s28
      %s87 = sor.u32 %s85, %s86
      %p88 = scmp.eq.s32.totalorder %s87, 0
      %s90 = sadd.s32 %s89, 1
      %s91 = scalar_select %p88, %s89, %s90
      %p94 = pneg %p88
      %p95 = scmp.eq.s32.totalorder %s13, 1
      %p96 = por %p94, %p95
      %p97 = scmp.ne.s32.totalorder %s89, %s92
      %p98 = scmp.eq.s32.totalorder %s13, 0
      %p99 = por %p97, %p98
      %p100 = scmp.ne.s32.totalorder %s89, %s92
      %p101 = scmp.eq.s32.totalorder %s18, 1
      %p102 = por %p100, %p101
      %p103 = scmp.ne.s32.totalorder %s92, %s93
      %p104 = scmp.eq.s32.totalorder %s18, 0
      %p105 = por %p103, %p104
      %p106 = scmp.ne.s32.totalorder %s92, %s93
      %p107 = scmp.eq.s32.totalorder %s19, 1
      %p108 = por %p106, %p107
      %p110 = scmp.ne.s32.totalorder %s93, %s109
      %p111 = scmp.eq.s32.totalorder %s19, 0
      %p112 = por %p110, %p111
      %s114 = sadd.s32 %s113, 1
      %p117 = scmp.eq.s32.totalorder %s13, 1
      %p118 = scmp.ne.s32.totalorder %s113, %s115
      %p119 = scmp.eq.s32.totalorder %s13, 0
      %p120 = por %p118, %p119
      %p121 = scmp.ne.s32.totalorder %s113, %s115
      %p122 = scmp.eq.s32.totalorder %s18, 1
      %p123 = por %p121, %p122
      %p124 = scmp.ne.s32.totalorder %s115, %s116
      %p125 = scmp.eq.s32.totalorder %s18, 0
      %p126 = por %p124, %p125
      %p127 = scmp.ne.s32.totalorder %s115, %s116
      %p128 = scmp.eq.s32.totalorder %s19, 1
      %p129 = por %p127, %p128
      %p131 = scmp.ne.s32.totalorder %s116, %s130
      %p132 = scmp.eq.s32.totalorder %s19, 0
      %p133 = por %p131, %p132
      %s134 = ssub.s32 %s20, %s32
      %s135 = ssub.s32 %s21, %s28
      %s136 = sor.u32 %s134, %s135
      %p137 = scmp.eq.s32.totalorder %s136, 0
      %s139 = sadd.s32 %s138, 1
      %s140 = scalar_select %p137, %s138, %s139
      %p143 = pneg %p137
      %p144 = scmp.eq.s32.totalorder %s13, 1
      %p145 = por %p143, %p144
      %p146 = scmp.ne.s32.totalorder %s138, %s141
      %p147 = scmp.eq.s32.totalorder %s13, 0
      %p148 = por %p146, %p147
      %p149 = scmp.ne.s32.totalorder %s138, %s141
      %p150 = scmp.eq.s32.totalorder %s18, 1
      %p151 = por %p149, %p150
      %p152 = scmp.ne.s32.totalorder %s141, %s142
      %p153 = scmp.eq.s32.totalorder %s18, 0
      %p154 = por %p152, %p153
      %p155 = scmp.ne.s32.totalorder %s141, %s142
      %p156 = scmp.eq.s32.totalorder %s19, 1
      %p157 = por %p155, %p156
      %p159 = scmp.ne.s32.totalorder %s142, %s158
      %p160 = scmp.eq.s32.totalorder %s19, 0
      %p161 = por %p159, %p160
      %p162 = scmp.le.s32.totalorder 1, %s13
      %p163 = scmp.lt.s32.totalorder %s13, 3
      %p164 = pnand %p162, %p163
      %p165 = pneg %p164
      // Predicated region
      $region9: #{tpu_custom_call.1} parent=5 // pred_check
        _
      $region10: #{tpu_custom_call.1} parent=5 // pred_check_branch
        %167 = sbr.rel (%p164) target = $region12
      $region11: #{tpu_custom_call.1} parent=5 // pred_region
        %s168 = ssub.s32 %s13, 1
        // Predicated region
        $region13: #{tpu_custom_call.1} parent=11 // pred_check
          %p169 = pneg %p51
        $region14: #{tpu_custom_call.1} parent=11 // pred_check_branch
          %171 = sbr.rel (%p169) target = $region16
        $region15: #{tpu_custom_call.1} parent=11 // pred_region
          %s172 = smul.u32 32, %s23
          %p173 = scmp.lt.s32.totalorder %s172, 31
          %s174 = scalar_select %p173, %s172, 31
          %s175 = smul.addr %s174, 4
          %s176 = scalar_lea.vmem %s0, %s175
          %s177 = smul.u32 32, %s23
        $region16: #{tpu_custom_call.1} parent=11 // pred_fallthru
          _
        // Predicated region
        $region17: #{tpu_custom_call.1} parent=11 // pred_check
          %p178 = pneg %p126
        $region18: #{tpu_custom_call.1} parent=11 // pred_check_branch
          %180 = sbr.rel (%p178) target = $region20
        $region19: #{tpu_custom_call.1} parent=11 // pred_region
          _
        $region20: #{tpu_custom_call.1} parent=11 // pred_fallthru
          _
      $region12: #{tpu_custom_call.1} parent=5 // pred_fallthru
        _
      %p181 = scmp.lt.s32.totalorder %s13, 2
      // Predicated region
      $region21: #{tpu_custom_call.1} parent=5 // pred_check
        %p182 = pneg %p181
      $region22: #{tpu_custom_call.1} parent=5 // pred_check_branch
        %184 = sbr.rel (%p182) target = $region24
      $region23: #{tpu_custom_call.1} parent=5 // pred_region
        // Predicated region
        $region25: #{tpu_custom_call.1} parent=23 // pred_check
          %p185 = pneg %p71
        $region26: #{tpu_custom_call.1} parent=23 // pred_check_branch
          %187 = sbr.rel (%p185) target = $region28
        $region27: #{tpu_custom_call.1} parent=23 // pred_region
          %p188 = scmp.lt.s32.totalorder %s20, 1
          %s189 = scalar_select %p188, %s20, 1
          %s190 = smul.addr %s189, 8
          %s191 = smul.addr %s190, 2
          %s192 = scalar_lea.vmem %s1, %s191
        $region28: #{tpu_custom_call.1} parent=23 // pred_fallthru
          _
        // Predicated region
        $region29: #{tpu_custom_call.1} parent=23 // pred_check
          %p193 = pneg %p99
        $region30: #{tpu_custom_call.1} parent=23 // pred_check_branch
          %195 = sbr.rel (%p193) target = $region32
        $region31: #{tpu_custom_call.1} parent=23 // pred_region
          %s196 = smul.u32 32, %s21
          %p197 = scmp.lt.s32.totalorder %s20, 1
          %s198 = scalar_select %p197, %s20, 1
          %p199 = scmp.lt.s32.totalorder %s196, 31
          %s200 = scalar_select %p199, %s196, 31
          %s201 = smul.addr %s198, 32
          %s202 = sadd.s32 %s200, %s201
          %s203 = smul.addr %s202, 8
          %s204 = scalar_lea.vmem %s2, %s203
          %s205 = smul.u32 32, %s21
        $region32: #{tpu_custom_call.1} parent=23 // pred_fallthru
          _
      $region24: #{tpu_custom_call.1} parent=5 // pred_fallthru
        _
      %p206 = scmp.le.s32.totalorder 1, %s13
      %p207 = scmp.lt.s32.totalorder %s13, 3
      %p208 = pnand %p206, %p207
      %p209 = pneg %p208
      // Predicated region
      $region33: #{tpu_custom_call.1} parent=5 // pred_check
        _
      $region34: #{tpu_custom_call.1} parent=5 // pred_check_branch
        %211 = sbr.rel (%p208) target = $region36
      $region35: #{tpu_custom_call.1} parent=5 // pred_region
        %s212 = ssub.s32 %s13, 1
        %s213 = smul.u32 32, %s23
        %p214 = scmp.lt.s32.totalorder %s213, 31
        %s215 = scalar_select %p214, %s213, 31
        %s216 = smul.addr %s215, 4
        %s217 = scalar_lea.vmem %s0, %s216
        %p218 = pneg %p51
        %p219 = pneg %p48
        %p220 = scmp.lt.s32.totalorder %s22, 1
        %s221 = scalar_select %p220, %s22, 1
        %s222 = smul.addr %s221, 8
        %s223 = smul.addr %s222, 2
        %s224 = scalar_lea.vmem %s1, %s223
        %p225 = pneg %p77
        %p226 = pneg %p74
        %s227 = smul.u32 32, %s23
        %p228 = scmp.lt.s32.totalorder %s22, 1
        %s229 = scalar_select %p228, %s22, 1
        %p230 = scmp.lt.s32.totalorder %s227, 31
        %s231 = scalar_select %p230, %s227, 31
        %s232 = smul.addr %s229, 32
        %s233 = sadd.s32 %s231, %s232
        %s234 = smul.addr %s233, 8
        %s235 = scalar_lea.vmem %s2, %s234
        %p236 = pneg %p105
        %p237 = pneg %p102
        %p238 = pneg %p126
        %p239 = pneg %p123
        %p240 = pneg %p154
        %p241 = pneg %p151
        %s242 = sand.u32 %s141, 1
        %s243 = scalar_lea.sflag [#allocation3], %s242
        %s244 = sand.u32 %s141, 1
        %s245 = smul.addr %s244, 256
        %s246 = scalar_lea.vmem [#allocation2], %s245
        %s247 = smul.u32 32, %s23
        %p248 = scmp.lt.s32.totalorder %s247, 31
        %s249 = scalar_select %p248, %s247, 31
        %s250 = smul.addr %s249, 4
        %s251 = scalar_lea.vmem %s0, %s250
        %s252 = smul.u32 32, %s23
        %p253 = scmp.lt.s32.totalorder %s22, 1
        %s254 = scalar_select %p253, %s22, 1
        %s255 = smul.addr %s254, 8
        %s256 = smul.addr %s255, 2
        %s257 = scalar_lea.vmem %s1, %s256
        %s258 = smul.u32 32, %s23
        %p259 = scmp.lt.s32.totalorder %s22, 1
        %s260 = scalar_select %p259, %s22, 1
        %p261 = scmp.lt.s32.totalorder %s258, 31
        %s262 = scalar_select %p261, %s258, 31
        %s263 = smul.addr %s260, 32
        %s264 = sadd.s32 %s262, %s263
        %s265 = smul.addr %s264, 8
        %s266 = scalar_lea.vmem %s2, %s265
        %s267 = smul.u32 32, %s23
        %s268 = smul.u32 32, %s23
        %v270 = vld [vmem:[%s251] sm:$0xf]
        %v271 = vld [vmem:[%s251 + $0x4] sm:$0xf]
        %v272 = vld [vmem:[%s251 + $0x8] sm:$0xf]
        %v273 = vld [vmem:[%s251 + $0xc] sm:$0xf]
        %v274 = vld [vmem:[%s251 + $0x10] sm:$0xf]
        %v275 = vld [vmem:[%s251 + $0x14] sm:$0xf]
        %v276 = vld [vmem:[%s251 + $0x18] sm:$0xf]
        %v277 = vld [vmem:[%s251 + $0x1c] sm:$0xf]
        %v278 = vld [vmem:[%s251 + $0x20] sm:$0xf]
        %v279 = vld [vmem:[%s251 + $0x24] sm:$0xf]
        %v280 = vld [vmem:[%s251 + $0x28] sm:$0xf]
        %v281 = vld [vmem:[%s251 + $0x2c] sm:$0xf]
        %v282 = vld [vmem:[%s251 + $0x30] sm:$0xf]
        %v283 = vld [vmem:[%s251 + $0x34] sm:$0xf]
        %v284 = vld [vmem:[%s251 + $0x38] sm:$0xf]
        %v285 = vld [vmem:[%s251 + $0x3c] sm:$0xf]
        %v286 = vld [vmem:[%s251 + $0x40] sm:$0xf]
        %v287 = vld [vmem:[%s251 + $0x44] sm:$0xf]
        %v288 = vld [vmem:[%s251 + $0x48] sm:$0xf]
        %v289 = vld [vmem:[%s251 + $0x4c] sm:$0xf]
        %v290 = vld [vmem:[%s251 + $0x50] sm:$0xf]
        %v291 = vld [vmem:[%s251 + $0x54] sm:$0xf]
        %v292 = vld [vmem:[%s251 + $0x58] sm:$0xf]
        %v293 = vld [vmem:[%s251 + $0x5c] sm:$0xf]
        %v294 = vld [vmem:[%s251 + $0x60] sm:$0xf]
        %v295 = vld [vmem:[%s251 + $0x64] sm:$0xf]
        %v296 = vld [vmem:[%s251 + $0x68] sm:$0xf]
        %v297 = vld [vmem:[%s251 + $0x6c] sm:$0xf]
        %v298 = vld [vmem:[%s251 + $0x70] sm:$0xf]
        %v299 = vld [vmem:[%s251 + $0x74] sm:$0xf]
        %v300 = vld [vmem:[%s251 + $0x78] sm:$0xf]
        %v301 = vld [vmem:[%s251 + $0x7c] sm:$0xf]
        %v302 = vld [vmem:[%s257] sm:$0x3]
        %v335 = vunpack.c.l.b16 %v270
        %v336 = vunpack.c.l.b16 %v271
        %v337 = vunpack.c.l.b16 %v272
        %v338 = vunpack.c.l.b16 %v273
        %v339 = vunpack.c.l.b16 %v274
        %v340 = vunpack.c.l.b16 %v275
        %v341 = vunpack.c.l.b16 %v276
        %v342 = vunpack.c.l.b16 %v277
        %v343 = vunpack.c.l.b16 %v278
        %v344 = vunpack.c.l.b16 %v279
        %v345 = vunpack.c.l.b16 %v280
        %v346 = vunpack.c.l.b16 %v281
        %v347 = vunpack.c.l.b16 %v282
        %v348 = vunpack.c.l.b16 %v283
        %v349 = vunpack.c.l.b16 %v284
        %v350 = vunpack.c.l.b16 %v285
        %v351 = vunpack.c.l.b16 %v286
        %v352 = vunpack.c.l.b16 %v287
        %v353 = vunpack.c.l.b16 %v288
        %v354 = vunpack.c.l.b16 %v289
        %v355 = vunpack.c.l.b16 %v290
        %v356 = vunpack.c.l.b16 %v291
        %v357 = vunpack.c.l.b16 %v292
        %v358 = vunpack.c.l.b16 %v293
        %v359 = vunpack.c.l.b16 %v294
        %v360 = vunpack.c.l.b16 %v295
        %v361 = vunpack.c.l.b16 %v296
        %v362 = vunpack.c.l.b16 %v297
        %v363 = vunpack.c.l.b16 %v298
        %v364 = vunpack.c.l.b16 %v299
        %v365 = vunpack.c.l.b16 %v300
        %v366 = vunpack.c.l.b16 %v301
        %v367 = vpack.c.b16 %v336, %v335
        %v368 = vpack.c.b16 %v338, %v337
        %v369 = vpack.c.b16 %v340, %v339
        %v370 = vpack.c.b16 %v342, %v341
        %v371 = vpack.c.b16 %v344, %v343
        %v372 = vpack.c.b16 %v346, %v345
        %v373 = vpack.c.b16 %v348, %v347
        %v374 = vpack.c.b16 %v350, %v349
        %v375 = vpack.c.b16 %v352, %v351
        %v376 = vpack.c.b16 %v354, %v353
        %v377 = vpack.c.b16 %v356, %v355
        %v378 = vpack.c.b16 %v358, %v357
        %v379 = vpack.c.b16 %v360, %v359
        %v380 = vpack.c.b16 %v362, %v361
        %v381 = vpack.c.b16 %v364, %v363
        %v382 = vpack.c.b16 %v366, %v365
        %vm383 = vcmask 31744
        %v385 = vsel %vm383, %v367, 0
        %v388 = vsel %vm383, %v368, 0
        %v391 = vsel %vm383, %v369, 0
        %v394 = vsel %vm383, %v370, 0
        %v397 = vsel %vm383, %v371, 0
        %v400 = vsel %vm383, %v372, 0
        %v403 = vsel %vm383, %v373, 0
        %v406 = vsel %vm383, %v374, 0
        %v409 = vsel %vm383, %v375, 0
        %v412 = vsel %vm383, %v376, 0
        %v415 = vsel %vm383, %v377, 0
        %v418 = vsel %vm383, %v378, 0
        %v421 = vsel %vm383, %v379, 0
        %v424 = vsel %vm383, %v380, 0
        %v427 = vsel %vm383, %v381, 0
        %v430 = vsel %vm383, %v382, 0
        %vm432 = vcmask 1041408
        %v434 = vsel %vm432, %v302, 0
        %436 = vmatpush.bf16.msra.mxu0 0
        %437 = vmatpush.bf16.msra.mxu0 0
        %438 = vmatpush.bf16.msra.mxu0 0
        %439 = vmatpush.bf16.msra.mxu0 0
        %440 = vmatpush.bf16.msra.mxu0 0
        %441 = vmatpush.bf16.msra.mxu0 0
        %442 = vmatpush.bf16.msra.mxu0 0
        %443 = vmatpush.bf16.msra.mxu0 %v434
        %444 = vmatmul.bf16.gmra.mxu0 %v385
        %v445 = vpop.f32.mrf.mxu0
        %v446 = vadd.f32 0.0, %v445
        %v447 = vpop.f32.mrf.mxu0
        %v448 = vadd.f32 0.0, %v447
        %449 = vmatmul.bf16.gmra.mxu0 %v388
        %v450 = vpop.f32.mrf.mxu0
        %v451 = vadd.f32 0.0, %v450
        %v452 = vpop.f32.mrf.mxu0
        %v453 = vadd.f32 0.0, %v452
        %454 = vmatmul.bf16.gmra.mxu0 %v391
        %v455 = vpop.f32.mrf.mxu0
        %v456 = vadd.f32 0.0, %v455
        %v457 = vpop.f32.mrf.mxu0
        %v458 = vadd.f32 0.0, %v457
        %459 = vmatmul.bf16.gmra.mxu0 %v394
        %v460 = vpop.f32.mrf.mxu0
        %v461 = vadd.f32 0.0, %v460
        %v462 = vpop.f32.mrf.mxu0
        %v463 = vadd.f32 0.0, %v462
        %464 = vmatmul.bf16.gmra.mxu0 %v397
        %v465 = vpop.f32.mrf.mxu0
        %v466 = vadd.f32 0.0, %v465
        %v467 = vpop.f32.mrf.mxu0
        %v468 = vadd.f32 0.0, %v467
        %469 = vmatmul.bf16.gmra.mxu0 %v400
        %v470 = vpop.f32.mrf.mxu0
        %v471 = vadd.f32 0.0, %v470
        %v472 = vpop.f32.mrf.mxu0
        %v473 = vadd.f32 0.0, %v472
        %474 = vmatmul.bf16.gmra.mxu0 %v403
        %v475 = vpop.f32.mrf.mxu0
        %v476 = vadd.f32 0.0, %v475
        %v477 = vpop.f32.mrf.mxu0
        %v478 = vadd.f32 0.0, %v477
        %479 = vmatmul.bf16.gmra.mxu0 %v406
        %v480 = vpop.f32.mrf.mxu0
        %v481 = vadd.f32 0.0, %v480
        %v482 = vpop.f32.mrf.mxu0
        %v483 = vadd.f32 0.0, %v482
        %484 = vmatmul.bf16.gmra.mxu0 %v409
        %v485 = vpop.f32.mrf.mxu0
        %v486 = vadd.f32 0.0, %v485
        %v487 = vpop.f32.mrf.mxu0
        %v488 = vadd.f32 0.0, %v487
        %489 = vmatmul.bf16.gmra.mxu0 %v412
        %v490 = vpop.f32.mrf.mxu0
        %v491 = vadd.f32 0.0, %v490
        %v492 = vpop.f32.mrf.mxu0
        %v493 = vadd.f32 0.0, %v492
        %494 = vmatmul.bf16.gmra.mxu0 %v415
        %v495 = vpop.f32.mrf.mxu0
        %v496 = vadd.f32 0.0, %v495
        %v497 = vpop.f32.mrf.mxu0
        %v498 = vadd.f32 0.0, %v497
        %499 = vmatmul.bf16.gmra.mxu0 %v418
        %v500 = vpop.f32.mrf.mxu0
        %v501 = vadd.f32 0.0, %v500
        %v502 = vpop.f32.mrf.mxu0
        %v503 = vadd.f32 0.0, %v502
        %504 = vmatmul.bf16.gmra.mxu0 %v421
        %v505 = vpop.f32.mrf.mxu0
        %v506 = vadd.f32 0.0, %v505
        %v507 = vpop.f32.mrf.mxu0
        %v508 = vadd.f32 0.0, %v507
        %509 = vmatmul.bf16.gmra.mxu0 %v424
        %v510 = vpop.f32.mrf.mxu0
        %v511 = vadd.f32 0.0, %v510
        %v512 = vpop.f32.mrf.mxu0
        %v513 = vadd.f32 0.0, %v512
        %514 = vmatmul.bf16.gmra.mxu0 %v427
        %v515 = vpop.f32.mrf.mxu0
        %v516 = vadd.f32 0.0, %v515
        %v517 = vpop.f32.mrf.mxu0
        %v518 = vadd.f32 0.0, %v517
        %519 = vmatmul.bf16.gmra.mxu0 %v430
        %v520 = vpop.f32.mrf.mxu0
        %v521 = vadd.f32 0.0, %v520
        %v522 = vpop.f32.mrf.mxu0
        %v523 = vadd.f32 0.0, %v522
        %524 = vdwg.mxu0
        %525 = vst [vmem:[%s246] sm:$0xff] %v446
        %526 = vst [vmem:[%s246 + $0x8] sm:$0xff] %v448
        %527 = vst [vmem:[%s246 + $0x10] sm:$0xff] %v451
        %528 = vst [vmem:[%s246 + $0x18] sm:$0xff] %v453
        %529 = vst [vmem:[%s246 + $0x20] sm:$0xff] %v456
        %530 = vst [vmem:[%s246 + $0x28] sm:$0xff] %v458
        %531 = vst [vmem:[%s246 + $0x30] sm:$0xff] %v461
        %532 = vst [vmem:[%s246 + $0x38] sm:$0xff] %v463
        %533 = vst [vmem:[%s246 + $0x40] sm:$0xff] %v466
        %534 = vst [vmem:[%s246 + $0x48] sm:$0xff] %v468
        %535 = vst [vmem:[%s246 + $0x50] sm:$0xff] %v471
        %536 = vst [vmem:[%s246 + $0x58] sm:$0xff] %v473
        %537 = vst [vmem:[%s246 + $0x60] sm:$0xff] %v476
        %538 = vst [vmem:[%s246 + $0x68] sm:$0xff] %v478
        %539 = vst [vmem:[%s246 + $0x70] sm:$0xff] %v481
        %540 = vst [vmem:[%s246 + $0x78] sm:$0xff] %v483
        %541 = vst [vmem:[%s246 + $0x80] sm:$0xff] %v486
        %542 = vst [vmem:[%s246 + $0x88] sm:$0xff] %v488
        %543 = vst [vmem:[%s246 + $0x90] sm:$0xff] %v491
        %544 = vst [vmem:[%s246 + $0x98] sm:$0xff] %v493
        %545 = vst [vmem:[%s246 + $0xa0] sm:$0xff] %v496
        %546 = vst [vmem:[%s246 + $0xa8] sm:$0xff] %v498
        %547 = vst [vmem:[%s246 + $0xb0] sm:$0xff] %v501
        %548 = vst [vmem:[%s246 + $0xb8] sm:$0xff] %v503
        %549 = vst [vmem:[%s246 + $0xc0] sm:$0xff] %v506
        %550 = vst [vmem:[%s246 + $0xc8] sm:$0xff] %v508
        %551 = vst [vmem:[%s246 + $0xd0] sm:$0xff] %v511
        %552 = vst [vmem:[%s246 + $0xd8] sm:$0xff] %v513
        %553 = vst [vmem:[%s246 + $0xe0] sm:$0xff] %v516
        %554 = vst [vmem:[%s246 + $0xe8] sm:$0xff] %v518
        %555 = vst [vmem:[%s246 + $0xf0] sm:$0xff] %v521
        %556 = vst [vmem:[%s246 + $0xf8] sm:$0xff] %v523
        %s557 = scalar_lea.vmem %s251, 128
        %v558 = vld [vmem:[%s557] sm:$0xf]
        %v559 = vld [vmem:[%s557 + $0x4] sm:$0xf]
        %v560 = vld [vmem:[%s557 + $0x8] sm:$0xf]
        %v561 = vld [vmem:[%s557 + $0xc] sm:$0xf]
        %v562 = vld [vmem:[%s557 + $0x10] sm:$0xf]
        %v563 = vld [vmem:[%s557 + $0x14] sm:$0xf]
        %v564 = vld [vmem:[%s557 + $0x18] sm:$0xf]
        %v565 = vld [vmem:[%s557 + $0x1c] sm:$0xf]
        %v566 = vld [vmem:[%s557 + $0x20] sm:$0xf]
        %v567 = vld [vmem:[%s557 + $0x24] sm:$0xf]
        %v568 = vld [vmem:[%s557 + $0x28] sm:$0xf]
        %v569 = vld [vmem:[%s557 + $0x2c] sm:$0xf]
        %v570 = vld [vmem:[%s557 + $0x30] sm:$0xf]
        %v571 = vld [vmem:[%s557 + $0x34] sm:$0xf]
        %v572 = vld [vmem:[%s557 + $0x38] sm:$0xf]
        %v573 = vld [vmem:[%s557 + $0x3c] sm:$0xf]
        %v574 = vld [vmem:[%s557 + $0x40] sm:$0xf]
        %v575 = vld [vmem:[%s557 + $0x44] sm:$0xf]
        %v576 = vld [vmem:[%s557 + $0x48] sm:$0xf]
        %v577 = vld [vmem:[%s557 + $0x4c] sm:$0xf]
        %v578 = vld [vmem:[%s557 + $0x50] sm:$0xf]
        %v579 = vld [vmem:[%s557 + $0x54] sm:$0xf]
        %v580 = vld [vmem:[%s557 + $0x58] sm:$0xf]
        %v581 = vld [vmem:[%s557 + $0x5c] sm:$0xf]
        %v582 = vld [vmem:[%s557 + $0x60] sm:$0xf]
        %v583 = vld [vmem:[%s557 + $0x64] sm:$0xf]
        %v584 = vld [vmem:[%s557 + $0x68] sm:$0xf]
        %v585 = vld [vmem:[%s557 + $0x6c] sm:$0xf]
        %v586 = vld [vmem:[%s557 + $0x70] sm:$0xf]
        %v587 = vld [vmem:[%s557 + $0x74] sm:$0xf]
        %v588 = vld [vmem:[%s557 + $0x78] sm:$0xf]
        %v589 = vld [vmem:[%s557 + $0x7c] sm:$0xf]
        %s590 = scalar_lea.vmem %s257, 4
        %v591 = vld [vmem:[%s590] sm:$0x3]
        %v624 = vunpack.c.l.b16 %v558
        %v625 = vunpack.c.l.b16 %v559
        %v626 = vunpack.c.l.b16 %v560
        %v627 = vunpack.c.l.b16 %v561
        %v628 = vunpack.c.l.b16 %v562
        %v629 = vunpack.c.l.b16 %v563
        %v630 = vunpack.c.l.b16 %v564
        %v631 = vunpack.c.l.b16 %v565
        %v632 = vunpack.c.l.b16 %v566
        %v633 = vunpack.c.l.b16 %v567
        %v634 = vunpack.c.l.b16 %v568
        %v635 = vunpack.c.l.b16 %v569
        %v636 = vunpack.c.l.b16 %v570
        %v637 = vunpack.c.l.b16 %v571
        %v638 = vunpack.c.l.b16 %v572
        %v639 = vunpack.c.l.b16 %v573
        %v640 = vunpack.c.l.b16 %v574
        %v641 = vunpack.c.l.b16 %v575
        %v642 = vunpack.c.l.b16 %v576
        %v643 = vunpack.c.l.b16 %v577
        %v644 = vunpack.c.l.b16 %v578
        %v645 = vunpack.c.l.b16 %v579
        %v646 = vunpack.c.l.b16 %v580
        %v647 = vunpack.c.l.b16 %v581
        %v648 = vunpack.c.l.b16 %v582
        %v649 = vunpack.c.l.b16 %v583
        %v650 = vunpack.c.l.b16 %v584
        %v651 = vunpack.c.l.b16 %v585
        %v652 = vunpack.c.l.b16 %v586
        %v653 = vunpack.c.l.b16 %v587
        %v654 = vunpack.c.l.b16 %v588
        %v655 = vunpack.c.l.b16 %v589
        %v656 = vpack.c.b16 %v625, %v624
        %v657 = vpack.c.b16 %v627, %v626
        %v658 = vpack.c.b16 %v629, %v628
        %v659 = vpack.c.b16 %v631, %v630
        %v660 = vpack.c.b16 %v633, %v632
        %v661 = vpack.c.b16 %v635, %v634
        %v662 = vpack.c.b16 %v637, %v636
        %v663 = vpack.c.b16 %v639, %v638
        %v664 = vpack.c.b16 %v641, %v640
        %v665 = vpack.c.b16 %v643, %v642
        %v666 = vpack.c.b16 %v645, %v644
        %v667 = vpack.c.b16 %v647, %v646
        %v668 = vpack.c.b16 %v649, %v648
        %v669 = vpack.c.b16 %v651, %v650
        %v670 = vpack.c.b16 %v653, %v652
        %v671 = vpack.c.b16 %v655, %v654
        %v673 = vsel %vm383, %v656, 0
        %v676 = vsel %vm383, %v657, 0
        %v679 = vsel %vm383, %v658, 0
        %v682 = vsel %vm383, %v659, 0
        %v685 = vsel %vm383, %v660, 0
        %v688 = vsel %vm383, %v661, 0
        %v691 = vsel %vm383, %v662, 0
        %v694 = vsel %vm383, %v663, 0
        %v697 = vsel %vm383, %v664, 0
        %v700 = vsel %vm383, %v665, 0
        %v703 = vsel %vm383, %v666, 0
        %v706 = vsel %vm383, %v667, 0
        %v709 = vsel %vm383, %v668, 0
        %v712 = vsel %vm383, %v669, 0
        %v715 = vsel %vm383, %v670, 0
        %v718 = vsel %vm383, %v671, 0
        %v721 = vsel %vm432, %v591, 0
        %723 = vmatpush.bf16.msra.mxu0 0
        %724 = vmatpush.bf16.msra.mxu0 0
        %725 = vmatpush.bf16.msra.mxu0 0
        %726 = vmatpush.bf16.msra.mxu0 0
        %727 = vmatpush.bf16.msra.mxu0 0
        %728 = vmatpush.bf16.msra.mxu0 0
        %729 = vmatpush.bf16.msra.mxu0 0
        %730 = vmatpush.bf16.msra.mxu0 %v721
        %731 = vmatmul.bf16.gmra.mxu0 %v673
        %v732 = vpop.f32.mrf.mxu0
        %v733 = vadd.f32 0.0, %v732
        %v734 = vpop.f32.mrf.mxu0
        %v735 = vadd.f32 0.0, %v734
        %736 = vmatmul.bf16.gmra.mxu0 %v676
        %v737 = vpop.f32.mrf.mxu0
        %v738 = vadd.f32 0.0, %v737
        %v739 = vpop.f32.mrf.mxu0
        %v740 = vadd.f32 0.0, %v739
        %741 = vmatmul.bf16.gmra.mxu0 %v679
        %v742 = vpop.f32.mrf.mxu0
        %v743 = vadd.f32 0.0, %v742
        %v744 = vpop.f32.mrf.mxu0
        %v745 = vadd.f32 0.0, %v744
        %746 = vmatmul.bf16.gmra.mxu0 %v682
        %v747 = vpop.f32.mrf.mxu0
        %v748 = vadd.f32 0.0, %v747
        %v749 = vpop.f32.mrf.mxu0
        %v750 = vadd.f32 0.0, %v749
        %751 = vmatmul.bf16.gmra.mxu0 %v685
        %v752 = vpop.f32.mrf.mxu0
        %v753 = vadd.f32 0.0, %v752
        %v754 = vpop.f32.mrf.mxu0
        %v755 = vadd.f32 0.0, %v754
        %756 = vmatmul.bf16.gmra.mxu0 %v688
        %v757 = vpop.f32.mrf.mxu0
        %v758 = vadd.f32 0.0, %v757
        %v759 = vpop.f32.mrf.mxu0
        %v760 = vadd.f32 0.0, %v759
        %761 = vmatmul.bf16.gmra.mxu0 %v691
        %v762 = vpop.f32.mrf.mxu0
        %v763 = vadd.f32 0.0, %v762
        %v764 = vpop.f32.mrf.mxu0
        %v765 = vadd.f32 0.0, %v764
        %766 = vmatmul.bf16.gmra.mxu0 %v694
        %v767 = vpop.f32.mrf.mxu0
        %v768 = vadd.f32 0.0, %v767
        %v769 = vpop.f32.mrf.mxu0
        %v770 = vadd.f32 0.0, %v769
        %771 = vmatmul.bf16.gmra.mxu0 %v697
        %v772 = vpop.f32.mrf.mxu0
        %v773 = vadd.f32 0.0, %v772
        %v774 = vpop.f32.mrf.mxu0
        %v775 = vadd.f32 0.0, %v774
        %776 = vmatmul.bf16.gmra.mxu0 %v700
        %v777 = vpop.f32.mrf.mxu0
        %v778 = vadd.f32 0.0, %v777
        %v779 = vpop.f32.mrf.mxu0
        %v780 = vadd.f32 0.0, %v779
        %781 = vmatmul.bf16.gmra.mxu0 %v703
        %v782 = vpop.f32.mrf.mxu0
        %v783 = vadd.f32 0.0, %v782
        %v784 = vpop.f32.mrf.mxu0
        %v785 = vadd.f32 0.0, %v784
        %786 = vmatmul.bf16.gmra.mxu0 %v706
        %v787 = vpop.f32.mrf.mxu0
        %v788 = vadd.f32 0.0, %v787
        %v789 = vpop.f32.mrf.mxu0
        %v790 = vadd.f32 0.0, %v789
        %791 = vmatmul.bf16.gmra.mxu0 %v709
        %v792 = vpop.f32.mrf.mxu0
        %v793 = vadd.f32 0.0, %v792
        %v794 = vpop.f32.mrf.mxu0
        %v795 = vadd.f32 0.0, %v794
        %796 = vmatmul.bf16.gmra.mxu0 %v712
        %v797 = vpop.f32.mrf.mxu0
        %v798 = vadd.f32 0.0, %v797
        %v799 = vpop.f32.mrf.mxu0
        %v800 = vadd.f32 0.0, %v799
        %801 = vmatmul.bf16.gmra.mxu0 %v715
        %v802 = vpop.f32.mrf.mxu0
        %v803 = vadd.f32 0.0, %v802
        %v804 = vpop.f32.mrf.mxu0
        %v805 = vadd.f32 0.0, %v804
        %806 = vmatmul.bf16.gmra.mxu0 %v718
        %v807 = vpop.f32.mrf.mxu0
        %v808 = vadd.f32 0.0, %v807
        %v809 = vpop.f32.mrf.mxu0
        %v810 = vadd.f32 0.0, %v809
        %811 = vdwg.mxu0
        %v812 = vld [vmem:[%s246] sm:$0xff]
        %v813 = vld [vmem:[%s246 + $0x8] sm:$0xff]
        %v814 = vld [vmem:[%s246 + $0x10] sm:$0xff]
        %v815 = vld [vmem:[%s246 + $0x18] sm:$0xff]
        %v816 = vld [vmem:[%s246 + $0x20] sm:$0xff]
        %v817 = vld [vmem:[%s246 + $0x28] sm:$0xff]
        %v818 = vld [vmem:[%s246 + $0x30] sm:$0xff]
        %v819 = vld [vmem:[%s246 + $0x38] sm:$0xff]
        %v820 = vld [vmem:[%s246 + $0x40] sm:$0xff]
        %v821 = vld [vmem:[%s246 + $0x48] sm:$0xff]
        %v822 = vld [vmem:[%s246 + $0x50] sm:$0xff]
        %v823 = vld [vmem:[%s246 + $0x58] sm:$0xff]
        %v824 = vld [vmem:[%s246 + $0x60] sm:$0xff]
        %v825 = vld [vmem:[%s246 + $0x68] sm:$0xff]
        %v826 = vld [vmem:[%s246 + $0x70] sm:$0xff]
        %v827 = vld [vmem:[%s246 + $0x78] sm:$0xff]
        %v828 = vld [vmem:[%s246 + $0x80] sm:$0xff]
        %v829 = vld [vmem:[%s246 + $0x88] sm:$0xff]
        %v830 = vld [vmem:[%s246 + $0x90] sm:$0xff]
        %v831 = vld [vmem:[%s246 + $0x98] sm:$0xff]
        %v832 = vld [vmem:[%s246 + $0xa0] sm:$0xff]
        %v833 = vld [vmem:[%s246 + $0xa8] sm:$0xff]
        %v834 = vld [vmem:[%s246 + $0xb0] sm:$0xff]
        %v835 = vld [vmem:[%s246 + $0xb8] sm:$0xff]
        %v836 = vld [vmem:[%s246 + $0xc0] sm:$0xff]
        %v837 = vld [vmem:[%s246 + $0xc8] sm:$0xff]
        %v838 = vld [vmem:[%s246 + $0xd0] sm:$0xff]
        %v839 = vld [vmem:[%s246 + $0xd8] sm:$0xff]
        %v840 = vld [vmem:[%s246 + $0xe0] sm:$0xff]
        %v841 = vld [vmem:[%s246 + $0xe8] sm:$0xff]
        %v842 = vld [vmem:[%s246 + $0xf0] sm:$0xff]
        %v843 = vld [vmem:[%s246 + $0xf8] sm:$0xff]
        %v844 = vadd.f32 %v812, %v733
        %v845 = vadd.f32 %v813, %v735
        %v846 = vadd.f32 %v814, %v738
        %v847 = vadd.f32 %v815, %v740
        %v848 = vadd.f32 %v816, %v743
        %v849 = vadd.f32 %v817, %v745
        %v850 = vadd.f32 %v818, %v748
        %v851 = vadd.f32 %v819, %v750
        %v852 = vadd.f32 %v820, %v753
        %v853 = vadd.f32 %v821, %v755
        %v854 = vadd.f32 %v822, %v758
        %v855 = vadd.f32 %v823, %v760
        %v856 = vadd.f32 %v824, %v763
        %v857 = vadd.f32 %v825, %v765
        %v858 = vadd.f32 %v826, %v768
        %v859 = vadd.f32 %v827, %v770
        %v860 = vadd.f32 %v828, %v773
        %v861 = vadd.f32 %v829, %v775
        %v862 = vadd.f32 %v830, %v778
        %v863 = vadd.f32 %v831, %v780
        %v864 = vadd.f32 %v832, %v783
        %v865 = vadd.f32 %v833, %v785
        %v866 = vadd.f32 %v834, %v788
        %v867 = vadd.f32 %v835, %v790
        %v868 = vadd.f32 %v836, %v793
        %v869 = vadd.f32 %v837, %v795
        %v870 = vadd.f32 %v838, %v798
        %v871 = vadd.f32 %v839, %v800
        %v872 = vadd.f32 %v840, %v803
        %v873 = vadd.f32 %v841, %v805
        %v874 = vadd.f32 %v842, %v808
        %v875 = vadd.f32 %v843, %v810
        %876 = vst [vmem:[%s246] sm:$0xff] %v844
        %877 = vst [vmem:[%s246 + $0x8] sm:$0xff] %v845
        %878 = vst [vmem:[%s246 + $0x10] sm:$0xff] %v846
        %879 = vst [vmem:[%s246 + $0x18] sm:$0xff] %v847
        %880 = vst [vmem:[%s246 + $0x20] sm:$0xff] %v848
        %881 = vst [vmem:[%s246 + $0x28] sm:$0xff] %v849
        %882 = vst [vmem:[%s246 + $0x30] sm:$0xff] %v850
        %883 = vst [vmem:[%s246 + $0x38] sm:$0xff] %v851
        %884 = vst [vmem:[%s246 + $0x40] sm:$0xff] %v852
        %885 = vst [vmem:[%s246 + $0x48] sm:$0xff] %v853
        %886 = vst [vmem:[%s246 + $0x50] sm:$0xff] %v854
        %887 = vst [vmem:[%s246 + $0x58] sm:$0xff] %v855
        %888 = vst [vmem:[%s246 + $0x60] sm:$0xff] %v856
        %889 = vst [vmem:[%s246 + $0x68] sm:$0xff] %v857
        %890 = vst [vmem:[%s246 + $0x70] sm:$0xff] %v858
        %891 = vst [vmem:[%s246 + $0x78] sm:$0xff] %v859
        %892 = vst [vmem:[%s246 + $0x80] sm:$0xff] %v860
        %893 = vst [vmem:[%s246 + $0x88] sm:$0xff] %v861
        %894 = vst [vmem:[%s246 + $0x90] sm:$0xff] %v862
        %895 = vst [vmem:[%s246 + $0x98] sm:$0xff] %v863
        %896 = vst [vmem:[%s246 + $0xa0] sm:$0xff] %v864
        %897 = vst [vmem:[%s246 + $0xa8] sm:$0xff] %v865
        %898 = vst [vmem:[%s246 + $0xb0] sm:$0xff] %v866
        %899 = vst [vmem:[%s246 + $0xb8] sm:$0xff] %v867
        %900 = vst [vmem:[%s246 + $0xc0] sm:$0xff] %v868
        %901 = vst [vmem:[%s246 + $0xc8] sm:$0xff] %v869
        %902 = vst [vmem:[%s246 + $0xd0] sm:$0xff] %v870
        %903 = vst [vmem:[%s246 + $0xd8] sm:$0xff] %v871
        %904 = vst [vmem:[%s246 + $0xe0] sm:$0xff] %v872
        %905 = vst [vmem:[%s246 + $0xe8] sm:$0xff] %v873
        %906 = vst [vmem:[%s246 + $0xf0] sm:$0xff] %v874
        %907 = vst [vmem:[%s246 + $0xf8] sm:$0xff] %v875
        %s908 = scalar_lea.vmem %s251, 256
        %v909 = vld [vmem:[%s908] sm:$0xf]
        %v910 = vld [vmem:[%s908 + $0x4] sm:$0xf]
        %v911 = vld [vmem:[%s908 + $0x8] sm:$0xf]
        %v912 = vld [vmem:[%s908 + $0xc] sm:$0xf]
        %v913 = vld [vmem:[%s908 + $0x10] sm:$0xf]
        %v914 = vld [vmem:[%s908 + $0x14] sm:$0xf]
        %v915 = vld [vmem:[%s908 + $0x18] sm:$0xf]
        %v916 = vld [vmem:[%s908 + $0x1c] sm:$0xf]
        %v917 = vld [vmem:[%s908 + $0x20] sm:$0xf]
        %v918 = vld [vmem:[%s908 + $0x24] sm:$0xf]
        %v919 = vld [vmem:[%s908 + $0x28] sm:$0xf]
        %v920 = vld [vmem:[%s908 + $0x2c] sm:$0xf]
        %v921 = vld [vmem:[%s908 + $0x30] sm:$0xf]
        %v922 = vld [vmem:[%s908 + $0x34] sm:$0xf]
        %v923 = vld [vmem:[%s908 + $0x38] sm:$0xf]
        %v924 = vld [vmem:[%s908 + $0x3c] sm:$0xf]
        %v925 = vld [vmem:[%s908 + $0x40] sm:$0xf]
        %v926 = vld [vmem:[%s908 + $0x44] sm:$0xf]
        %v927 = vld [vmem:[%s908 + $0x48] sm:$0xf]
        %v928 = vld [vmem:[%s908 + $0x4c] sm:$0xf]
        %v929 = vld [vmem:[%s908 + $0x50] sm:$0xf]
        %v930 = vld [vmem:[%s908 + $0x54] sm:$0xf]
        %v931 = vld [vmem:[%s908 + $0x58] sm:$0xf]
        %v932 = vld [vmem:[%s908 + $0x5c] sm:$0xf]
        %v933 = vld [vmem:[%s908 + $0x60] sm:$0xf]
        %v934 = vld [vmem:[%s908 + $0x64] sm:$0xf]
        %v935 = vld [vmem:[%s908 + $0x68] sm:$0xf]
        %v936 = vld [vmem:[%s908 + $0x6c] sm:$0xf]
        %v937 = vld [vmem:[%s908 + $0x70] sm:$0xf]
        %v938 = vld [vmem:[%s908 + $0x74] sm:$0xf]
        %v939 = vld [vmem:[%s908 + $0x78] sm:$0xf]
        %v940 = vld [vmem:[%s908 + $0x7c] sm:$0xf]
        %v941 = vld [vmem:[%s257] sm:$0xf]
        %v974 = vunpack.c.l.b16 %v909
        %v975 = vunpack.c.l.b16 %v910
        %v976 = vunpack.c.l.b16 %v911
        %v977 = vunpack.c.l.b16 %v912
        %v978 = vunpack.c.l.b16 %v913
        %v979 = vunpack.c.l.b16 %v914
        %v980 = vunpack.c.l.b16 %v915
        %v981 = vunpack.c.l.b16 %v916
        %v982 = vunpack.c.l.b16 %v917
        %v983 = vunpack.c.l.b16 %v918
        %v984 = vunpack.c.l.b16 %v919
        %v985 = vunpack.c.l.b16 %v920
        %v986 = vunpack.c.l.b16 %v921
        %v987 = vunpack.c.l.b16 %v922
        %v988 = vunpack.c.l.b16 %v923
        %v989 = vunpack.c.l.b16 %v924
        %v990 = vunpack.c.l.b16 %v925
        %v991 = vunpack.c.l.b16 %v926
        %v992 = vunpack.c.l.b16 %v927
        %v993 = vunpack.c.l.b16 %v928
        %v994 = vunpack.c.l.b16 %v929
        %v995 = vunpack.c.l.b16 %v930
        %v996 = vunpack.c.l.b16 %v931
        %v997 = vunpack.c.l.b16 %v932
        %v998 = vunpack.c.l.b16 %v933
        %v999 = vunpack.c.l.b16 %v934
        %v1000 = vunpack.c.l.b16 %v935
        %v1001 = vunpack.c.l.b16 %v936
        %v1002 = vunpack.c.l.b16 %v937
        %v1003 = vunpack.c.l.b16 %v938
        %v1004 = vunpack.c.l.b16 %v939
        %v1005 = vunpack.c.l.b16 %v940
        %v1006 = vpack.c.b16 %v975, %v974
        %v1007 = vpack.c.b16 %v977, %v976
        %v1008 = vpack.c.b16 %v979, %v978
        %v1009 = vpack.c.b16 %v981, %v980
        %v1010 = vpack.c.b16 %v983, %v982
        %v1011 = vpack.c.b16 %v985, %v984
        %v1012 = vpack.c.b16 %v987, %v986
        %v1013 = vpack.c.b16 %v989, %v988
        %v1014 = vpack.c.b16 %v991, %v990
        %v1015 = vpack.c.b16 %v993, %v992
        %v1016 = vpack.c.b16 %v995, %v994
        %v1017 = vpack.c.b16 %v997, %v996
        %v1018 = vpack.c.b16 %v999, %v998
        %v1019 = vpack.c.b16 %v1001, %v1000
        %v1020 = vpack.c.b16 %v1003, %v1002
        %v1021 = vpack.c.b16 %v1005, %v1004
        %1023 = vst [vmem:[#allocation1] ss:$4 sm:$0xff] %v941
        %v1024 = vld.sshfl [vmem:[#allocation1] sm:$0xff pattern:$0x73625140]
        %v1026 = vld.sshfl [vmem:[#allocation1 + $0x8] sm:$0xff pattern:$0x73625140]
        %1028 = vrot.lane.b32.xlu0 %v1024, 127
        %v1029 = vpop.permute.xlu0 %1028
        %1030 = vrot.lane.b32.xlu0 %v1026, 127
        %v1031 = vpop.permute.xlu0 %1030
        %vm1032 = vcmask 1039360
        %v1033 = vsel %vm1032, %v1029, %v1031
        %v1035 = vsel %vm383, %v1006, 0
        %v1038 = vsel %vm383, %v1007, 0
        %v1041 = vsel %vm383, %v1008, 0
        %v1044 = vsel %vm383, %v1009, 0
        %v1047 = vsel %vm383, %v1010, 0
        %v1050 = vsel %vm383, %v1011, 0
        %v1053 = vsel %vm383, %v1012, 0
        %v1056 = vsel %vm383, %v1013, 0
        %v1059 = vsel %vm383, %v1014, 0
        %v1062 = vsel %vm383, %v1015, 0
        %v1065 = vsel %vm383, %v1016, 0
        %v1068 = vsel %vm383, %v1017, 0
        %v1071 = vsel %vm383, %v1018, 0
        %v1074 = vsel %vm383, %v1019, 0
        %v1077 = vsel %vm383, %v1020, 0
        %v1080 = vsel %vm383, %v1021, 0
        %v1083 = vsel %vm432, %v1033, 0
        %1085 = vmatpush.bf16.msra.mxu0 0
        %1086 = vmatpush.bf16.msra.mxu0 0
        %1087 = vmatpush.bf16.msra.mxu0 0
        %1088 = vmatpush.bf16.msra.mxu0 0
        %1089 = vmatpush.bf16.msra.mxu0 0
        %1090 = vmatpush.bf16.msra.mxu0 0
        %1091 = vmatpush.bf16.msra.mxu0 0
        %1092 = vmatpush.bf16.msra.mxu0 %v1083
        %1093 = vmatmul.bf16.gmra.mxu0 %v1035
        %v1094 = vpop.f32.mrf.mxu0
        %v1095 = vadd.f32 0.0, %v1094
        %v1096 = vpop.f32.mrf.mxu0
        %v1097 = vadd.f32 0.0, %v1096
        %1098 = vmatmul.bf16.gmra.mxu0 %v1038
        %v1099 = vpop.f32.mrf.mxu0
        %v1100 = vadd.f32 0.0, %v1099
        %v1101 = vpop.f32.mrf.mxu0
        %v1102 = vadd.f32 0.0, %v1101
        %1103 = vmatmul.bf16.gmra.mxu0 %v1041
        %v1104 = vpop.f32.mrf.mxu0
        %v1105 = vadd.f32 0.0, %v1104
        %v1106 = vpop.f32.mrf.mxu0
        %v1107 = vadd.f32 0.0, %v1106
        %1108 = vmatmul.bf16.gmra.mxu0 %v1044
        %v1109 = vpop.f32.mrf.mxu0
        %v1110 = vadd.f32 0.0, %v1109
        %v1111 = vpop.f32.mrf.mxu0
        %v1112 = vadd.f32 0.0, %v1111
        %1113 = vmatmul.bf16.gmra.mxu0 %v1047
        %v1114 = vpop.f32.mrf.mxu0
        %v1115 = vadd.f32 0.0, %v1114
        %v1116 = vpop.f32.mrf.mxu0
        %v1117 = vadd.f32 0.0, %v1116
        %1118 = vmatmul.bf16.gmra.mxu0 %v1050
        %v1119 = vpop.f32.mrf.mxu0
        %v1120 = vadd.f32 0.0, %v1119
        %v1121 = vpop.f32.mrf.mxu0
        %v1122 = vadd.f32 0.0, %v1121
        %1123 = vmatmul.bf16.gmra.mxu0 %v1053
        %v1124 = vpop.f32.mrf.mxu0
        %v1125 = vadd.f32 0.0, %v1124
        %v1126 = vpop.f32.mrf.mxu0
        %v1127 = vadd.f32 0.0, %v1126
        %1128 = vmatmul.bf16.gmra.mxu0 %v1056
        %v1129 = vpop.f32.mrf.mxu0
        %v1130 = vadd.f32 0.0, %v1129
        %v1131 = vpop.f32.mrf.mxu0
        %v1132 = vadd.f32 0.0, %v1131
        %1133 = vmatmul.bf16.gmra.mxu0 %v1059
        %v1134 = vpop.f32.mrf.mxu0
        %v1135 = vadd.f32 0.0, %v1134
        %v1136 = vpop.f32.mrf.mxu0
        %v1137 = vadd.f32 0.0, %v1136
        %1138 = vmatmul.bf16.gmra.mxu0 %v1062
        %v1139 = vpop.f32.mrf.mxu0
        %v1140 = vadd.f32 0.0, %v1139
        %v1141 = vpop.f32.mrf.mxu0
        %v1142 = vadd.f32 0.0, %v1141
        %1143 = vmatmul.bf16.gmra.mxu0 %v1065
        %v1144 = vpop.f32.mrf.mxu0
        %v1145 = vadd.f32 0.0, %v1144
        %v1146 = vpop.f32.mrf.mxu0
        %v1147 = vadd.f32 0.0, %v1146
        %1148 = vmatmul.bf16.gmra.mxu0 %v1068
        %v1149 = vpop.f32.mrf.mxu0
        %v1150 = vadd.f32 0.0, %v1149
        %v1151 = vpop.f32.mrf.mxu0
        %v1152 = vadd.f32 0.0, %v1151
        %1153 = vmatmul.bf16.gmra.mxu0 %v1071
        %v1154 = vpop.f32.mrf.mxu0
        %v1155 = vadd.f32 0.0, %v1154
        %v1156 = vpop.f32.mrf.mxu0
        %v1157 = vadd.f32 0.0, %v1156
        %1158 = vmatmul.bf16.gmra.mxu0 %v1074
        %v1159 = vpop.f32.mrf.mxu0
        %v1160 = vadd.f32 0.0, %v1159
        %v1161 = vpop.f32.mrf.mxu0
        %v1162 = vadd.f32 0.0, %v1161
        %1163 = vmatmul.bf16.gmra.mxu0 %v1077
        %v1164 = vpop.f32.mrf.mxu0
        %v1165 = vadd.f32 0.0, %v1164
        %v1166 = vpop.f32.mrf.mxu0
        %v1167 = vadd.f32 0.0, %v1166
        %1168 = vmatmul.bf16.gmra.mxu0 %v1080
        %v1169 = vpop.f32.mrf.mxu0
        %v1170 = vadd.f32 0.0, %v1169
        %v1171 = vpop.f32.mrf.mxu0
        %v1172 = vadd.f32 0.0, %v1171
        %1173 = vdwg.mxu0
        %v1174 = vld [vmem:[%s246] sm:$0xff]
        %v1175 = vld [vmem:[%s246 + $0x8] sm:$0xff]
        %v1176 = vld [vmem:[%s246 + $0x10] sm:$0xff]
        %v1177 = vld [vmem:[%s246 + $0x18] sm:$0xff]
        %v1178 = vld [vmem:[%s246 + $0x20] sm:$0xff]
        %v1179 = vld [vmem:[%s246 + $0x28] sm:$0xff]
        %v1180 = vld [vmem:[%s246 + $0x30] sm:$0xff]
        %v1181 = vld [vmem:[%s246 + $0x38] sm:$0xff]
        %v1182 = vld [vmem:[%s246 + $0x40] sm:$0xff]
        %v1183 = vld [vmem:[%s246 + $0x48] sm:$0xff]
        %v1184 = vld [vmem:[%s246 + $0x50] sm:$0xff]
        %v1185 = vld [vmem:[%s246 + $0x58] sm:$0xff]
        %v1186 = vld [vmem:[%s246 + $0x60] sm:$0xff]
        %v1187 = vld [vmem:[%s246 + $0x68] sm:$0xff]
        %v1188 = vld [vmem:[%s246 + $0x70] sm:$0xff]
        %v1189 = vld [vmem:[%s246 + $0x78] sm:$0xff]
        %v1190 = vld [vmem:[%s246 + $0x80] sm:$0xff]
        %v1191 = vld [vmem:[%s246 + $0x88] sm:$0xff]
        %v1192 = vld [vmem:[%s246 + $0x90] sm:$0xff]
        %v1193 = vld [vmem:[%s246 + $0x98] sm:$0xff]
        %v1194 = vld [vmem:[%s246 + $0xa0] sm:$0xff]
        %v1195 = vld [vmem:[%s246 + $0xa8] sm:$0xff]
        %v1196 = vld [vmem:[%s246 + $0xb0] sm:$0xff]
        %v1197 = vld [vmem:[%s246 + $0xb8] sm:$0xff]
        %v1198 = vld [vmem:[%s246 + $0xc0] sm:$0xff]
        %v1199 = vld [vmem:[%s246 + $0xc8] sm:$0xff]
        %v1200 = vld [vmem:[%s246 + $0xd0] sm:$0xff]
        %v1201 = vld [vmem:[%s246 + $0xd8] sm:$0xff]
        %v1202 = vld [vmem:[%s246 + $0xe0] sm:$0xff]
        %v1203 = vld [vmem:[%s246 + $0xe8] sm:$0xff]
        %v1204 = vld [vmem:[%s246 + $0xf0] sm:$0xff]
        %v1205 = vld [vmem:[%s246 + $0xf8] sm:$0xff]
        %v1206 = vadd.f32 %v1174, %v1095
        %v1207 = vadd.f32 %v1175, %v1097
        %v1208 = vadd.f32 %v1176, %v1100
        %v1209 = vadd.f32 %v1177, %v1102
        %v1210 = vadd.f32 %v1178, %v1105
        %v1211 = vadd.f32 %v1179, %v1107
        %v1212 = vadd.f32 %v1180, %v1110
        %v1213 = vadd.f32 %v1181, %v1112
        %v1214 = vadd.f32 %v1182, %v1115
        %v1215 = vadd.f32 %v1183, %v1117
        %v1216 = vadd.f32 %v1184, %v1120
        %v1217 = vadd.f32 %v1185, %v1122
        %v1218 = vadd.f32 %v1186, %v1125
        %v1219 = vadd.f32 %v1187, %v1127
        %v1220 = vadd.f32 %v1188, %v1130
        %v1221 = vadd.f32 %v1189, %v1132
        %v1222 = vadd.f32 %v1190, %v1135
        %v1223 = vadd.f32 %v1191, %v1137
        %v1224 = vadd.f32 %v1192, %v1140
        %v1225 = vadd.f32 %v1193, %v1142
        %v1226 = vadd.f32 %v1194, %v1145
        %v1227 = vadd.f32 %v1195, %v1147
        %v1228 = vadd.f32 %v1196, %v1150
        %v1229 = vadd.f32 %v1197, %v1152
        %v1230 = vadd.f32 %v1198, %v1155
        %v1231 = vadd.f32 %v1199, %v1157
        %v1232 = vadd.f32 %v1200, %v1160
        %v1233 = vadd.f32 %v1201, %v1162
        %v1234 = vadd.f32 %v1202, %v1165
        %v1235 = vadd.f32 %v1203, %v1167
        %v1236 = vadd.f32 %v1204, %v1170
        %v1237 = vadd.f32 %v1205, %v1172
        %1238 = vst [vmem:[%s246] sm:$0xff] %v1206
        %1239 = vst [vmem:[%s246 + $0x8] sm:$0xff] %v1207
        %1240 = vst [vmem:[%s246 + $0x10] sm:$0xff] %v1208
        %1241 = vst [vmem:[%s246 + $0x18] sm:$0xff] %v1209
        %1242 = vst [vmem:[%s246 + $0x20] sm:$0xff] %v1210
        %1243 = vst [vmem:[%s246 + $0x28] sm:$0xff] %v1211
        %1244 = vst [vmem:[%s246 + $0x30] sm:$0xff] %v1212
        %1245 = vst [vmem:[%s246 + $0x38] sm:$0xff] %v1213
        %1246 = vst [vmem:[%s246 + $0x40] sm:$0xff] %v1214
        %1247 = vst [vmem:[%s246 + $0x48] sm:$0xff] %v1215
        %1248 = vst [vmem:[%s246 + $0x50] sm:$0xff] %v1216
        %1249 = vst [vmem:[%s246 + $0x58] sm:$0xff] %v1217
        %1250 = vst [vmem:[%s246 + $0x60] sm:$0xff] %v1218
        %1251 = vst [vmem:[%s246 + $0x68] sm:$0xff] %v1219
        %1252 = vst [vmem:[%s246 + $0x70] sm:$0xff] %v1220
        %1253 = vst [vmem:[%s246 + $0x78] sm:$0xff] %v1221
        %1254 = vst [vmem:[%s246 + $0x80] sm:$0xff] %v1222
        %1255 = vst [vmem:[%s246 + $0x88] sm:$0xff] %v1223
        %1256 = vst [vmem:[%s246 + $0x90] sm:$0xff] %v1224
        %1257 = vst [vmem:[%s246 + $0x98] sm:$0xff] %v1225
        %1258 = vst [vmem:[%s246 + $0xa0] sm:$0xff] %v1226
        %1259 = vst [vmem:[%s246 + $0xa8] sm:$0xff] %v1227
        %1260 = vst [vmem:[%s246 + $0xb0] sm:$0xff] %v1228
        %1261 = vst [vmem:[%s246 + $0xb8] sm:$0xff] %v1229
        %1262 = vst [vmem:[%s246 + $0xc0] sm:$0xff] %v1230
        %1263 = vst [vmem:[%s246 + $0xc8] sm:$0xff] %v1231
        %1264 = vst [vmem:[%s246 + $0xd0] sm:$0xff] %v1232
        %1265 = vst [vmem:[%s246 + $0xd8] sm:$0xff] %v1233
        %1266 = vst [vmem:[%s246 + $0xe0] sm:$0xff] %v1234
        %1267 = vst [vmem:[%s246 + $0xe8] sm:$0xff] %v1235
        %1268 = vst [vmem:[%s246 + $0xf0] sm:$0xff] %v1236
        %1269 = vst [vmem:[%s246 + $0xf8] sm:$0xff] %v1237
        %s1270 = scalar_lea.vmem %s251, 384
        %v1271 = vld [vmem:[%s1270] sm:$0xf]
        %v1272 = vld [vmem:[%s1270 + $0x4] sm:$0xf]
        %v1273 = vld [vmem:[%s1270 + $0x8] sm:$0xf]
        %v1274 = vld [vmem:[%s1270 + $0xc] sm:$0xf]
        %v1275 = vld [vmem:[%s1270 + $0x10] sm:$0xf]
        %v1276 = vld [vmem:[%s1270 + $0x14] sm:$0xf]
        %v1277 = vld [vmem:[%s1270 + $0x18] sm:$0xf]
        %v1278 = vld [vmem:[%s1270 + $0x1c] sm:$0xf]
        %v1279 = vld [vmem:[%s1270 + $0x20] sm:$0xf]
        %v1280 = vld [vmem:[%s1270 + $0x24] sm:$0xf]
        %v1281 = vld [vmem:[%s1270 + $0x28] sm:$0xf]
        %v1282 = vld [vmem:[%s1270 + $0x2c] sm:$0xf]
        %v1283 = vld [vmem:[%s1270 + $0x30] sm:$0xf]
        %v1284 = vld [vmem:[%s1270 + $0x34] sm:$0xf]
        %v1285 = vld [vmem:[%s1270 + $0x38] sm:$0xf]
        %v1286 = vld [vmem:[%s1270 + $0x3c] sm:$0xf]
        %v1287 = vld [vmem:[%s1270 + $0x40] sm:$0xf]
        %v1288 = vld [vmem:[%s1270 + $0x44] sm:$0xf]
        %v1289 = vld [vmem:[%s1270 + $0x48] sm:$0xf]
        %v1290 = vld [vmem:[%s1270 + $0x4c] sm:$0xf]
        %v1291 = vld [vmem:[%s1270 + $0x50] sm:$0xf]
        %v1292 = vld [vmem:[%s1270 + $0x54] sm:$0xf]
        %v1293 = vld [vmem:[%s1270 + $0x58] sm:$0xf]
        %v1294 = vld [vmem:[%s1270 + $0x5c] sm:$0xf]
        %v1295 = vld [vmem:[%s1270 + $0x60] sm:$0xf]
        %v1296 = vld [vmem:[%s1270 + $0x64] sm:$0xf]
        %v1297 = vld [vmem:[%s1270 + $0x68] sm:$0xf]
        %v1298 = vld [vmem:[%s1270 + $0x6c] sm:$0xf]
        %v1299 = vld [vmem:[%s1270 + $0x70] sm:$0xf]
        %v1300 = vld [vmem:[%s1270 + $0x74] sm:$0xf]
        %v1301 = vld [vmem:[%s1270 + $0x78] sm:$0xf]
        %v1302 = vld [vmem:[%s1270 + $0x7c] sm:$0xf]
        %s1303 = scalar_lea.vmem %s257, 8
        %v1304 = vld [vmem:[%s1303] sm:$0x3]
        %v1337 = vunpack.c.l.b16 %v1271
        %v1338 = vunpack.c.l.b16 %v1272
        %v1339 = vunpack.c.l.b16 %v1273
        %v1340 = vunpack.c.l.b16 %v1274
        %v1341 = vunpack.c.l.b16 %v1275
        %v1342 = vunpack.c.l.b16 %v1276
        %v1343 = vunpack.c.l.b16 %v1277
        %v1344 = vunpack.c.l.b16 %v1278
        %v1345 = vunpack.c.l.b16 %v1279
        %v1346 = vunpack.c.l.b16 %v1280
        %v1347 = vunpack.c.l.b16 %v1281
        %v1348 = vunpack.c.l.b16 %v1282
        %v1349 = vunpack.c.l.b16 %v1283
        %v1350 = vunpack.c.l.b16 %v1284
        %v1351 = vunpack.c.l.b16 %v1285
        %v1352 = vunpack.c.l.b16 %v1286
        %v1353 = vunpack.c.l.b16 %v1287
        %v1354 = vunpack.c.l.b16 %v1288
        %v1355 = vunpack.c.l.b16 %v1289
        %v1356 = vunpack.c.l.b16 %v1290
        %v1357 = vunpack.c.l.b16 %v1291
        %v1358 = vunpack.c.l.b16 %v1292
        %v1359 = vunpack.c.l.b16 %v1293
        %v1360 = vunpack.c.l.b16 %v1294
        %v1361 = vunpack.c.l.b16 %v1295
        %v1362 = vunpack.c.l.b16 %v1296
        %v1363 = vunpack.c.l.b16 %v1297
        %v1364 = vunpack.c.l.b16 %v1298
        %v1365 = vunpack.c.l.b16 %v1299
        %v1366 = vunpack.c.l.b16 %v1300
        %v1367 = vunpack.c.l.b16 %v1301
        %v1368 = vunpack.c.l.b16 %v1302
        %v1369 = vpack.c.b16 %v1338, %v1337
        %v1370 = vpack.c.b16 %v1340, %v1339
        %v1371 = vpack.c.b16 %v1342, %v1341
        %v1372 = vpack.c.b16 %v1344, %v1343
        %v1373 = vpack.c.b16 %v1346, %v1345
        %v1374 = vpack.c.b16 %v1348, %v1347
        %v1375 = vpack.c.b16 %v1350, %v1349
        %v1376 = vpack.c.b16 %v1352, %v1351
        %v1377 = vpack.c.b16 %v1354, %v1353
        %v1378 = vpack.c.b16 %v1356, %v1355
        %v1379 = vpack.c.b16 %v1358, %v1357
        %v1380 = vpack.c.b16 %v1360, %v1359
        %v1381 = vpack.c.b16 %v1362, %v1361
        %v1382 = vpack.c.b16 %v1364, %v1363
        %v1383 = vpack.c.b16 %v1366, %v1365
        %v1384 = vpack.c.b16 %v1368, %v1367
        %v1386 = vsel %vm383, %v1369, 0
        %v1389 = vsel %vm383, %v1370, 0
        %v1392 = vsel %vm383, %v1371, 0
        %v1395 = vsel %vm383, %v1372, 0
        %v1398 = vsel %vm383, %v1373, 0
        %v1401 = vsel %vm383, %v1374, 0
        %v1404 = vsel %vm383, %v1375, 0
        %v1407 = vsel %vm383, %v1376, 0
        %v1410 = vsel %vm383, %v1377, 0
        %v1413 = vsel %vm383, %v1378, 0
        %v1416 = vsel %vm383, %v1379, 0
        %v1419 = vsel %vm383, %v1380, 0
        %v1422 = vsel %vm383, %v1381, 0
        %v1425 = vsel %vm383, %v1382, 0
        %v1428 = vsel %vm383, %v1383, 0
        %v1431 = vsel %vm383, %v1384, 0
        %v1434 = vsel %vm432, %v1304, 0
        %1436 = vmatpush.bf16.msra.mxu0 0
        %1437 = vmatpush.bf16.msra.mxu0 0
        %1438 = vmatpush.bf16.msra.mxu0 0
        %1439 = vmatpush.bf16.msra.mxu0 0
        %1440 = vmatpush.bf16.msra.mxu0 0
        %1441 = vmatpush.bf16.msra.mxu0 0
        %1442 = vmatpush.bf16.msra.mxu0 0
        %1443 = vmatpush.bf16.msra.mxu0 %v1434
        %1444 = vmatmul.bf16.gmra.mxu0 %v1386
        %v1445 = vpop.f32.mrf.mxu0
        %v1446 = vadd.f32 0.0, %v1445
        %v1447 = vpop.f32.mrf.mxu0
        %v1448 = vadd.f32 0.0, %v1447
        %1449 = vmatmul.bf16.gmra.mxu0 %v1389
        %v1450 = vpop.f32.mrf.mxu0
        %v1451 = vadd.f32 0.0, %v1450
        %v1452 = vpop.f32.mrf.mxu0
        %v1453 = vadd.f32 0.0, %v1452
        %1454 = vmatmul.bf16.gmra.mxu0 %v1392
        %v1455 = vpop.f32.mrf.mxu0
        %v1456 = vadd.f32 0.0, %v1455
        %v1457 = vpop.f32.mrf.mxu0
        %v1458 = vadd.f32 0.0, %v1457
        %1459 = vmatmul.bf16.gmra.mxu0 %v1395
        %v1460 = vpop.f32.mrf.mxu0
        %v1461 = vadd.f32 0.0, %v1460
        %v1462 = vpop.f32.mrf.mxu0
        %v1463 = vadd.f32 0.0, %v1462
        %1464 = vmatmul.bf16.gmra.mxu0 %v1398
        %v1465 = vpop.f32.mrf.mxu0
        %v1466 = vadd.f32 0.0, %v1465
        %v1467 = vpop.f32.mrf.mxu0
        %v1468 = vadd.f32 0.0, %v1467
        %1469 = vmatmul.bf16.gmra.mxu0 %v1401
        %v1470 = vpop.f32.mrf.mxu0
        %v1471 = vadd.f32 0.0, %v1470
        %v1472 = vpop.f32.mrf.mxu0
        %v1473 = vadd.f32 0.0, %v1472
        %1474 = vmatmul.bf16.gmra.mxu0 %v1404
        %v1475 = vpop.f32.mrf.mxu0
        %v1476 = vadd.f32 0.0, %v1475
        %v1477 = vpop.f32.mrf.mxu0
        %v1478 = vadd.f32 0.0, %v1477
        %1479 = vmatmul.bf16.gmra.mxu0 %v1407
        %v1480 = vpop.f32.mrf.mxu0
        %v1481 = vadd.f32 0.0, %v1480
        %v1482 = vpop.f32.mrf.mxu0
        %v1483 = vadd.f32 0.0, %v1482
        %1484 = vmatmul.bf16.gmra.mxu0 %v1410
        %v1485 = vpop.f32.mrf.mxu0
        %v1486 = vadd.f32 0.0, %v1485
        %v1487 = vpop.f32.mrf.mxu0
        %v1488 = vadd.f32 0.0, %v1487
        %1489 = vmatmul.bf16.gmra.mxu0 %v1413
        %v1490 = vpop.f32.mrf.mxu0
        %v1491 = vadd.f32 0.0, %v1490
        %v1492 = vpop.f32.mrf.mxu0
        %v1493 = vadd.f32 0.0, %v1492
        %1494 = vmatmul.bf16.gmra.mxu0 %v1416
        %v1495 = vpop.f32.mrf.mxu0
        %v1496 = vadd.f32 0.0, %v1495
        %v1497 = vpop.f32.mrf.mxu0
        %v1498 = vadd.f32 0.0, %v1497
        %1499 = vmatmul.bf16.gmra.mxu0 %v1419
        %v1500 = vpop.f32.mrf.mxu0
        %v1501 = vadd.f32 0.0, %v1500
        %v1502 = vpop.f32.mrf.mxu0
        %v1503 = vadd.f32 0.0, %v1502
        %1504 = vmatmul.bf16.gmra.mxu0 %v1422
        %v1505 = vpop.f32.mrf.mxu0
        %v1506 = vadd.f32 0.0, %v1505
        %v1507 = vpop.f32.mrf.mxu0
        %v1508 = vadd.f32 0.0, %v1507
        %1509 = vmatmul.bf16.gmra.mxu0 %v1425
        %v1510 = vpop.f32.mrf.mxu0
        %v1511 = vadd.f32 0.0, %v1510
        %v1512 = vpop.f32.mrf.mxu0
        %v1513 = vadd.f32 0.0, %v1512
        %1514 = vmatmul.bf16.gmra.mxu0 %v1428
        %v1515 = vpop.f32.mrf.mxu0
        %v1516 = vadd.f32 0.0, %v1515
        %v1517 = vpop.f32.mrf.mxu0
        %v1518 = vadd.f32 0.0, %v1517
        %1519 = vmatmul.bf16.gmra.mxu0 %v1431
        %v1520 = vpop.f32.mrf.mxu0
        %v1521 = vadd.f32 0.0, %v1520
        %v1522 = vpop.f32.mrf.mxu0
        %v1523 = vadd.f32 0.0, %v1522
        %1524 = vdwg.mxu0
        %v1525 = vld [vmem:[%s246] sm:$0xff]
        %v1526 = vld [vmem:[%s246 + $0x8] sm:$0xff]
        %v1527 = vld [vmem:[%s246 + $0x10] sm:$0xff]
        %v1528 = vld [vmem:[%s246 + $0x18] sm:$0xff]
        %v1529 = vld [vmem:[%s246 + $0x20] sm:$0xff]
        %v1530 = vld [vmem:[%s246 + $0x28] sm:$0xff]
        %v1531 = vld [vmem:[%s246 + $0x30] sm:$0xff]
        %v1532 = vld [vmem:[%s246 + $0x38] sm:$0xff]
        %v1533 = vld [vmem:[%s246 + $0x40] sm:$0xff]
        %v1534 = vld [vmem:[%s246 + $0x48] sm:$0xff]
        %v1535 = vld [vmem:[%s246 + $0x50] sm:$0xff]
        %v1536 = vld [vmem:[%s246 + $0x58] sm:$0xff]
        %v1537 = vld [vmem:[%s246 + $0x60] sm:$0xff]
        %v1538 = vld [vmem:[%s246 + $0x68] sm:$0xff]
        %v1539 = vld [vmem:[%s246 + $0x70] sm:$0xff]
        %v1540 = vld [vmem:[%s246 + $0x78] sm:$0xff]
        %v1541 = vld [vmem:[%s246 + $0x80] sm:$0xff]
        %v1542 = vld [vmem:[%s246 + $0x88] sm:$0xff]
        %v1543 = vld [vmem:[%s246 + $0x90] sm:$0xff]
        %v1544 = vld [vmem:[%s246 + $0x98] sm:$0xff]
        %v1545 = vld [vmem:[%s246 + $0xa0] sm:$0xff]
        %v1546 = vld [vmem:[%s246 + $0xa8] sm:$0xff]
        %v1547 = vld [vmem:[%s246 + $0xb0] sm:$0xff]
        %v1548 = vld [vmem:[%s246 + $0xb8] sm:$0xff]
        %v1549 = vld [vmem:[%s246 + $0xc0] sm:$0xff]
        %v1550 = vld [vmem:[%s246 + $0xc8] sm:$0xff]
        %v1551 = vld [vmem:[%s246 + $0xd0] sm:$0xff]
        %v1552 = vld [vmem:[%s246 + $0xd8] sm:$0xff]
        %v1553 = vld [vmem:[%s246 + $0xe0] sm:$0xff]
        %v1554 = vld [vmem:[%s246 + $0xe8] sm:$0xff]
        %v1555 = vld [vmem:[%s246 + $0xf0] sm:$0xff]
        %v1556 = vld [vmem:[%s246 + $0xf8] sm:$0xff]
        %v1557 = vadd.f32 %v1525, %v1446
        %v1558 = vadd.f32 %v1526, %v1448
        %v1559 = vadd.f32 %v1527, %v1451
        %v1560 = vadd.f32 %v1528, %v1453
        %v1561 = vadd.f32 %v1529, %v1456
        %v1562 = vadd.f32 %v1530, %v1458
        %v1563 = vadd.f32 %v1531, %v1461
        %v1564 = vadd.f32 %v1532, %v1463
        %v1565 = vadd.f32 %v1533, %v1466
        %v1566 = vadd.f32 %v1534, %v1468
        %v1567 = vadd.f32 %v1535, %v1471
        %v1568 = vadd.f32 %v1536, %v1473
        %v1569 = vadd.f32 %v1537, %v1476
        %v1570 = vadd.f32 %v1538, %v1478
        %v1571 = vadd.f32 %v1539, %v1481
        %v1572 = vadd.f32 %v1540, %v1483
        %v1573 = vadd.f32 %v1541, %v1486
        %v1574 = vadd.f32 %v1542, %v1488
        %v1575 = vadd.f32 %v1543, %v1491
        %v1576 = vadd.f32 %v1544, %v1493
        %v1577 = vadd.f32 %v1545, %v1496
        %v1578 = vadd.f32 %v1546, %v1498
        %v1579 = vadd.f32 %v1547, %v1501
        %v1580 = vadd.f32 %v1548, %v1503
        %v1581 = vadd.f32 %v1549, %v1506
        %v1582 = vadd.f32 %v1550, %v1508
        %v1583 = vadd.f32 %v1551, %v1511
        %v1584 = vadd.f32 %v1552, %v1513
        %v1585 = vadd.f32 %v1553, %v1516
        %v1586 = vadd.f32 %v1554, %v1518
        %v1587 = vadd.f32 %v1555, %v1521
        %v1588 = vadd.f32 %v1556, %v1523
        %1589 = vst [vmem:[%s246] sm:$0xff] %v1557
        %1590 = vst [vmem:[%s246 + $0x8] sm:$0xff] %v1558
        %1591 = vst [vmem:[%s246 + $0x10] sm:$0xff] %v1559
        %1592 = vst [vmem:[%s246 + $0x18] sm:$0xff] %v1560
        %1593 = vst [vmem:[%s246 + $0x20] sm:$0xff] %v1561
        %1594 = vst [vmem:[%s246 + $0x28] sm:$0xff] %v1562
        %1595 = vst [vmem:[%s246 + $0x30] sm:$0xff] %v1563
        %1596 = vst [vmem:[%s246 + $0x38] sm:$0xff] %v1564
        %1597 = vst [vmem:[%s246 + $0x40] sm:$0xff] %v1565
        %1598 = vst [vmem:[%s246 + $0x48] sm:$0xff] %v1566
        %1599 = vst [vmem:[%s246 + $0x50] sm:$0xff] %v1567
        %1600 = vst [vmem:[%s246 + $0x58] sm:$0xff] %v1568
        %1601 = vst [vmem:[%s246 + $0x60] sm:$0xff] %v1569
        %1602 = vst [vmem:[%s246 + $0x68] sm:$0xff] %v1570
        %1603 = vst [vmem:[%s246 + $0x70] sm:$0xff] %v1571
        %1604 = vst [vmem:[%s246 + $0x78] sm:$0xff] %v1572
        %1605 = vst [vmem:[%s246 + $0x80] sm:$0xff] %v1573
        %1606 = vst [vmem:[%s246 + $0x88] sm:$0xff] %v1574
        %1607 = vst [vmem:[%s246 + $0x90] sm:$0xff] %v1575
        %1608 = vst [vmem:[%s246 + $0x98] sm:$0xff] %v1576
        %1609 = vst [vmem:[%s246 + $0xa0] sm:$0xff] %v1577
        %1610 = vst [vmem:[%s246 + $0xa8] sm:$0xff] %v1578
        %1611 = vst [vmem:[%s246 + $0xb0] sm:$0xff] %v1579
        %1612 = vst [vmem:[%s246 + $0xb8] sm:$0xff] %v1580
        %1613 = vst [vmem:[%s246 + $0xc0] sm:$0xff] %v1581
        %1614 = vst [vmem:[%s246 + $0xc8] sm:$0xff] %v1582
        %1615 = vst [vmem:[%s246 + $0xd0] sm:$0xff] %v1583
        %1616 = vst [vmem:[%s246 + $0xd8] sm:$0xff] %v1584
        %1617 = vst [vmem:[%s246 + $0xe0] sm:$0xff] %v1585
        %1618 = vst [vmem:[%s246 + $0xe8] sm:$0xff] %v1586
        %1619 = vst [vmem:[%s246 + $0xf0] sm:$0xff] %v1587
        %1620 = vst [vmem:[%s246 + $0xf8] sm:$0xff] %v1588
        %s1621 = scalar_lea.vmem %s251, 512
        %v1622 = vld [vmem:[%s1621] sm:$0xf]
        %v1623 = vld [vmem:[%s1621 + $0x4] sm:$0xf]
        %v1624 = vld [vmem:[%s1621 + $0x8] sm:$0xf]
        %v1625 = vld [vmem:[%s1621 + $0xc] sm:$0xf]
        %v1626 = vld [vmem:[%s1621 + $0x10] sm:$0xf]
        %v1627 = vld [vmem:[%s1621 + $0x14] sm:$0xf]
        %v1628 = vld [vmem:[%s1621 + $0x18] sm:$0xf]
        %v1629 = vld [vmem:[%s1621 + $0x1c] sm:$0xf]
        %v1630 = vld [vmem:[%s1621 + $0x20] sm:$0xf]
        %v1631 = vld [vmem:[%s1621 + $0x24] sm:$0xf]
        %v1632 = vld [vmem:[%s1621 + $0x28] sm:$0xf]
        %v1633 = vld [vmem:[%s1621 + $0x2c] sm:$0xf]
        %v1634 = vld [vmem:[%s1621 + $0x30] sm:$0xf]
        %v1635 = vld [vmem:[%s1621 + $0x34] sm:$0xf]
        %v1636 = vld [vmem:[%s1621 + $0x38] sm:$0xf]
        %v1637 = vld [vmem:[%s1621 + $0x3c] sm:$0xf]
        %v1638 = vld [vmem:[%s1621 + $0x40] sm:$0xf]
        %v1639 = vld [vmem:[%s1621 + $0x44] sm:$0xf]
        %v1640 = vld [vmem:[%s1621 + $0x48] sm:$0xf]
        %v1641 = vld [vmem:[%s1621 + $0x4c] sm:$0xf]
        %v1642 = vld [vmem:[%s1621 + $0x50] sm:$0xf]
        %v1643 = vld [vmem:[%s1621 + $0x54] sm:$0xf]
        %v1644 = vld [vmem:[%s1621 + $0x58] sm:$0xf]
        %v1645 = vld [vmem:[%s1621 + $0x5c] sm:$0xf]
        %v1646 = vld [vmem:[%s1621 + $0x60] sm:$0xf]
        %v1647 = vld [vmem:[%s1621 + $0x64] sm:$0xf]
        %v1648 = vld [vmem:[%s1621 + $0x68] sm:$0xf]
        %v1649 = vld [vmem:[%s1621 + $0x6c] sm:$0xf]
        %v1650 = vld [vmem:[%s1621 + $0x70] sm:$0xf]
        %v1651 = vld [vmem:[%s1621 + $0x74] sm:$0xf]
        %v1652 = vld [vmem:[%s1621 + $0x78] sm:$0xf]
        %v1653 = vld [vmem:[%s1621 + $0x7c] sm:$0xf]
        %s1654 = scalar_lea.vmem %s257, 12
        %v1655 = vld [vmem:[%s1654] sm:$0x3]
        %v1688 = vunpack.c.l.b16 %v1622
        %v1689 = vunpack.c.l.b16 %v1623
        %v1690 = vunpack.c.l.b16 %v1624
        %v1691 = vunpack.c.l.b16 %v1625
        %v1692 = vunpack.c.l.b16 %v1626
        %v1693 = vunpack.c.l.b16 %v1627
        %v1694 = vunpack.c.l.b16 %v1628
        %v1695 = vunpack.c.l.b16 %v1629
        %v1696 = vunpack.c.l.b16 %v1630
        %v1697 = vunpack.c.l.b16 %v1631
        %v1698 = vunpack.c.l.b16 %v1632
        %v1699 = vunpack.c.l.b16 %v1633
        %v1700 = vunpack.c.l.b16 %v1634
        %v1701 = vunpack.c.l.b16 %v1635
        %v1702 = vunpack.c.l.b16 %v1636
        %v1703 = vunpack.c.l.b16 %v1637
        %v1704 = vunpack.c.l.b16 %v1638
        %v1705 = vunpack.c.l.b16 %v1639
        %v1706 = vunpack.c.l.b16 %v1640
        %v1707 = vunpack.c.l.b16 %v1641
        %v1708 = vunpack.c.l.b16 %v1642
        %v1709 = vunpack.c.l.b16 %v1643
        %v1710 = vunpack.c.l.b16 %v1644
        %v1711 = vunpack.c.l.b16 %v1645
        %v1712 = vunpack.c.l.b16 %v1646
        %v1713 = vunpack.c.l.b16 %v1647
        %v1714 = vunpack.c.l.b16 %v1648
        %v1715 = vunpack.c.l.b16 %v1649
        %v1716 = vunpack.c.l.b16 %v1650
        %v1717 = vunpack.c.l.b16 %v1651
        %v1718 = vunpack.c.l.b16 %v1652
        %v1719 = vunpack.c.l.b16 %v1653
        %v1720 = vpack.c.b16 %v1689, %v1688
        %v1721 = vpack.c.b16 %v1691, %v1690
        %v1722 = vpack.c.b16 %v1693, %v1692
        %v1723 = vpack.c.b16 %v1695, %v1694
        %v1724 = vpack.c.b16 %v1697, %v1696
        %v1725 = vpack.c.b16 %v1699, %v1698
        %v1726 = vpack.c.b16 %v1701, %v1700
        %v1727 = vpack.c.b16 %v1703, %v1702
        %v1728 = vpack.c.b16 %v1705, %v1704
        %v1729 = vpack.c.b16 %v1707, %v1706
        %v1730 = vpack.c.b16 %v1709, %v1708
        %v1731 = vpack.c.b16 %v1711, %v1710
        %v1732 = vpack.c.b16 %v1713, %v1712
        %v1733 = vpack.c.b16 %v1715, %v1714
        %v1734 = vpack.c.b16 %v1717, %v1716
        %v1735 = vpack.c.b16 %v1719, %v1718
        %v1737 = vsel %vm383, %v1720, 0
        %v1740 = vsel %vm383, %v1721, 0
        %v1743 = vsel %vm383, %v1722, 0
        %v1746 = vsel %vm383, %v1723, 0
        %v1749 = vsel %vm383, %v1724, 0
        %v1752 = vsel %vm383, %v1725, 0
        %v1755 = vsel %vm383, %v1726, 0
        %v1758 = vsel %vm383, %v1727, 0
        %v1761 = vsel %vm383, %v1728, 0
        %v1764 = vsel %vm383, %v1729, 0
        %v1767 = vsel %vm383, %v1730, 0
        %v1770 = vsel %vm383, %v1731, 0
        %v1773 = vsel %vm383, %v1732, 0
        %v1776 = vsel %vm383, %v1733, 0
        %v1779 = vsel %vm383, %v1734, 0
        %v1782 = vsel %vm383, %v1735, 0
        %v1785 = vsel %vm432, %v1655, 0
        %1787 = vmatpush.bf16.msra.mxu0 0
        %1788 = vmatpush.bf16.msra.mxu0 0
        %1789 = vmatpush.bf16.msra.mxu0 0
        %1790 = vmatpush.bf16.msra.mxu0 0
        %1791 = vmatpush.bf16.msra.mxu0 0
        %1792 = vmatpush.bf16.msra.mxu0 0
        %1793 = vmatpush.bf16.msra.mxu0 0
        %1794 = vmatpush.bf16.msra.mxu0 %v1785
        %1795 = vmatmul.bf16.gmra.mxu0 %v1737
        %v1796 = vpop.f32.mrf.mxu0
        %v1797 = vadd.f32 0.0, %v1796
        %v1798 = vpop.f32.mrf.mxu0
        %v1799 = vadd.f32 0.0, %v1798
        %1800 = vmatmul.bf16.gmra.mxu0 %v1740
        %v1801 = vpop.f32.mrf.mxu0
        %v1802 = vadd.f32 0.0, %v1801
        %v1803 = vpop.f32.mrf.mxu0
        %v1804 = vadd.f32 0.0, %v1803
        %1805 = vmatmul.bf16.gmra.mxu0 %v1743
        %v1806 = vpop.f32.mrf.mxu0
        %v1807 = vadd.f32 0.0, %v1806
        %v1808 = vpop.f32.mrf.mxu0
        %v1809 = vadd.f32 0.0, %v1808
        %1810 = vmatmul.bf16.gmra.mxu0 %v1746
        %v1811 = vpop.f32.mrf.mxu0
        %v1812 = vadd.f32 0.0, %v1811
        %v1813 = vpop.f32.mrf.mxu0
        %v1814 = vadd.f32 0.0, %v1813
        %1815 = vmatmul.bf16.gmra.mxu0 %v1749
        %v1816 = vpop.f32.mrf.mxu0
        %v1817 = vadd.f32 0.0, %v1816
        %v1818 = vpop.f32.mrf.mxu0
        %v1819 = vadd.f32 0.0, %v1818
        %1820 = vmatmul.bf16.gmra.mxu0 %v1752
        %v1821 = vpop.f32.mrf.mxu0
        %v1822 = vadd.f32 0.0, %v1821
        %v1823 = vpop.f32.mrf.mxu0
        %v1824 = vadd.f32 0.0, %v1823
        %1825 = vmatmul.bf16.gmra.mxu0 %v1755
        %v1826 = vpop.f32.mrf.mxu0
        %v1827 = vadd.f32 0.0, %v1826
        %v1828 = vpop.f32.mrf.mxu0
        %v1829 = vadd.f32 0.0, %v1828
        %1830 = vmatmul.bf16.gmra.mxu0 %v1758
        %v1831 = vpop.f32.mrf.mxu0
        %v1832 = vadd.f32 0.0, %v1831
        %v1833 = vpop.f32.mrf.mxu0
        %v1834 = vadd.f32 0.0, %v1833
        %1835 = vmatmul.bf16.gmra.mxu0 %v1761
        %v1836 = vpop.f32.mrf.mxu0
        %v1837 = vadd.f32 0.0, %v1836
        %v1838 = vpop.f32.mrf.mxu0
        %v1839 = vadd.f32 0.0, %v1838
        %1840 = vmatmul.bf16.gmra.mxu0 %v1764
        %v1841 = vpop.f32.mrf.mxu0
        %v1842 = vadd.f32 0.0, %v1841
        %v1843 = vpop.f32.mrf.mxu0
        %v1844 = vadd.f32 0.0, %v1843
        %1845 = vmatmul.bf16.gmra.mxu0 %v1767
        %v1846 = vpop.f32.mrf.mxu0
        %v1847 = vadd.f32 0.0, %v1846
        %v1848 = vpop.f32.mrf.mxu0
        %v1849 = vadd.f32 0.0, %v1848
        %1850 = vmatmul.bf16.gmra.mxu0 %v1770
        %v1851 = vpop.f32.mrf.mxu0
        %v1852 = vadd.f32 0.0, %v1851
        %v1853 = vpop.f32.mrf.mxu0
        %v1854 = vadd.f32 0.0, %v1853
        %1855 = vmatmul.bf16.gmra.mxu0 %v1773
        %v1856 = vpop.f32.mrf.mxu0
        %v1857 = vadd.f32 0.0, %v1856
        %v1858 = vpop.f32.mrf.mxu0
        %v1859 = vadd.f32 0.0, %v1858
        %1860 = vmatmul.bf16.gmra.mxu0 %v1776
        %v1861 = vpop.f32.mrf.mxu0
        %v1862 = vadd.f32 0.0, %v1861
        %v1863 = vpop.f32.mrf.mxu0
        %v1864 = vadd.f32 0.0, %v1863
        %1865 = vmatmul.bf16.gmra.mxu0 %v1779
        %v1866 = vpop.f32.mrf.mxu0
        %v1867 = vadd.f32 0.0, %v1866
        %v1868 = vpop.f32.mrf.mxu0
        %v1869 = vadd.f32 0.0, %v1868
        %1870 = vmatmul.bf16.gmra.mxu0 %v1782
        %v1871 = vpop.f32.mrf.mxu0
        %v1872 = vadd.f32 0.0, %v1871
        %v1873 = vpop.f32.mrf.mxu0
        %v1874 = vadd.f32 0.0, %v1873
        %1875 = vdwg.mxu0
        %v1876 = vld [vmem:[%s246] sm:$0xff]
        %v1877 = vld [vmem:[%s246 + $0x8] sm:$0xff]
        %v1878 = vld [vmem:[%s246 + $0x10] sm:$0xff]
        %v1879 = vld [vmem:[%s246 + $0x18] sm:$0xff]
        %v1880 = vld [vmem:[%s246 + $0x20] sm:$0xff]
        %v1881 = vld [vmem:[%s246 + $0x28] sm:$0xff]
        %v1882 = vld [vmem:[%s246 + $0x30] sm:$0xff]
        %v1883 = vld [vmem:[%s246 + $0x38] sm:$0xff]
        %v1884 = vld [vmem:[%s246 + $0x40] sm:$0xff]
        %v1885 = vld [vmem:[%s246 + $0x48] sm:$0xff]
        %v1886 = vld [vmem:[%s246 + $0x50] sm:$0xff]
        %v1887 = vld [vmem:[%s246 + $0x58] sm:$0xff]
        %v1888 = vld [vmem:[%s246 + $0x60] sm:$0xff]
        %v1889 = vld [vmem:[%s246 + $0x68] sm:$0xff]
        %v1890 = vld [vmem:[%s246 + $0x70] sm:$0xff]
        %v1891 = vld [vmem:[%s246 + $0x78] sm:$0xff]
        %v1892 = vld [vmem:[%s246 + $0x80] sm:$0xff]
        %v1893 = vld [vmem:[%s246 + $0x88] sm:$0xff]
        %v1894 = vld [vmem:[%s246 + $0x90] sm:$0xff]
        %v1895 = vld [vmem:[%s246 + $0x98] sm:$0xff]
        %v1896 = vld [vmem:[%s246 + $0xa0] sm:$0xff]
        %v1897 = vld [vmem:[%s246 + $0xa8] sm:$0xff]
        %v1898 = vld [vmem:[%s246 + $0xb0] sm:$0xff]
        %v1899 = vld [vmem:[%s246 + $0xb8] sm:$0xff]
        %v1900 = vld [vmem:[%s246 + $0xc0] sm:$0xff]
        %v1901 = vld [vmem:[%s246 + $0xc8] sm:$0xff]
        %v1902 = vld [vmem:[%s246 + $0xd0] sm:$0xff]
        %v1903 = vld [vmem:[%s246 + $0xd8] sm:$0xff]
        %v1904 = vld [vmem:[%s246 + $0xe0] sm:$0xff]
        %v1905 = vld [vmem:[%s246 + $0xe8] sm:$0xff]
        %v1906 = vld [vmem:[%s246 + $0xf0] sm:$0xff]
        %v1907 = vld [vmem:[%s246 + $0xf8] sm:$0xff]
        %v1908 = vadd.f32 %v1876, %v1797
        %v1909 = vadd.f32 %v1877, %v1799
        %v1910 = vadd.f32 %v1878, %v1802
        %v1911 = vadd.f32 %v1879, %v1804
        %v1912 = vadd.f32 %v1880, %v1807
        %v1913 = vadd.f32 %v1881, %v1809
        %v1914 = vadd.f32 %v1882, %v1812
        %v1915 = vadd.f32 %v1883, %v1814
        %v1916 = vadd.f32 %v1884, %v1817
        %v1917 = vadd.f32 %v1885, %v1819
        %v1918 = vadd.f32 %v1886, %v1822
        %v1919 = vadd.f32 %v1887, %v1824
        %v1920 = vadd.f32 %v1888, %v1827
        %v1921 = vadd.f32 %v1889, %v1829
        %v1922 = vadd.f32 %v1890, %v1832
        %v1923 = vadd.f32 %v1891, %v1834
        %v1924 = vadd.f32 %v1892, %v1837
        %v1925 = vadd.f32 %v1893, %v1839
        %v1926 = vadd.f32 %v1894, %v1842
        %v1927 = vadd.f32 %v1895, %v1844
        %v1928 = vadd.f32 %v1896, %v1847
        %v1929 = vadd.f32 %v1897, %v1849
        %v1930 = vadd.f32 %v1898, %v1852
        %v1931 = vadd.f32 %v1899, %v1854
        %v1932 = vadd.f32 %v1900, %v1857
        %v1933 = vadd.f32 %v1901, %v1859
        %v1934 = vadd.f32 %v1902, %v1862
        %v1935 = vadd.f32 %v1903, %v1864
        %v1936 = vadd.f32 %v1904, %v1867
        %v1937 = vadd.f32 %v1905, %v1869
        %v1938 = vadd.f32 %v1906, %v1872
        %v1939 = vadd.f32 %v1907, %v1874
        %1940 = vst [vmem:[%s246] sm:$0xff] %v1908
        %1941 = vst [vmem:[%s246 + $0x8] sm:$0xff] %v1909
        %1942 = vst [vmem:[%s246 + $0x10] sm:$0xff] %v1910
        %1943 = vst [vmem:[%s246 + $0x18] sm:$0xff] %v1911
        %1944 = vst [vmem:[%s246 + $0x20] sm:$0xff] %v1912
        %1945 = vst [vmem:[%s246 + $0x28] sm:$0xff] %v1913
        %1946 = vst [vmem:[%s246 + $0x30] sm:$0xff] %v1914
        %1947 = vst [vmem:[%s246 + $0x38] sm:$0xff] %v1915
        %1948 = vst [vmem:[%s246 + $0x40] sm:$0xff] %v1916
        %1949 = vst [vmem:[%s246 + $0x48] sm:$0xff] %v1917
        %1950 = vst [vmem:[%s246 + $0x50] sm:$0xff] %v1918
        %1951 = vst [vmem:[%s246 + $0x58] sm:$0xff] %v1919
        %1952 = vst [vmem:[%s246 + $0x60] sm:$0xff] %v1920
        %1953 = vst [vmem:[%s246 + $0x68] sm:$0xff] %v1921
        %1954 = vst [vmem:[%s246 + $0x70] sm:$0xff] %v1922
        %1955 = vst [vmem:[%s246 + $0x78] sm:$0xff] %v1923
        %1956 = vst [vmem:[%s246 + $0x80] sm:$0xff] %v1924
        %1957 = vst [vmem:[%s246 + $0x88] sm:$0xff] %v1925
        %1958 = vst [vmem:[%s246 + $0x90] sm:$0xff] %v1926
        %1959 = vst [vmem:[%s246 + $0x98] sm:$0xff] %v1927
        %1960 = vst [vmem:[%s246 + $0xa0] sm:$0xff] %v1928
        %1961 = vst [vmem:[%s246 + $0xa8] sm:$0xff] %v1929
        %1962 = vst [vmem:[%s246 + $0xb0] sm:$0xff] %v1930
        %1963 = vst [vmem:[%s246 + $0xb8] sm:$0xff] %v1931
        %1964 = vst [vmem:[%s246 + $0xc0] sm:$0xff] %v1932
        %1965 = vst [vmem:[%s246 + $0xc8] sm:$0xff] %v1933
        %1966 = vst [vmem:[%s246 + $0xd0] sm:$0xff] %v1934
        %1967 = vst [vmem:[%s246 + $0xd8] sm:$0xff] %v1935
        %1968 = vst [vmem:[%s246 + $0xe0] sm:$0xff] %v1936
        %1969 = vst [vmem:[%s246 + $0xe8] sm:$0xff] %v1937
        %1970 = vst [vmem:[%s246 + $0xf0] sm:$0xff] %v1938
        %1971 = vst [vmem:[%s246 + $0xf8] sm:$0xff] %v1939
        %s1972 = scalar_lea.vmem %s251, 640
        %v1973 = vld [vmem:[%s1972] sm:$0xf]
        %v1974 = vld [vmem:[%s1972 + $0x4] sm:$0xf]
        %v1975 = vld [vmem:[%s1972 + $0x8] sm:$0xf]
        %v1976 = vld [vmem:[%s1972 + $0xc] sm:$0xf]
        %v1977 = vld [vmem:[%s1972 + $0x10] sm:$0xf]
        %v1978 = vld [vmem:[%s1972 + $0x14] sm:$0xf]
        %v1979 = vld [vmem:[%s1972 + $0x18] sm:$0xf]
        %v1980 = vld [vmem:[%s1972 + $0x1c] sm:$0xf]
        %v1981 = vld [vmem:[%s1972 + $0x20] sm:$0xf]
        %v1982 = vld [vmem:[%s1972 + $0x24] sm:$0xf]
        %v1983 = vld [vmem:[%s1972 + $0x28] sm:$0xf]
        %v1984 = vld [vmem:[%s1972 + $0x2c] sm:$0xf]
        %v1985 = vld [vmem:[%s1972 + $0x30] sm:$0xf]
        %v1986 = vld [vmem:[%s1972 + $0x34] sm:$0xf]
        %v1987 = vld [vmem:[%s1972 + $0x38] sm:$0xf]
        %v1988 = vld [vmem:[%s1972 + $0x3c] sm:$0xf]
        %v1989 = vld [vmem:[%s1972 + $0x40] sm:$0xf]
        %v1990 = vld [vmem:[%s1972 + $0x44] sm:$0xf]
        %v1991 = vld [vmem:[%s1972 + $0x48] sm:$0xf]
        %v1992 = vld [vmem:[%s1972 + $0x4c] sm:$0xf]
        %v1993 = vld [vmem:[%s1972 + $0x50] sm:$0xf]
        %v1994 = vld [vmem:[%s1972 + $0x54] sm:$0xf]
        %v1995 = vld [vmem:[%s1972 + $0x58] sm:$0xf]
        %v1996 = vld [vmem:[%s1972 + $0x5c] sm:$0xf]
        %v1997 = vld [vmem:[%s1972 + $0x60] sm:$0xf]
        %v1998 = vld [vmem:[%s1972 + $0x64] sm:$0xf]
        %v1999 = vld [vmem:[%s1972 + $0x68] sm:$0xf]
        %v2000 = vld [vmem:[%s1972 + $0x6c] sm:$0xf]
        %v2001 = vld [vmem:[%s1972 + $0x70] sm:$0xf]
        %v2002 = vld [vmem:[%s1972 + $0x74] sm:$0xf]
        %v2003 = vld [vmem:[%s1972 + $0x78] sm:$0xf]
        %v2004 = vld [vmem:[%s1972 + $0x7c] sm:$0xf]
        %v2005 = vld [vmem:[%s1303] sm:$0xf]
        %v2038 = vunpack.c.l.b16 %v1973
        %v2039 = vunpack.c.l.b16 %v1974
        %v2040 = vunpack.c.l.b16 %v1975
        %v2041 = vunpack.c.l.b16 %v1976
        %v2042 = vunpack.c.l.b16 %v1977
        %v2043 = vunpack.c.l.b16 %v1978
        %v2044 = vunpack.c.l.b16 %v1979
        %v2045 = vunpack.c.l.b16 %v1980
        %v2046 = vunpack.c.l.b16 %v1981
        %v2047 = vunpack.c.l.b16 %v1982
        %v2048 = vunpack.c.l.b16 %v1983
        %v2049 = vunpack.c.l.b16 %v1984
        %v2050 = vunpack.c.l.b16 %v1985
        %v2051 = vunpack.c.l.b16 %v1986
        %v2052 = vunpack.c.l.b16 %v1987
        %v2053 = vunpack.c.l.b16 %v1988
        %v2054 = vunpack.c.l.b16 %v1989
        %v2055 = vunpack.c.l.b16 %v1990
        %v2056 = vunpack.c.l.b16 %v1991
        %v2057 = vunpack.c.l.b16 %v1992
        %v2058 = vunpack.c.l.b16 %v1993
        %v2059 = vunpack.c.l.b16 %v1994
        %v2060 = vunpack.c.l.b16 %v1995
        %v2061 = vunpack.c.l.b16 %v1996
        %v2062 = vunpack.c.l.b16 %v1997
        %v2063 = vunpack.c.l.b16 %v1998
        %v2064 = vunpack.c.l.b16 %v1999
        %v2065 = vunpack.c.l.b16 %v2000
        %v2066 = vunpack.c.l.b16 %v2001
        %v2067 = vunpack.c.l.b16 %v2002
        %v2068 = vunpack.c.l.b16 %v2003
        %v2069 = vunpack.c.l.b16 %v2004
        %v2070 = vpack.c.b16 %v2039, %v2038
        %v2071 = vpack.c.b16 %v2041, %v2040
        %v2072 = vpack.c.b16 %v2043, %v2042
        %v2073 = vpack.c.b16 %v2045, %v2044
        %v2074 = vpack.c.b16 %v2047, %v2046
        %v2075 = vpack.c.b16 %v2049, %v2048
        %v2076 = vpack.c.b16 %v2051, %v2050
        %v2077 = vpack.c.b16 %v2053, %v2052
        %v2078 = vpack.c.b16 %v2055, %v2054
        %v2079 = vpack.c.b16 %v2057, %v2056
        %v2080 = vpack.c.b16 %v2059, %v2058
        %v2081 = vpack.c.b16 %v2061, %v2060
        %v2082 = vpack.c.b16 %v2063, %v2062
        %v2083 = vpack.c.b16 %v2065, %v2064
        %v2084 = vpack.c.b16 %v2067, %v2066
        %v2085 = vpack.c.b16 %v2069, %v2068
        %2087 = vst [vmem:[#allocation1] ss:$4 sm:$0xff] %v2005
        %v2088 = vld.sshfl [vmem:[#allocation1] sm:$0xff pattern:$0x73625140]
        %v2090 = vld.sshfl [vmem:[#allocation1 + $0x8] sm:$0xff pattern:$0x73625140]
        %2092 = vrot.lane.b32.xlu0 %v2088, 127
        %v2093 = vpop.permute.xlu0 %2092
        %2094 = vrot.lane.b32.xlu0 %v2090, 127
        %v2095 = vpop.permute.xlu0 %2094
        %v2096 = vsel %vm1032, %v2093, %v2095
        %v2098 = vsel %vm383, %v2070, 0
        %v2101 = vsel %vm383, %v2071, 0
        %v2104 = vsel %vm383, %v2072, 0
        %v2107 = vsel %vm383, %v2073, 0
        %v2110 = vsel %vm383, %v2074, 0
        %v2113 = vsel %vm383, %v2075, 0
        %v2116 = vsel %vm383, %v2076, 0
        %v2119 = vsel %vm383, %v2077, 0
        %v2122 = vsel %vm383, %v2078, 0
        %v2125 = vsel %vm383, %v2079, 0
        %v2128 = vsel %vm383, %v2080, 0
        %v2131 = vsel %vm383, %v2081, 0
        %v2134 = vsel %vm383, %v2082, 0
        %v2137 = vsel %vm383, %v2083, 0
        %v2140 = vsel %vm383, %v2084, 0
        %v2143 = vsel %vm383, %v2085, 0
        %v2146 = vsel %vm432, %v2096, 0
        %2148 = vmatpush.bf16.msra.mxu0 0
        %2149 = vmatpush.bf16.msra.mxu0 0
        %2150 = vmatpush.bf16.msra.mxu0 0
        %2151 = vmatpush.bf16.msra.mxu0 0
        %2152 = vmatpush.bf16.msra.mxu0 0
        %2153 = vmatpush.bf16.msra.mxu0 0
        %2154 = vmatpush.bf16.msra.mxu0 0
        %2155 = vmatpush.bf16.msra.mxu0 %v2146
        %2156 = vmatmul.bf16.gmra.mxu0 %v2098
        %v2157 = vpop.f32.mrf.mxu0
        %v2158 = vadd.f32 0.0, %v2157
        %v2159 = vpop.f32.mrf.mxu0
        %v2160 = vadd.f32 0.0, %v2159
        %2161 = vmatmul.bf16.gmra.mxu0 %v2101
        %v2162 = vpop.f32.mrf.mxu0
        %v2163 = vadd.f32 0.0, %v2162
        %v2164 = vpop.f32.mrf.mxu0
        %v2165 = vadd.f32 0.0, %v2164
        %2166 = vmatmul.bf16.gmra.mxu0 %v2104
        %v2167 = vpop.f32.mrf.mxu0
        %v2168 = vadd.f32 0.0, %v2167
        %v2169 = vpop.f32.mrf.mxu0
        %v2170 = vadd.f32 0.0, %v2169
        %2171 = vmatmul.bf16.gmra.mxu0 %v2107
        %v2172 = vpop.f32.mrf.mxu0
        %v2173 = vadd.f32 0.0, %v2172
        %v2174 = vpop.f32.mrf.mxu0
        %v2175 = vadd.f32 0.0, %v2174
        %2176 = vmatmul.bf16.gmra.mxu0 %v2110
        %v2177 = vpop.f32.mrf.mxu0
        %v2178 = vadd.f32 0.0, %v2177
        %v2179 = vpop.f32.mrf.mxu0
        %v2180 = vadd.f32 0.0, %v2179
        %2181 = vmatmul.bf16.gmra.mxu0 %v2113
        %v2182 = vpop.f32.mrf.mxu0
        %v2183 = vadd.f32 0.0, %v2182
        %v2184 = vpop.f32.mrf.mxu0
        %v2185 = vadd.f32 0.0, %v2184
        %2186 = vmatmul.bf16.gmra.mxu0 %v2116
        %v2187 = vpop.f32.mrf.mxu0
        %v2188 = vadd.f32 0.0, %v2187
        %v2189 = vpop.f32.mrf.mxu0
        %v2190 = vadd.f32 0.0, %v2189
        %2191 = vmatmul.bf16.gmra.mxu0 %v2119
        %v2192 = vpop.f32.mrf.mxu0
        %v2193 = vadd.f32 0.0, %v2192
        %v2194 = vpop.f32.mrf.mxu0
        %v2195 = vadd.f32 0.0, %v2194
        %2196 = vmatmul.bf16.gmra.mxu0 %v2122
        %v2197 = vpop.f32.mrf.mxu0
        %v2198 = vadd.f32 0.0, %v2197
        %v2199 = vpop.f32.mrf.mxu0
        %v2200 = vadd.f32 0.0, %v2199
        %2201 = vmatmul.bf16.gmra.mxu0 %v2125
        %v2202 = vpop.f32.mrf.mxu0
        %v2203 = vadd.f32 0.0, %v2202
        %v2204 = vpop.f32.mrf.mxu0
        %v2205 = vadd.f32 0.0, %v2204
        %2206 = vmatmul.bf16.gmra.mxu0 %v2128
        %v2207 = vpop.f32.mrf.mxu0
        %v2208 = vadd.f32 0.0, %v2207
        %v2209 = vpop.f32.mrf.mxu0
        %v2210 = vadd.f32 0.0, %v2209
        %2211 = vmatmul.bf16.gmra.mxu0 %v2131
        %v2212 = vpop.f32.mrf.mxu0
        %v2213 = vadd.f32 0.0, %v2212
        %v2214 = vpop.f32.mrf.mxu0
        %v2215 = vadd.f32 0.0, %v2214
        %2216 = vmatmul.bf16.gmra.mxu0 %v2134
        %v2217 = vpop.f32.mrf.mxu0
        %v2218 = vadd.f32 0.0, %v2217
        %v2219 = vpop.f32.mrf.mxu0
        %v2220 = vadd.f32 0.0, %v2219
        %2221 = vmatmul.bf16.gmra.mxu0 %v2137
        %v2222 = vpop.f32.mrf.mxu0
        %v2223 = vadd.f32 0.0, %v2222
        %v2224 = vpop.f32.mrf.mxu0
        %v2225 = vadd.f32 0.0, %v2224
        %2226 = vmatmul.bf16.gmra.mxu0 %v2140
        %v2227 = vpop.f32.mrf.mxu0
        %v2228 = vadd.f32 0.0, %v2227
        %v2229 = vpop.f32.mrf.mxu0
        %v2230 = vadd.f32 0.0, %v2229
        %2231 = vmatmul.bf16.gmra.mxu0 %v2143
        %v2232 = vpop.f32.mrf.mxu0
        %v2233 = vadd.f32 0.0, %v2232
        %v2234 = vpop.f32.mrf.mxu0
        %v2235 = vadd.f32 0.0, %v2234
        %2236 = vdwg.mxu0
        %v2237 = vld [vmem:[%s246] sm:$0xff]
        %v2238 = vld [vmem:[%s246 + $0x8] sm:$0xff]
        %v2239 = vld [vmem:[%s246 + $0x10] sm:$0xff]
        %v2240 = vld [vmem:[%s246 + $0x18] sm:$0xff]
        %v2241 = vld [vmem:[%s246 + $0x20] sm:$0xff]
        %v2242 = vld [vmem:[%s246 + $0x28] sm:$0xff]
        %v2243 = vld [vmem:[%s246 + $0x30] sm:$0xff]
        %v2244 = vld [vmem:[%s246 + $0x38] sm:$0xff]
        %v2245 = vld [vmem:[%s246 + $0x40] sm:$0xff]
        %v2246 = vld [vmem:[%s246 + $0x48] sm:$0xff]
        %v2247 = vld [vmem:[%s246 + $0x50] sm:$0xff]
        %v2248 = vld [vmem:[%s246 + $0x58] sm:$0xff]
        %v2249 = vld [vmem:[%s246 + $0x60] sm:$0xff]
        %v2250 = vld [vmem:[%s246 + $0x68] sm:$0xff]
        %v2251 = vld [vmem:[%s246 + $0x70] sm:$0xff]
        %v2252 = vld [vmem:[%s246 + $0x78] sm:$0xff]
        %v2253 = vld [vmem:[%s246 + $0x80] sm:$0xff]
        %v2254 = vld [vmem:[%s246 + $0x88] sm:$0xff]
        %v2255 = vld [vmem:[%s246 + $0x90] sm:$0xff]
        %v2256 = vld [vmem:[%s246 + $0x98] sm:$0xff]
        %v2257 = vld [vmem:[%s246 + $0xa0] sm:$0xff]
        %v2258 = vld [vmem:[%s246 + $0xa8] sm:$0xff]
        %v2259 = vld [vmem:[%s246 + $0xb0] sm:$0xff]
        %v2260 = vld [vmem:[%s246 + $0xb8] sm:$0xff]
        %v2261 = vld [vmem:[%s246 + $0xc0] sm:$0xff]
        %v2262 = vld [vmem:[%s246 + $0xc8] sm:$0xff]
        %v2263 = vld [vmem:[%s246 + $0xd0] sm:$0xff]
        %v2264 = vld [vmem:[%s246 + $0xd8] sm:$0xff]
        %v2265 = vld [vmem:[%s246 + $0xe0] sm:$0xff]
        %v2266 = vld [vmem:[%s246 + $0xe8] sm:$0xff]
        %v2267 = vld [vmem:[%s246 + $0xf0] sm:$0xff]
        %v2268 = vld [vmem:[%s246 + $0xf8] sm:$0xff]
        %v2269 = vadd.f32 %v2237, %v2158
        %v2270 = vadd.f32 %v2238, %v2160
        %v2271 = vadd.f32 %v2239, %v2163
        %v2272 = vadd.f32 %v2240, %v2165
        %v2273 = vadd.f32 %v2241, %v2168
        %v2274 = vadd.f32 %v2242, %v2170
        %v2275 = vadd.f32 %v2243, %v2173
        %v2276 = vadd.f32 %v2244, %v2175
        %v2277 = vadd.f32 %v2245, %v2178
        %v2278 = vadd.f32 %v2246, %v2180
        %v2279 = vadd.f32 %v2247, %v2183
        %v2280 = vadd.f32 %v2248, %v2185
        %v2281 = vadd.f32 %v2249, %v2188
        %v2282 = vadd.f32 %v2250, %v2190
        %v2283 = vadd.f32 %v2251, %v2193
        %v2284 = vadd.f32 %v2252, %v2195
        %v2285 = vadd.f32 %v2253, %v2198
        %v2286 = vadd.f32 %v2254, %v2200
        %v2287 = vadd.f32 %v2255, %v2203
        %v2288 = vadd.f32 %v2256, %v2205
        %v2289 = vadd.f32 %v2257, %v2208
        %v2290 = vadd.f32 %v2258, %v2210
        %v2291 = vadd.f32 %v2259, %v2213
        %v2292 = vadd.f32 %v2260, %v2215
        %v2293 = vadd.f32 %v2261, %v2218
        %v2294 = vadd.f32 %v2262, %v2220
        %v2295 = vadd.f32 %v2263, %v2223
        %v2296 = vadd.f32 %v2264, %v2225
        %v2297 = vadd.f32 %v2265, %v2228
        %v2298 = vadd.f32 %v2266, %v2230
        %v2299 = vadd.f32 %v2267, %v2233
        %v2300 = vadd.f32 %v2268, %v2235
        %2301 = vst [vmem:[%s246] sm:$0xff] %v2269
        %2302 = vst [vmem:[%s246 + $0x8] sm:$0xff] %v2270
        %2303 = vst [vmem:[%s246 + $0x10] sm:$0xff] %v2271
        %2304 = vst [vmem:[%s246 + $0x18] sm:$0xff] %v2272
        %2305 = vst [vmem:[%s246 + $0x20] sm:$0xff] %v2273
        %2306 = vst [vmem:[%s246 + $0x28] sm:$0xff] %v2274
        %2307 = vst [vmem:[%s246 + $0x30] sm:$0xff] %v2275
        %2308 = vst [vmem:[%s246 + $0x38] sm:$0xff] %v2276
        %2309 = vst [vmem:[%s246 + $0x40] sm:$0xff] %v2277
        %2310 = vst [vmem:[%s246 + $0x48] sm:$0xff] %v2278
        %2311 = vst [vmem:[%s246 + $0x50] sm:$0xff] %v2279
        %2312 = vst [vmem:[%s246 + $0x58] sm:$0xff] %v2280
        %2313 = vst [vmem:[%s246 + $0x60] sm:$0xff] %v2281
        %2314 = vst [vmem:[%s246 + $0x68] sm:$0xff] %v2282
        %2315 = vst [vmem:[%s246 + $0x70] sm:$0xff] %v2283
        %2316 = vst [vmem:[%s246 + $0x78] sm:$0xff] %v2284
        %2317 = vst [vmem:[%s246 + $0x80] sm:$0xff] %v2285
        %2318 = vst [vmem:[%s246 + $0x88] sm:$0xff] %v2286
        %2319 = vst [vmem:[%s246 + $0x90] sm:$0xff] %v2287
        %2320 = vst [vmem:[%s246 + $0x98] sm:$0xff] %v2288
        %2321 = vst [vmem:[%s246 + $0xa0] sm:$0xff] %v2289
        %2322 = vst [vmem:[%s246 + $0xa8] sm:$0xff] %v2290
        %2323 = vst [vmem:[%s246 + $0xb0] sm:$0xff] %v2291
        %2324 = vst [vmem:[%s246 + $0xb8] sm:$0xff] %v2292
        %2325 = vst [vmem:[%s246 + $0xc0] sm:$0xff] %v2293
        %2326 = vst [vmem:[%s246 + $0xc8] sm:$0xff] %v2294
        %2327 = vst [vmem:[%s246 + $0xd0] sm:$0xff] %v2295
        %2328 = vst [vmem:[%s246 + $0xd8] sm:$0xff] %v2296
        %2329 = vst [vmem:[%s246 + $0xe0] sm:$0xff] %v2297
        %2330 = vst [vmem:[%s246 + $0xe8] sm:$0xff] %v2298
        %2331 = vst [vmem:[%s246 + $0xf0] sm:$0xff] %v2299
        %2332 = vst [vmem:[%s246 + $0xf8] sm:$0xff] %v2300
        %s2333 = scalar_lea.vmem %s251, 768
        %v2334 = vld [vmem:[%s2333] sm:$0xf]
        %v2335 = vld [vmem:[%s2333 + $0x4] sm:$0xf]
        %v2336 = vld [vmem:[%s2333 + $0x8] sm:$0xf]
        %v2337 = vld [vmem:[%s2333 + $0xc] sm:$0xf]
        %v2338 = vld [vmem:[%s2333 + $0x10] sm:$0xf]
        %v2339 = vld [vmem:[%s2333 + $0x14] sm:$0xf]
        %v2340 = vld [vmem:[%s2333 + $0x18] sm:$0xf]
        %v2341 = vld [vmem:[%s2333 + $0x1c] sm:$0xf]
        %v2342 = vld [vmem:[%s2333 + $0x20] sm:$0xf]
        %v2343 = vld [vmem:[%s2333 + $0x24] sm:$0xf]
        %v2344 = vld [vmem:[%s2333 + $0x28] sm:$0xf]
        %v2345 = vld [vmem:[%s2333 + $0x2c] sm:$0xf]
        %v2346 = vld [vmem:[%s2333 + $0x30] sm:$0xf]
        %v2347 = vld [vmem:[%s2333 + $0x34] sm:$0xf]
        %v2348 = vld [vmem:[%s2333 + $0x38] sm:$0xf]
        %v2349 = vld [vmem:[%s2333 + $0x3c] sm:$0xf]
        %v2350 = vld [vmem:[%s2333 + $0x40] sm:$0xf]
        %v2351 = vld [vmem:[%s2333 + $0x44] sm:$0xf]
        %v2352 = vld [vmem:[%s2333 + $0x48] sm:$0xf]
        %v2353 = vld [vmem:[%s2333 + $0x4c] sm:$0xf]
        %v2354 = vld [vmem:[%s2333 + $0x50] sm:$0xf]
        %v2355 = vld [vmem:[%s2333 + $0x54] sm:$0xf]
        %v2356 = vld [vmem:[%s2333 + $0x58] sm:$0xf]
        %v2357 = vld [vmem:[%s2333 + $0x5c] sm:$0xf]
        %v2358 = vld [vmem:[%s2333 + $0x60] sm:$0xf]
        %v2359 = vld [vmem:[%s2333 + $0x64] sm:$0xf]
        %v2360 = vld [vmem:[%s2333 + $0x68] sm:$0xf]
        %v2361 = vld [vmem:[%s2333 + $0x6c] sm:$0xf]
        %v2362 = vld [vmem:[%s2333 + $0x70] sm:$0xf]
        %v2363 = vld [vmem:[%s2333 + $0x74] sm:$0xf]
        %v2364 = vld [vmem:[%s2333 + $0x78] sm:$0xf]
        %v2365 = vld [vmem:[%s2333 + $0x7c] sm:$0xf]
        %v2366 = vld [vmem:[%s257] sm:$0xf]
        %v2399 = vunpack.c.l.b16 %v2334
        %v2400 = vunpack.c.l.b16 %v2335
        %v2401 = vunpack.c.l.b16 %v2336
        %v2402 = vunpack.c.l.b16 %v2337
        %v2403 = vunpack.c.l.b16 %v2338
        %v2404 = vunpack.c.l.b16 %v2339
        %v2405 = vunpack.c.l.b16 %v2340
        %v2406 = vunpack.c.l.b16 %v2341
        %v2407 = vunpack.c.l.b16 %v2342
        %v2408 = vunpack.c.l.b16 %v2343
        %v2409 = vunpack.c.l.b16 %v2344
        %v2410 = vunpack.c.l.b16 %v2345
        %v2411 = vunpack.c.l.b16 %v2346
        %v2412 = vunpack.c.l.b16 %v2347
        %v2413 = vunpack.c.l.b16 %v2348
        %v2414 = vunpack.c.l.b16 %v2349
        %v2415 = vunpack.c.l.b16 %v2350
        %v2416 = vunpack.c.l.b16 %v2351
        %v2417 = vunpack.c.l.b16 %v2352
        %v2418 = vunpack.c.l.b16 %v2353
        %v2419 = vunpack.c.l.b16 %v2354
        %v2420 = vunpack.c.l.b16 %v2355
        %v2421 = vunpack.c.l.b16 %v2356
        %v2422 = vunpack.c.l.b16 %v2357
        %v2423 = vunpack.c.l.b16 %v2358
        %v2424 = vunpack.c.l.b16 %v2359
        %v2425 = vunpack.c.l.b16 %v2360
        %v2426 = vunpack.c.l.b16 %v2361
        %v2427 = vunpack.c.l.b16 %v2362
        %v2428 = vunpack.c.l.b16 %v2363
        %v2429 = vunpack.c.l.b16 %v2364
        %v2430 = vunpack.c.l.b16 %v2365
        %v2431 = vpack.c.b16 %v2400, %v2399
        %v2432 = vpack.c.b16 %v2402, %v2401
        %v2433 = vpack.c.b16 %v2404, %v2403
        %v2434 = vpack.c.b16 %v2406, %v2405
        %v2435 = vpack.c.b16 %v2408, %v2407
        %v2436 = vpack.c.b16 %v2410, %v2409
        %v2437 = vpack.c.b16 %v2412, %v2411
        %v2438 = vpack.c.b16 %v2414, %v2413
        %v2439 = vpack.c.b16 %v2416, %v2415
        %v2440 = vpack.c.b16 %v2418, %v2417
        %v2441 = vpack.c.b16 %v2420, %v2419
        %v2442 = vpack.c.b16 %v2422, %v2421
        %v2443 = vpack.c.b16 %v2424, %v2423
        %v2444 = vpack.c.b16 %v2426, %v2425
        %v2445 = vpack.c.b16 %v2428, %v2427
        %v2446 = vpack.c.b16 %v2430, %v2429
        %2448 = vst [vmem:[#allocation1] ss:$4 sm:$0xff] %v2366
        %v2449 = vld.sshfl [vmem:[#allocation1] sm:$0xff pattern:$0x73625140]
        %v2451 = vld.sshfl [vmem:[#allocation1 + $0x8] sm:$0xff pattern:$0x73625140]
        %2453 = vrot.lane.b32.xlu0 %v2449, 119
        %v2454 = vpop.permute.xlu0 %2453
        %2455 = vrot.lane.b32.xlu0 %v2451, 119
        %v2456 = vpop.permute.xlu0 %2455
        %vm2457 = vcmask 973824
        %v2458 = vsel %vm2457, %v2454, %v2456
        %v2460 = vsel %vm383, %v2431, 0
        %v2463 = vsel %vm383, %v2432, 0
        %v2466 = vsel %vm383, %v2433, 0
        %v2469 = vsel %vm383, %v2434, 0
        %v2472 = vsel %vm383, %v2435, 0
        %v2475 = vsel %vm383, %v2436, 0
        %v2478 = vsel %vm383, %v2437, 0
        %v2481 = vsel %vm383, %v2438, 0
        %v2484 = vsel %vm383, %v2439, 0
        %v2487 = vsel %vm383, %v2440, 0
        %v2490 = vsel %vm383, %v2441, 0
        %v2493 = vsel %vm383, %v2442, 0
        %v2496 = vsel %vm383, %v2443, 0
        %v2499 = vsel %vm383, %v2444, 0
        %v2502 = vsel %vm383, %v2445, 0
        %v2505 = vsel %vm383, %v2446, 0
        %v2508 = vsel %vm432, %v2458, 0
        %2510 = vmatpush.bf16.msra.mxu0 0
        %2511 = vmatpush.bf16.msra.mxu0 0
        %2512 = vmatpush.bf16.msra.mxu0 0
        %2513 = vmatpush.bf16.msra.mxu0 0
        %2514 = vmatpush.bf16.msra.mxu0 0
        %2515 = vmatpush.bf16.msra.mxu0 0
        %2516 = vmatpush.bf16.msra.mxu0 0
        %2517 = vmatpush.bf16.msra.mxu0 %v2508
        %2518 = vmatmul.bf16.gmra.mxu0 %v2460
        %v2519 = vpop.f32.mrf.mxu0
        %v2520 = vadd.f32 0.0, %v2519
        %v2521 = vpop.f32.mrf.mxu0
        %v2522 = vadd.f32 0.0, %v2521
        %2523 = vmatmul.bf16.gmra.mxu0 %v2463
        %v2524 = vpop.f32.mrf.mxu0
        %v2525 = vadd.f32 0.0, %v2524
        %v2526 = vpop.f32.mrf.mxu0
        %v2527 = vadd.f32 0.0, %v2526
        %2528 = vmatmul.bf16.gmra.mxu0 %v2466
        %v2529 = vpop.f32.mrf.mxu0
        %v2530 = vadd.f32 0.0, %v2529
        %v2531 = vpop.f32.mrf.mxu0
        %v2532 = vadd.f32 0.0, %v2531
        %2533 = vmatmul.bf16.gmra.mxu0 %v2469
        %v2534 = vpop.f32.mrf.mxu0
        %v2535 = vadd.f32 0.0, %v2534
        %v2536 = vpop.f32.mrf.mxu0
        %v2537 = vadd.f32 0.0, %v2536
        %2538 = vmatmul.bf16.gmra.mxu0 %v2472
        %v2539 = vpop.f32.mrf.mxu0
        %v2540 = vadd.f32 0.0, %v2539
        %v2541 = vpop.f32.mrf.mxu0
        %v2542 = vadd.f32 0.0, %v2541
        %2543 = vmatmul.bf16.gmra.mxu0 %v2475
        %v2544 = vpop.f32.mrf.mxu0
        %v2545 = vadd.f32 0.0, %v2544
        %v2546 = vpop.f32.mrf.mxu0
        %v2547 = vadd.f32 0.0, %v2546
        %2548 = vmatmul.bf16.gmra.mxu0 %v2478
        %v2549 = vpop.f32.mrf.mxu0
        %v2550 = vadd.f32 0.0, %v2549
        %v2551 = vpop.f32.mrf.mxu0
        %v2552 = vadd.f32 0.0, %v2551
        %2553 = vmatmul.bf16.gmra.mxu0 %v2481
        %v2554 = vpop.f32.mrf.mxu0
        %v2555 = vadd.f32 0.0, %v2554
        %v2556 = vpop.f32.mrf.mxu0
        %v2557 = vadd.f32 0.0, %v2556
        %2558 = vmatmul.bf16.gmra.mxu0 %v2484
        %v2559 = vpop.f32.mrf.mxu0
        %v2560 = vadd.f32 0.0, %v2559
        %v2561 = vpop.f32.mrf.mxu0
        %v2562 = vadd.f32 0.0, %v2561
        %2563 = vmatmul.bf16.gmra.mxu0 %v2487
        %v2564 = vpop.f32.mrf.mxu0
        %v2565 = vadd.f32 0.0, %v2564
        %v2566 = vpop.f32.mrf.mxu0
        %v2567 = vadd.f32 0.0, %v2566
        %2568 = vmatmul.bf16.gmra.mxu0 %v2490
        %v2569 = vpop.f32.mrf.mxu0
        %v2570 = vadd.f32 0.0, %v2569
        %v2571 = vpop.f32.mrf.mxu0
        %v2572 = vadd.f32 0.0, %v2571
        %2573 = vmatmul.bf16.gmra.mxu0 %v2493
        %v2574 = vpop.f32.mrf.mxu0
        %v2575 = vadd.f32 0.0, %v2574
        %v2576 = vpop.f32.mrf.mxu0
        %v2577 = vadd.f32 0.0, %v2576
        %2578 = vmatmul.bf16.gmra.mxu0 %v2496
        %v2579 = vpop.f32.mrf.mxu0
        %v2580 = vadd.f32 0.0, %v2579
        %v2581 = vpop.f32.mrf.mxu0
        %v2582 = vadd.f32 0.0, %v2581
        %2583 = vmatmul.bf16.gmra.mxu0 %v2499
        %v2584 = vpop.f32.mrf.mxu0
        %v2585 = vadd.f32 0.0, %v2584
        %v2586 = vpop.f32.mrf.mxu0
        %v2587 = vadd.f32 0.0, %v2586
        %2588 = vmatmul.bf16.gmra.mxu0 %v2502
        %v2589 = vpop.f32.mrf.mxu0
        %v2590 = vadd.f32 0.0, %v2589
        %v2591 = vpop.f32.mrf.mxu0
        %v2592 = vadd.f32 0.0, %v2591
        %2593 = vmatmul.bf16.gmra.mxu0 %v2505
        %v2594 = vpop.f32.mrf.mxu0
        %v2595 = vadd.f32 0.0, %v2594
        %v2596 = vpop.f32.mrf.mxu0
        %v2597 = vadd.f32 0.0, %v2596
        %2598 = vdwg.mxu0
        %v2599 = vld [vmem:[%s246] sm:$0xff]
        %v2600 = vld [vmem:[%s246 + $0x8] sm:$0xff]
        %v2601 = vld [vmem:[%s246 + $0x10] sm:$0xff]
        %v2602 = vld [vmem:[%s246 + $0x18] sm:$0xff]
        %v2603 = vld [vmem:[%s246 + $0x20] sm:$0xff]
        %v2604 = vld [vmem:[%s246 + $0x28] sm:$0xff]
        %v2605 = vld [vmem:[%s246 + $0x30] sm:$0xff]
        %v2606 = vld [vmem:[%s246 + $0x38] sm:$0xff]
        %v2607 = vld [vmem:[%s246 + $0x40] sm:$0xff]
        %v2608 = vld [vmem:[%s246 + $0x48] sm:$0xff]
        %v2609 = vld [vmem:[%s246 + $0x50] sm:$0xff]
        %v2610 = vld [vmem:[%s246 + $0x58] sm:$0xff]
        %v2611 = vld [vmem:[%s246 + $0x60] sm:$0xff]
        %v2612 = vld [vmem:[%s246 + $0x68] sm:$0xff]
        %v2613 = vld [vmem:[%s246 + $0x70] sm:$0xff]
        %v2614 = vld [vmem:[%s246 + $0x78] sm:$0xff]
        %v2615 = vld [vmem:[%s246 + $0x80] sm:$0xff]
        %v2616 = vld [vmem:[%s246 + $0x88] sm:$0xff]
        %v2617 = vld [vmem:[%s246 + $0x90] sm:$0xff]
        %v2618 = vld [vmem:[%s246 + $0x98] sm:$0xff]
        %v2619 = vld [vmem:[%s246 + $0xa0] sm:$0xff]
        %v2620 = vld [vmem:[%s246 + $0xa8] sm:$0xff]
        %v2621 = vld [vmem:[%s246 + $0xb0] sm:$0xff]
        %v2622 = vld [vmem:[%s246 + $0xb8] sm:$0xff]
        %v2623 = vld [vmem:[%s246 + $0xc0] sm:$0xff]
        %v2624 = vld [vmem:[%s246 + $0xc8] sm:$0xff]
        %v2625 = vld [vmem:[%s246 + $0xd0] sm:$0xff]
        %v2626 = vld [vmem:[%s246 + $0xd8] sm:$0xff]
        %v2627 = vld [vmem:[%s246 + $0xe0] sm:$0xff]
        %v2628 = vld [vmem:[%s246 + $0xe8] sm:$0xff]
        %v2629 = vld [vmem:[%s246 + $0xf0] sm:$0xff]
        %v2630 = vld [vmem:[%s246 + $0xf8] sm:$0xff]
        %v2631 = vadd.f32 %v2599, %v2520
        %v2632 = vadd.f32 %v2600, %v2522
        %v2633 = vadd.f32 %v2601, %v2525
        %v2634 = vadd.f32 %v2602, %v2527
        %v2635 = vadd.f32 %v2603, %v2530
        %v2636 = vadd.f32 %v2604, %v2532
        %v2637 = vadd.f32 %v2605, %v2535
        %v2638 = vadd.f32 %v2606, %v2537
        %v2639 = vadd.f32 %v2607, %v2540
        %v2640 = vadd.f32 %v2608, %v2542
        %v2641 = vadd.f32 %v2609, %v2545
        %v2642 = vadd.f32 %v2610, %v2547
        %v2643 = vadd.f32 %v2611, %v2550
        %v2644 = vadd.f32 %v2612, %v2552
        %v2645 = vadd.f32 %v2613, %v2555
        %v2646 = vadd.f32 %v2614, %v2557
        %v2647 = vadd.f32 %v2615, %v2560
        %v2648 = vadd.f32 %v2616, %v2562
        %v2649 = vadd.f32 %v2617, %v2565
        %v2650 = vadd.f32 %v2618, %v2567
        %v2651 = vadd.f32 %v2619, %v2570
        %v2652 = vadd.f32 %v2620, %v2572
        %v2653 = vadd.f32 %v2621, %v2575
        %v2654 = vadd.f32 %v2622, %v2577
        %v2655 = vadd.f32 %v2623, %v2580
        %v2656 = vadd.f32 %v2624, %v2582
        %v2657 = vadd.f32 %v2625, %v2585
        %v2658 = vadd.f32 %v2626, %v2587
        %v2659 = vadd.f32 %v2627, %v2590
        %v2660 = vadd.f32 %v2628, %v2592
        %v2661 = vadd.f32 %v2629, %v2595
        %v2662 = vadd.f32 %v2630, %v2597
        %2663 = vst [vmem:[%s246] sm:$0xff] %v2631
        %2664 = vst [vmem:[%s246 + $0x8] sm:$0xff] %v2632
        %2665 = vst [vmem:[%s246 + $0x10] sm:$0xff] %v2633
        %2666 = vst [vmem:[%s246 + $0x18] sm:$0xff] %v2634
        %2667 = vst [vmem:[%s246 + $0x20] sm:$0xff] %v2635
        %2668 = vst [vmem:[%s246 + $0x28] sm:$0xff] %v2636
        %2669 = vst [vmem:[%s246 + $0x30] sm:$0xff] %v2637
        %2670 = vst [vmem:[%s246 + $0x38] sm:$0xff] %v2638
        %2671 = vst [vmem:[%s246 + $0x40] sm:$0xff] %v2639
        %2672 = vst [vmem:[%s246 + $0x48] sm:$0xff] %v2640
        %2673 = vst [vmem:[%s246 + $0x50] sm:$0xff] %v2641
        %2674 = vst [vmem:[%s246 + $0x58] sm:$0xff] %v2642
        %2675 = vst [vmem:[%s246 + $0x60] sm:$0xff] %v2643
        %2676 = vst [vmem:[%s246 + $0x68] sm:$0xff] %v2644
        %2677 = vst [vmem:[%s246 + $0x70] sm:$0xff] %v2645
        %2678 = vst [vmem:[%s246 + $0x78] sm:$0xff] %v2646
        %2679 = vst [vmem:[%s246 + $0x80] sm:$0xff] %v2647
        %2680 = vst [vmem:[%s246 + $0x88] sm:$0xff] %v2648
        %2681 = vst [vmem:[%s246 + $0x90] sm:$0xff] %v2649
        %2682 = vst [vmem:[%s246 + $0x98] sm:$0xff] %v2650
        %2683 = vst [vmem:[%s246 + $0xa0] sm:$0xff] %v2651
        %2684 = vst [vmem:[%s246 + $0xa8] sm:$0xff] %v2652
        %2685 = vst [vmem:[%s246 + $0xb0] sm:$0xff] %v2653
        %2686 = vst [vmem:[%s246 + $0xb8] sm:$0xff] %v2654
        %2687 = vst [vmem:[%s246 + $0xc0] sm:$0xff] %v2655
        %2688 = vst [vmem:[%s246 + $0xc8] sm:$0xff] %v2656
        %2689 = vst [vmem:[%s246 + $0xd0] sm:$0xff] %v2657
        %2690 = vst [vmem:[%s246 + $0xd8] sm:$0xff] %v2658
        %2691 = vst [vmem:[%s246 + $0xe0] sm:$0xff] %v2659
        %2692 = vst [vmem:[%s246 + $0xe8] sm:$0xff] %v2660
        %2693 = vst [vmem:[%s246 + $0xf0] sm:$0xff] %v2661
        %2694 = vst [vmem:[%s246 + $0xf8] sm:$0xff] %v2662
        %s2695 = scalar_lea.vmem %s251, 896
        %v2696 = vld [vmem:[%s2695] sm:$0xf]
        %v2697 = vld [vmem:[%s2695 + $0x4] sm:$0xf]
        %v2698 = vld [vmem:[%s2695 + $0x8] sm:$0xf]
        %v2699 = vld [vmem:[%s2695 + $0xc] sm:$0xf]
        %v2700 = vld [vmem:[%s2695 + $0x10] sm:$0xf]
        %v2701 = vld [vmem:[%s2695 + $0x14] sm:$0xf]
        %v2702 = vld [vmem:[%s2695 + $0x18] sm:$0xf]
        %v2703 = vld [vmem:[%s2695 + $0x1c] sm:$0xf]
        %v2704 = vld [vmem:[%s2695 + $0x20] sm:$0xf]
        %v2705 = vld [vmem:[%s2695 + $0x24] sm:$0xf]
        %v2706 = vld [vmem:[%s2695 + $0x28] sm:$0xf]
        %v2707 = vld [vmem:[%s2695 + $0x2c] sm:$0xf]
        %v2708 = vld [vmem:[%s2695 + $0x30] sm:$0xf]
        %v2709 = vld [vmem:[%s2695 + $0x34] sm:$0xf]
        %v2710 = vld [vmem:[%s2695 + $0x38] sm:$0xf]
        %v2711 = vld [vmem:[%s2695 + $0x3c] sm:$0xf]
        %v2712 = vld [vmem:[%s2695 + $0x40] sm:$0xf]
        %v2713 = vld [vmem:[%s2695 + $0x44] sm:$0xf]
        %v2714 = vld [vmem:[%s2695 + $0x48] sm:$0xf]
        %v2715 = vld [vmem:[%s2695 + $0x4c] sm:$0xf]
        %v2716 = vld [vmem:[%s2695 + $0x50] sm:$0xf]
        %v2717 = vld [vmem:[%s2695 + $0x54] sm:$0xf]
        %v2718 = vld [vmem:[%s2695 + $0x58] sm:$0xf]
        %v2719 = vld [vmem:[%s2695 + $0x5c] sm:$0xf]
        %v2720 = vld [vmem:[%s2695 + $0x60] sm:$0xf]
        %v2721 = vld [vmem:[%s2695 + $0x64] sm:$0xf]
        %v2722 = vld [vmem:[%s2695 + $0x68] sm:$0xf]
        %v2723 = vld [vmem:[%s2695 + $0x6c] sm:$0xf]
        %v2724 = vld [vmem:[%s2695 + $0x70] sm:$0xf]
        %v2725 = vld [vmem:[%s2695 + $0x74] sm:$0xf]
        %v2726 = vld [vmem:[%s2695 + $0x78] sm:$0xf]
        %v2727 = vld [vmem:[%s2695 + $0x7c] sm:$0xf]
        %v2728 = vld [vmem:[%s590] sm:$0xf]
        %v2761 = vunpack.c.l.b16 %v2696
        %v2762 = vunpack.c.l.b16 %v2697
        %v2763 = vunpack.c.l.b16 %v2698
        %v2764 = vunpack.c.l.b16 %v2699
        %v2765 = vunpack.c.l.b16 %v2700
        %v2766 = vunpack.c.l.b16 %v2701
        %v2767 = vunpack.c.l.b16 %v2702
        %v2768 = vunpack.c.l.b16 %v2703
        %v2769 = vunpack.c.l.b16 %v2704
        %v2770 = vunpack.c.l.b16 %v2705
        %v2771 = vunpack.c.l.b16 %v2706
        %v2772 = vunpack.c.l.b16 %v2707
        %v2773 = vunpack.c.l.b16 %v2708
        %v2774 = vunpack.c.l.b16 %v2709
        %v2775 = vunpack.c.l.b16 %v2710
        %v2776 = vunpack.c.l.b16 %v2711
        %v2777 = vunpack.c.l.b16 %v2712
        %v2778 = vunpack.c.l.b16 %v2713
        %v2779 = vunpack.c.l.b16 %v2714
        %v2780 = vunpack.c.l.b16 %v2715
        %v2781 = vunpack.c.l.b16 %v2716
        %v2782 = vunpack.c.l.b16 %v2717
        %v2783 = vunpack.c.l.b16 %v2718
        %v2784 = vunpack.c.l.b16 %v2719
        %v2785 = vunpack.c.l.b16 %v2720
        %v2786 = vunpack.c.l.b16 %v2721
        %v2787 = vunpack.c.l.b16 %v2722
        %v2788 = vunpack.c.l.b16 %v2723
        %v2789 = vunpack.c.l.b16 %v2724
        %v2790 = vunpack.c.l.b16 %v2725
        %v2791 = vunpack.c.l.b16 %v2726
        %v2792 = vunpack.c.l.b16 %v2727
        %v2793 = vpack.c.b16 %v2762, %v2761
        %v2794 = vpack.c.b16 %v2764, %v2763
        %v2795 = vpack.c.b16 %v2766, %v2765
        %v2796 = vpack.c.b16 %v2768, %v2767
        %v2797 = vpack.c.b16 %v2770, %v2769
        %v2798 = vpack.c.b16 %v2772, %v2771
        %v2799 = vpack.c.b16 %v2774, %v2773
        %v2800 = vpack.c.b16 %v2776, %v2775
        %v2801 = vpack.c.b16 %v2778, %v2777
        %v2802 = vpack.c.b16 %v2780, %v2779
        %v2803 = vpack.c.b16 %v2782, %v2781
        %v2804 = vpack.c.b16 %v2784, %v2783
        %v2805 = vpack.c.b16 %v2786, %v2785
        %v2806 = vpack.c.b16 %v2788, %v2787
        %v2807 = vpack.c.b16 %v2790, %v2789
        %v2808 = vpack.c.b16 %v2792, %v2791
        %2810 = vst [vmem:[#allocation1] ss:$4 sm:$0xff] %v2728
        %v2811 = vld.sshfl [vmem:[#allocation1] sm:$0xff pattern:$0x73625140]
        %v2813 = vld.sshfl [vmem:[#allocation1 + $0x8] sm:$0xff pattern:$0x73625140]
        %2815 = vrot.lane.b32.xlu0 %v2811, 119
        %v2816 = vpop.permute.xlu0 %2815
        %2817 = vrot.lane.b32.xlu0 %v2813, 119
        %v2818 = vpop.permute.xlu0 %2817
        %v2819 = vsel %vm2457, %v2816, %v2818
        %v2821 = vsel %vm383, %v2793, 0
        %v2824 = vsel %vm383, %v2794, 0
        %v2827 = vsel %vm383, %v2795, 0
        %v2830 = vsel %vm383, %v2796, 0
        %v2833 = vsel %vm383, %v2797, 0
        %v2836 = vsel %vm383, %v2798, 0
        %v2839 = vsel %vm383, %v2799, 0
        %v2842 = vsel %vm383, %v2800, 0
        %v2845 = vsel %vm383, %v2801, 0
        %v2848 = vsel %vm383, %v2802, 0
        %v2851 = vsel %vm383, %v2803, 0
        %v2854 = vsel %vm383, %v2804, 0
        %v2857 = vsel %vm383, %v2805, 0
        %v2860 = vsel %vm383, %v2806, 0
        %v2863 = vsel %vm383, %v2807, 0
        %v2866 = vsel %vm383, %v2808, 0
        %v2869 = vsel %vm432, %v2819, 0
        %2871 = vmatpush.bf16.msra.mxu0 0
        %2872 = vmatpush.bf16.msra.mxu0 0
        %2873 = vmatpush.bf16.msra.mxu0 0
        %2874 = vmatpush.bf16.msra.mxu0 0
        %2875 = vmatpush.bf16.msra.mxu0 0
        %2876 = vmatpush.bf16.msra.mxu0 0
        %2877 = vmatpush.bf16.msra.mxu0 0
        %2878 = vmatpush.bf16.msra.mxu0 %v2869
        %2879 = vmatmul.bf16.gmra.mxu0 %v2821
        %v2880 = vpop.f32.mrf.mxu0
        %v2881 = vadd.f32 0.0, %v2880
        %v2882 = vpop.f32.mrf.mxu0
        %v2883 = vadd.f32 0.0, %v2882
        %2884 = vmatmul.bf16.gmra.mxu0 %v2824
        %v2885 = vpop.f32.mrf.mxu0
        %v2886 = vadd.f32 0.0, %v2885
        %v2887 = vpop.f32.mrf.mxu0
        %v2888 = vadd.f32 0.0, %v2887
        %2889 = vmatmul.bf16.gmra.mxu0 %v2827
        %v2890 = vpop.f32.mrf.mxu0
        %v2891 = vadd.f32 0.0, %v2890
        %v2892 = vpop.f32.mrf.mxu0
        %v2893 = vadd.f32 0.0, %v2892
        %2894 = vmatmul.bf16.gmra.mxu0 %v2830
        %v2895 = vpop.f32.mrf.mxu0
        %v2896 = vadd.f32 0.0, %v2895
        %v2897 = vpop.f32.mrf.mxu0
        %v2898 = vadd.f32 0.0, %v2897
        %2899 = vmatmul.bf16.gmra.mxu0 %v2833
        %v2900 = vpop.f32.mrf.mxu0
        %v2901 = vadd.f32 0.0, %v2900
        %v2902 = vpop.f32.mrf.mxu0
        %v2903 = vadd.f32 0.0, %v2902
        %2904 = vmatmul.bf16.gmra.mxu0 %v2836
        %v2905 = vpop.f32.mrf.mxu0
        %v2906 = vadd.f32 0.0, %v2905
        %v2907 = vpop.f32.mrf.mxu0
        %v2908 = vadd.f32 0.0, %v2907
        %2909 = vmatmul.bf16.gmra.mxu0 %v2839
        %v2910 = vpop.f32.mrf.mxu0
        %v2911 = vadd.f32 0.0, %v2910
        %v2912 = vpop.f32.mrf.mxu0
        %v2913 = vadd.f32 0.0, %v2912
        %2914 = vmatmul.bf16.gmra.mxu0 %v2842
        %v2915 = vpop.f32.mrf.mxu0
        %v2916 = vadd.f32 0.0, %v2915
        %v2917 = vpop.f32.mrf.mxu0
        %v2918 = vadd.f32 0.0, %v2917
        %2919 = vmatmul.bf16.gmra.mxu0 %v2845
        %v2920 = vpop.f32.mrf.mxu0
        %v2921 = vadd.f32 0.0, %v2920
        %v2922 = vpop.f32.mrf.mxu0
        %v2923 = vadd.f32 0.0, %v2922
        %2924 = vmatmul.bf16.gmra.mxu0 %v2848
        %v2925 = vpop.f32.mrf.mxu0
        %v2926 = vadd.f32 0.0, %v2925
        %v2927 = vpop.f32.mrf.mxu0
        %v2928 = vadd.f32 0.0, %v2927
        %2929 = vmatmul.bf16.gmra.mxu0 %v2851
        %v2930 = vpop.f32.mrf.mxu0
        %v2931 = vadd.f32 0.0, %v2930
        %v2932 = vpop.f32.mrf.mxu0
        %v2933 = vadd.f32 0.0, %v2932
        %2934 = vmatmul.bf16.gmra.mxu0 %v2854
        %v2935 = vpop.f32.mrf.mxu0
        %v2936 = vadd.f32 0.0, %v2935
        %v2937 = vpop.f32.mrf.mxu0
        %v2938 = vadd.f32 0.0, %v2937
        %2939 = vmatmul.bf16.gmra.mxu0 %v2857
        %v2940 = vpop.f32.mrf.mxu0
        %v2941 = vadd.f32 0.0, %v2940
        %v2942 = vpop.f32.mrf.mxu0
        %v2943 = vadd.f32 0.0, %v2942
        %2944 = vmatmul.bf16.gmra.mxu0 %v2860
        %v2945 = vpop.f32.mrf.mxu0
        %v2946 = vadd.f32 0.0, %v2945
        %v2947 = vpop.f32.mrf.mxu0
        %v2948 = vadd.f32 0.0, %v2947
        %2949 = vmatmul.bf16.gmra.mxu0 %v2863
        %v2950 = vpop.f32.mrf.mxu0
        %v2951 = vadd.f32 0.0, %v2950
        %v2952 = vpop.f32.mrf.mxu0
        %v2953 = vadd.f32 0.0, %v2952
        %2954 = vmatmul.bf16.gmra.mxu0 %v2866
        %v2955 = vpop.f32.mrf.mxu0
        %v2956 = vadd.f32 0.0, %v2955
        %v2957 = vpop.f32.mrf.mxu0
        %v2958 = vadd.f32 0.0, %v2957
        %2959 = vdwg.mxu0
        %v2960 = vld [vmem:[%s246] sm:$0xff]
        %v2961 = vld [vmem:[%s246 + $0x8] sm:$0xff]
        %v2962 = vld [vmem:[%s246 + $0x10] sm:$0xff]
        %v2963 = vld [vmem:[%s246 + $0x18] sm:$0xff]
        %v2964 = vld [vmem:[%s246 + $0x20] sm:$0xff]
        %v2965 = vld [vmem:[%s246 + $0x28] sm:$0xff]
        %v2966 = vld [vmem:[%s246 + $0x30] sm:$0xff]
        %v2967 = vld [vmem:[%s246 + $0x38] sm:$0xff]
        %v2968 = vld [vmem:[%s246 + $0x40] sm:$0xff]
        %v2969 = vld [vmem:[%s246 + $0x48] sm:$0xff]
        %v2970 = vld [vmem:[%s246 + $0x50] sm:$0xff]
        %v2971 = vld [vmem:[%s246 + $0x58] sm:$0xff]
        %v2972 = vld [vmem:[%s246 + $0x60] sm:$0xff]
        %v2973 = vld [vmem:[%s246 + $0x68] sm:$0xff]
        %v2974 = vld [vmem:[%s246 + $0x70] sm:$0xff]
        %v2975 = vld [vmem:[%s246 + $0x78] sm:$0xff]
        %v2976 = vld [vmem:[%s246 + $0x80] sm:$0xff]
        %v2977 = vld [vmem:[%s246 + $0x88] sm:$0xff]
        %v2978 = vld [vmem:[%s246 + $0x90] sm:$0xff]
        %v2979 = vld [vmem:[%s246 + $0x98] sm:$0xff]
        %v2980 = vld [vmem:[%s246 + $0xa0] sm:$0xff]
        %v2981 = vld [vmem:[%s246 + $0xa8] sm:$0xff]
        %v2982 = vld [vmem:[%s246 + $0xb0] sm:$0xff]
        %v2983 = vld [vmem:[%s246 + $0xb8] sm:$0xff]
        %v2984 = vld [vmem:[%s246 + $0xc0] sm:$0xff]
        %v2985 = vld [vmem:[%s246 + $0xc8] sm:$0xff]
        %v2986 = vld [vmem:[%s246 + $0xd0] sm:$0xff]
        %v2987 = vld [vmem:[%s246 + $0xd8] sm:$0xff]
        %v2988 = vld [vmem:[%s246 + $0xe0] sm:$0xff]
        %v2989 = vld [vmem:[%s246 + $0xe8] sm:$0xff]
        %v2990 = vld [vmem:[%s246 + $0xf0] sm:$0xff]
        %v2991 = vld [vmem:[%s246 + $0xf8] sm:$0xff]
        %v2992 = vadd.f32 %v2960, %v2881
        %v2993 = vadd.f32 %v2961, %v2883
        %v2994 = vadd.f32 %v2962, %v2886
        %v2995 = vadd.f32 %v2963, %v2888
        %v2996 = vadd.f32 %v2964, %v2891
        %v2997 = vadd.f32 %v2965, %v2893
        %v2998 = vadd.f32 %v2966, %v2896
        %v2999 = vadd.f32 %v2967, %v2898
        %v3000 = vadd.f32 %v2968, %v2901
        %v3001 = vadd.f32 %v2969, %v2903
        %v3002 = vadd.f32 %v2970, %v2906
        %v3003 = vadd.f32 %v2971, %v2908
        %v3004 = vadd.f32 %v2972, %v2911
        %v3005 = vadd.f32 %v2973, %v2913
        %v3006 = vadd.f32 %v2974, %v2916
        %v3007 = vadd.f32 %v2975, %v2918
        %v3008 = vadd.f32 %v2976, %v2921
        %v3009 = vadd.f32 %v2977, %v2923
        %v3010 = vadd.f32 %v2978, %v2926
        %v3011 = vadd.f32 %v2979, %v2928
        %v3012 = vadd.f32 %v2980, %v2931
        %v3013 = vadd.f32 %v2981, %v2933
        %v3014 = vadd.f32 %v2982, %v2936
        %v3015 = vadd.f32 %v2983, %v2938
        %v3016 = vadd.f32 %v2984, %v2941
        %v3017 = vadd.f32 %v2985, %v2943
        %v3018 = vadd.f32 %v2986, %v2946
        %v3019 = vadd.f32 %v2987, %v2948
        %v3020 = vadd.f32 %v2988, %v2951
        %v3021 = vadd.f32 %v2989, %v2953
        %v3022 = vadd.f32 %v2990, %v2956
        %v3023 = vadd.f32 %v2991, %v2958
        %3024 = vst [vmem:[%s246] sm:$0xff] %v2992
        %3025 = vst [vmem:[%s246 + $0x8] sm:$0xff] %v2993
        %3026 = vst [vmem:[%s246 + $0x10] sm:$0xff] %v2994
        %3027 = vst [vmem:[%s246 + $0x18] sm:$0xff] %v2995
        %3028 = vst [vmem:[%s246 + $0x20] sm:$0xff] %v2996
        %3029 = vst [vmem:[%s246 + $0x28] sm:$0xff] %v2997
        %3030 = vst [vmem:[%s246 + $0x30] sm:$0xff] %v2998
        %3031 = vst [vmem:[%s246 + $0x38] sm:$0xff] %v2999
        %3032 = vst [vmem:[%s246 + $0x40] sm:$0xff] %v3000
        %3033 = vst [vmem:[%s246 + $0x48] sm:$0xff] %v3001
        %3034 = vst [vmem:[%s246 + $0x50] sm:$0xff] %v3002
        %3035 = vst [vmem:[%s246 + $0x58] sm:$0xff] %v3003
        %3036 = vst [vmem:[%s246 + $0x60] sm:$0xff] %v3004
        %3037 = vst [vmem:[%s246 + $0x68] sm:$0xff] %v3005
        %3038 = vst [vmem:[%s246 + $0x70] sm:$0xff] %v3006
        %3039 = vst [vmem:[%s246 + $0x78] sm:$0xff] %v3007
        %3040 = vst [vmem:[%s246 + $0x80] sm:$0xff] %v3008
        %3041 = vst [vmem:[%s246 + $0x88] sm:$0xff] %v3009
        %3042 = vst [vmem:[%s246 + $0x90] sm:$0xff] %v3010
        %3043 = vst [vmem:[%s246 + $0x98] sm:$0xff] %v3011
        %3044 = vst [vmem:[%s246 + $0xa0] sm:$0xff] %v3012
        %3045 = vst [vmem:[%s246 + $0xa8] sm:$0xff] %v3013
        %3046 = vst [vmem:[%s246 + $0xb0] sm:$0xff] %v3014
        %3047 = vst [vmem:[%s246 + $0xb8] sm:$0xff] %v3015
        %3048 = vst [vmem:[%s246 + $0xc0] sm:$0xff] %v3016
        %3049 = vst [vmem:[%s246 + $0xc8] sm:$0xff] %v3017
        %3050 = vst [vmem:[%s246 + $0xd0] sm:$0xff] %v3018
        %3051 = vst [vmem:[%s246 + $0xd8] sm:$0xff] %v3019
        %3052 = vst [vmem:[%s246 + $0xe0] sm:$0xff] %v3020
        %3053 = vst [vmem:[%s246 + $0xe8] sm:$0xff] %v3021
        %3054 = vst [vmem:[%s246 + $0xf0] sm:$0xff] %v3022
        %3055 = vst [vmem:[%s246 + $0xf8] sm:$0xff] %v3023
        %s3056 = scalar_lea.vmem %s251, 1024
        %v3057 = vld [vmem:[%s3056] sm:$0xf]
        %v3058 = vld [vmem:[%s3056 + $0x4] sm:$0xf]
        %v3059 = vld [vmem:[%s3056 + $0x8] sm:$0xf]
        %v3060 = vld [vmem:[%s3056 + $0xc] sm:$0xf]
        %v3061 = vld [vmem:[%s3056 + $0x10] sm:$0xf]
        %v3062 = vld [vmem:[%s3056 + $0x14] sm:$0xf]
        %v3063 = vld [vmem:[%s3056 + $0x18] sm:$0xf]
        %v3064 = vld [vmem:[%s3056 + $0x1c] sm:$0xf]
        %v3065 = vld [vmem:[%s3056 + $0x20] sm:$0xf]
        %v3066 = vld [vmem:[%s3056 + $0x24] sm:$0xf]
        %v3067 = vld [vmem:[%s3056 + $0x28] sm:$0xf]
        %v3068 = vld [vmem:[%s3056 + $0x2c] sm:$0xf]
        %v3069 = vld [vmem:[%s3056 + $0x30] sm:$0xf]
        %v3070 = vld [vmem:[%s3056 + $0x34] sm:$0xf]
        %v3071 = vld [vmem:[%s3056 + $0x38] sm:$0xf]
        %v3072 = vld [vmem:[%s3056 + $0x3c] sm:$0xf]
        %v3073 = vld [vmem:[%s3056 + $0x40] sm:$0xf]
        %v3074 = vld [vmem:[%s3056 + $0x44] sm:$0xf]
        %v3075 = vld [vmem:[%s3056 + $0x48] sm:$0xf]
        %v3076 = vld [vmem:[%s3056 + $0x4c] sm:$0xf]
        %v3077 = vld [vmem:[%s3056 + $0x50] sm:$0xf]
        %v3078 = vld [vmem:[%s3056 + $0x54] sm:$0xf]
        %v3079 = vld [vmem:[%s3056 + $0x58] sm:$0xf]
        %v3080 = vld [vmem:[%s3056 + $0x5c] sm:$0xf]
        %v3081 = vld [vmem:[%s3056 + $0x60] sm:$0xf]
        %v3082 = vld [vmem:[%s3056 + $0x64] sm:$0xf]
        %v3083 = vld [vmem:[%s3056 + $0x68] sm:$0xf]
        %v3084 = vld [vmem:[%s3056 + $0x6c] sm:$0xf]
        %v3085 = vld [vmem:[%s3056 + $0x70] sm:$0xf]
        %v3086 = vld [vmem:[%s3056 + $0x74] sm:$0xf]
        %v3087 = vld [vmem:[%s3056 + $0x78] sm:$0xf]
        %v3088 = vld [vmem:[%s3056 + $0x7c] sm:$0xf]
        %v3089 = vld [vmem:[%s257] sm:$0xf]
        %v3122 = vunpack.c.l.b16 %v3057
        %v3123 = vunpack.c.l.b16 %v3058
        %v3124 = vunpack.c.l.b16 %v3059
        %v3125 = vunpack.c.l.b16 %v3060
        %v3126 = vunpack.c.l.b16 %v3061
        %v3127 = vunpack.c.l.b16 %v3062
        %v3128 = vunpack.c.l.b16 %v3063
        %v3129 = vunpack.c.l.b16 %v3064
        %v3130 = vunpack.c.l.b16 %v3065
        %v3131 = vunpack.c.l.b16 %v3066
        %v3132 = vunpack.c.l.b16 %v3067
        %v3133 = vunpack.c.l.b16 %v3068
        %v3134 = vunpack.c.l.b16 %v3069
        %v3135 = vunpack.c.l.b16 %v3070
        %v3136 = vunpack.c.l.b16 %v3071
        %v3137 = vunpack.c.l.b16 %v3072
        %v3138 = vunpack.c.l.b16 %v3073
        %v3139 = vunpack.c.l.b16 %v3074
        %v3140 = vunpack.c.l.b16 %v3075
        %v3141 = vunpack.c.l.b16 %v3076
        %v3142 = vunpack.c.l.b16 %v3077
        %v3143 = vunpack.c.l.b16 %v3078
        %v3144 = vunpack.c.l.b16 %v3079
        %v3145 = vunpack.c.l.b16 %v3080
        %v3146 = vunpack.c.l.b16 %v3081
        %v3147 = vunpack.c.l.b16 %v3082
        %v3148 = vunpack.c.l.b16 %v3083
        %v3149 = vunpack.c.l.b16 %v3084
        %v3150 = vunpack.c.l.b16 %v3085
        %v3151 = vunpack.c.l.b16 %v3086
        %v3152 = vunpack.c.l.b16 %v3087
        %v3153 = vunpack.c.l.b16 %v3088
        %v3154 = vpack.c.b16 %v3123, %v3122
        %v3155 = vpack.c.b16 %v3125, %v3124
        %v3156 = vpack.c.b16 %v3127, %v3126
        %v3157 = vpack.c.b16 %v3129, %v3128
        %v3158 = vpack.c.b16 %v3131, %v3130
        %v3159 = vpack.c.b16 %v3133, %v3132
        %v3160 = vpack.c.b16 %v3135, %v3134
        %v3161 = vpack.c.b16 %v3137, %v3136
        %v3162 = vpack.c.b16 %v3139, %v3138
        %v3163 = vpack.c.b16 %v3141, %v3140
        %v3164 = vpack.c.b16 %v3143, %v3142
        %v3165 = vpack.c.b16 %v3145, %v3144
        %v3166 = vpack.c.b16 %v3147, %v3146
        %v3167 = vpack.c.b16 %v3149, %v3148
        %v3168 = vpack.c.b16 %v3151, %v3150
        %v3169 = vpack.c.b16 %v3153, %v3152
        %3171 = vst [vmem:[#allocation1] ss:$4 sm:$0xff] %v3089
        %v3172 = vld.sshfl [vmem:[#allocation1] sm:$0xff pattern:$0x73625140]
        %v3174 = vld.sshfl [vmem:[#allocation1 + $0x8] sm:$0xff pattern:$0x73625140]
        %3176 = vrot.lane.b32.xlu0 %v3172, 118
        %v3177 = vpop.permute.xlu0 %3176
        %3178 = vrot.lane.b32.xlu0 %v3174, 118
        %v3179 = vpop.permute.xlu0 %3178
        %vm3180 = vcmask 965632
        %v3181 = vsel %vm3180, %v3177, %v3179
        %v3183 = vsel %vm383, %v3154, 0
        %v3186 = vsel %vm383, %v3155, 0
        %v3189 = vsel %vm383, %v3156, 0
        %v3192 = vsel %vm383, %v3157, 0
        %v3195 = vsel %vm383, %v3158, 0
        %v3198 = vsel %vm383, %v3159, 0
        %v3201 = vsel %vm383, %v3160, 0
        %v3204 = vsel %vm383, %v3161, 0
        %v3207 = vsel %vm383, %v3162, 0
        %v3210 = vsel %vm383, %v3163, 0
        %v3213 = vsel %vm383, %v3164, 0
        %v3216 = vsel %vm383, %v3165, 0
        %v3219 = vsel %vm383, %v3166, 0
        %v3222 = vsel %vm383, %v3167, 0
        %v3225 = vsel %vm383, %v3168, 0
        %v3228 = vsel %vm383, %v3169, 0
        %v3231 = vsel %vm432, %v3181, 0
        %3233 = vmatpush.bf16.msra.mxu0 0
        %3234 = vmatpush.bf16.msra.mxu0 0
        %3235 = vmatpush.bf16.msra.mxu0 0
        %3236 = vmatpush.bf16.msra.mxu0 0
        %3237 = vmatpush.bf16.msra.mxu0 0
        %3238 = vmatpush.bf16.msra.mxu0 0
        %3239 = vmatpush.bf16.msra.mxu0 0
        %3240 = vmatpush.bf16.msra.mxu0 %v3231
        %3241 = vmatmul.bf16.gmra.mxu0 %v3183
        %v3242 = vpop.f32.mrf.mxu0
        %v3243 = vadd.f32 0.0, %v3242
        %v3244 = vpop.f32.mrf.mxu0
        %v3245 = vadd.f32 0.0, %v3244
        %3246 = vmatmul.bf16.gmra.mxu0 %v3186
        %v3247 = vpop.f32.mrf.mxu0
        %v3248 = vadd.f32 0.0, %v3247
        %v3249 = vpop.f32.mrf.mxu0
        %v3250 = vadd.f32 0.0, %v3249
        %3251 = vmatmul.bf16.gmra.mxu0 %v3189
        %v3252 = vpop.f32.mrf.mxu0
        %v3253 = vadd.f32 0.0, %v3252
        %v3254 = vpop.f32.mrf.mxu0
        %v3255 = vadd.f32 0.0, %v3254
        %3256 = vmatmul.bf16.gmra.mxu0 %v3192
        %v3257 = vpop.f32.mrf.mxu0
        %v3258 = vadd.f32 0.0, %v3257
        %v3259 = vpop.f32.mrf.mxu0
        %v3260 = vadd.f32 0.0, %v3259
        %3261 = vmatmul.bf16.gmra.mxu0 %v3195
        %v3262 = vpop.f32.mrf.mxu0
        %v3263 = vadd.f32 0.0, %v3262
        %v3264 = vpop.f32.mrf.mxu0
        %v3265 = vadd.f32 0.0, %v3264
        %3266 = vmatmul.bf16.gmra.mxu0 %v3198
        %v3267 = vpop.f32.mrf.mxu0
        %v3268 = vadd.f32 0.0, %v3267
        %v3269 = vpop.f32.mrf.mxu0
        %v3270 = vadd.f32 0.0, %v3269
        %3271 = vmatmul.bf16.gmra.mxu0 %v3201
        %v3272 = vpop.f32.mrf.mxu0
        %v3273 = vadd.f32 0.0, %v3272
        %v3274 = vpop.f32.mrf.mxu0
        %v3275 = vadd.f32 0.0, %v3274
        %3276 = vmatmul.bf16.gmra.mxu0 %v3204
        %v3277 = vpop.f32.mrf.mxu0
        %v3278 = vadd.f32 0.0, %v3277
        %v3279 = vpop.f32.mrf.mxu0
        %v3280 = vadd.f32 0.0, %v3279
        %3281 = vmatmul.bf16.gmra.mxu0 %v3207
        %v3282 = vpop.f32.mrf.mxu0
        %v3283 = vadd.f32 0.0, %v3282
        %v3284 = vpop.f32.mrf.mxu0
        %v3285 = vadd.f32 0.0, %v3284
        %3286 = vmatmul.bf16.gmra.mxu0 %v3210
        %v3287 = vpop.f32.mrf.mxu0
        %v3288 = vadd.f32 0.0, %v3287
        %v3289 = vpop.f32.mrf.mxu0
        %v3290 = vadd.f32 0.0, %v3289
        %3291 = vmatmul.bf16.gmra.mxu0 %v3213
        %v3292 = vpop.f32.mrf.mxu0
        %v3293 = vadd.f32 0.0, %v3292
        %v3294 = vpop.f32.mrf.mxu0
        %v3295 = vadd.f32 0.0, %v3294
        %3296 = vmatmul.bf16.gmra.mxu0 %v3216
        %v3297 = vpop.f32.mrf.mxu0
        %v3298 = vadd.f32 0.0, %v3297
        %v3299 = vpop.f32.mrf.mxu0
        %v3300 = vadd.f32 0.0, %v3299
        %3301 = vmatmul.bf16.gmra.mxu0 %v3219
        %v3302 = vpop.f32.mrf.mxu0
        %v3303 = vadd.f32 0.0, %v3302
        %v3304 = vpop.f32.mrf.mxu0
        %v3305 = vadd.f32 0.0, %v3304
        %3306 = vmatmul.bf16.gmra.mxu0 %v3222
        %v3307 = vpop.f32.mrf.mxu0
        %v3308 = vadd.f32 0.0, %v3307
        %v3309 = vpop.f32.mrf.mxu0
        %v3310 = vadd.f32 0.0, %v3309
        %3311 = vmatmul.bf16.gmra.mxu0 %v3225
        %v3312 = vpop.f32.mrf.mxu0
        %v3313 = vadd.f32 0.0, %v3312
        %v3314 = vpop.f32.mrf.mxu0
        %v3315 = vadd.f32 0.0, %v3314
        %3316 = vmatmul.bf16.gmra.mxu0 %v3228
        %v3317 = vpop.f32.mrf.mxu0
        %v3318 = vadd.f32 0.0, %v3317
        %v3319 = vpop.f32.mrf.mxu0
        %v3320 = vadd.f32 0.0, %v3319
        %3321 = vdwg.mxu0
        %v3322 = vld [vmem:[%s246] sm:$0xff]
        %v3323 = vld [vmem:[%s246 + $0x8] sm:$0xff]
        %v3324 = vld [vmem:[%s246 + $0x10] sm:$0xff]
        %v3325 = vld [vmem:[%s246 + $0x18] sm:$0xff]
        %v3326 = vld [vmem:[%s246 + $0x20] sm:$0xff]
        %v3327 = vld [vmem:[%s246 + $0x28] sm:$0xff]
        %v3328 = vld [vmem:[%s246 + $0x30] sm:$0xff]
        %v3329 = vld [vmem:[%s246 + $0x38] sm:$0xff]
        %v3330 = vld [vmem:[%s246 + $0x40] sm:$0xff]
        %v3331 = vld [vmem:[%s246 + $0x48] sm:$0xff]
        %v3332 = vld [vmem:[%s246 + $0x50] sm:$0xff]
        %v3333 = vld [vmem:[%s246 + $0x58] sm:$0xff]
        %v3334 = vld [vmem:[%s246 + $0x60] sm:$0xff]
        %v3335 = vld [vmem:[%s246 + $0x68] sm:$0xff]
        %v3336 = vld [vmem:[%s246 + $0x70] sm:$0xff]
        %v3337 = vld [vmem:[%s246 + $0x78] sm:$0xff]
        %v3338 = vld [vmem:[%s246 + $0x80] sm:$0xff]
        %v3339 = vld [vmem:[%s246 + $0x88] sm:$0xff]
        %v3340 = vld [vmem:[%s246 + $0x90] sm:$0xff]
        %v3341 = vld [vmem:[%s246 + $0x98] sm:$0xff]
        %v3342 = vld [vmem:[%s246 + $0xa0] sm:$0xff]
        %v3343 = vld [vmem:[%s246 + $0xa8] sm:$0xff]
        %v3344 = vld [vmem:[%s246 + $0xb0] sm:$0xff]
        %v3345 = vld [vmem:[%s246 + $0xb8] sm:$0xff]
        %v3346 = vld [vmem:[%s246 + $0xc0] sm:$0xff]
        %v3347 = vld [vmem:[%s246 + $0xc8] sm:$0xff]
        %v3348 = vld [vmem:[%s246 + $0xd0] sm:$0xff]
        %v3349 = vld [vmem:[%s246 + $0xd8] sm:$0xff]
        %v3350 = vld [vmem:[%s246 + $0xe0] sm:$0xff]
        %v3351 = vld [vmem:[%s246 + $0xe8] sm:$0xff]
        %v3352 = vld [vmem:[%s246 + $0xf0] sm:$0xff]
        %v3353 = vld [vmem:[%s246 + $0xf8] sm:$0xff]
        %v3354 = vadd.f32 %v3322, %v3243
        %v3355 = vadd.f32 %v3323, %v3245
        %v3356 = vadd.f32 %v3324, %v3248
        %v3357 = vadd.f32 %v3325, %v3250
        %v3358 = vadd.f32 %v3326, %v3253
        %v3359 = vadd.f32 %v3327, %v3255
        %v3360 = vadd.f32 %v3328, %v3258
        %v3361 = vadd.f32 %v3329, %v3260
        %v3362 = vadd.f32 %v3330, %v3263
        %v3363 = vadd.f32 %v3331, %v3265
        %v3364 = vadd.f32 %v3332, %v3268
        %v3365 = vadd.f32 %v3333, %v3270
        %v3366 = vadd.f32 %v3334, %v3273
        %v3367 = vadd.f32 %v3335, %v3275
        %v3368 = vadd.f32 %v3336, %v3278
        %v3369 = vadd.f32 %v3337, %v3280
        %v3370 = vadd.f32 %v3338, %v3283
        %v3371 = vadd.f32 %v3339, %v3285
        %v3372 = vadd.f32 %v3340, %v3288
        %v3373 = vadd.f32 %v3341, %v3290
        %v3374 = vadd.f32 %v3342, %v3293
        %v3375 = vadd.f32 %v3343, %v3295
        %v3376 = vadd.f32 %v3344, %v3298
        %v3377 = vadd.f32 %v3345, %v3300
        %v3378 = vadd.f32 %v3346, %v3303
        %v3379 = vadd.f32 %v3347, %v3305
        %v3380 = vadd.f32 %v3348, %v3308
        %v3381 = vadd.f32 %v3349, %v3310
        %v3382 = vadd.f32 %v3350, %v3313
        %v3383 = vadd.f32 %v3351, %v3315
        %v3384 = vadd.f32 %v3352, %v3318
        %v3385 = vadd.f32 %v3353, %v3320
        %3386 = vst [vmem:[%s246] sm:$0xff] %v3354
        %3387 = vst [vmem:[%s246 + $0x8] sm:$0xff] %v3355
        %3388 = vst [vmem:[%s246 + $0x10] sm:$0xff] %v3356
        %3389 = vst [vmem:[%s246 + $0x18] sm:$0xff] %v3357
        %3390 = vst [vmem:[%s246 + $0x20] sm:$0xff] %v3358
        %3391 = vst [vmem:[%s246 + $0x28] sm:$0xff] %v3359
        %3392 = vst [vmem:[%s246 + $0x30] sm:$0xff] %v3360
        %3393 = vst [vmem:[%s246 + $0x38] sm:$0xff] %v3361
        %3394 = vst [vmem:[%s246 + $0x40] sm:$0xff] %v3362
        %3395 = vst [vmem:[%s246 + $0x48] sm:$0xff] %v3363
        %3396 = vst [vmem:[%s246 + $0x50] sm:$0xff] %v3364
        %3397 = vst [vmem:[%s246 + $0x58] sm:$0xff] %v3365
        %3398 = vst [vmem:[%s246 + $0x60] sm:$0xff] %v3366
        %3399 = vst [vmem:[%s246 + $0x68] sm:$0xff] %v3367
        %3400 = vst [vmem:[%s246 + $0x70] sm:$0xff] %v3368
        %3401 = vst [vmem:[%s246 + $0x78] sm:$0xff] %v3369
        %3402 = vst [vmem:[%s246 + $0x80] sm:$0xff] %v3370
        %3403 = vst [vmem:[%s246 + $0x88] sm:$0xff] %v3371
        %3404 = vst [vmem:[%s246 + $0x90] sm:$0xff] %v3372
        %3405 = vst [vmem:[%s246 + $0x98] sm:$0xff] %v3373
        %3406 = vst [vmem:[%s246 + $0xa0] sm:$0xff] %v3374
        %3407 = vst [vmem:[%s246 + $0xa8] sm:$0xff] %v3375
        %3408 = vst [vmem:[%s246 + $0xb0] sm:$0xff] %v3376
        %3409 = vst [vmem:[%s246 + $0xb8] sm:$0xff] %v3377
        %3410 = vst [vmem:[%s246 + $0xc0] sm:$0xff] %v3378
        %3411 = vst [vmem:[%s246 + $0xc8] sm:$0xff] %v3379
        %3412 = vst [vmem:[%s246 + $0xd0] sm:$0xff] %v3380
        %3413 = vst [vmem:[%s246 + $0xd8] sm:$0xff] %v3381
        %3414 = vst [vmem:[%s246 + $0xe0] sm:$0xff] %v3382
        %3415 = vst [vmem:[%s246 + $0xe8] sm:$0xff] %v3383
        %3416 = vst [vmem:[%s246 + $0xf0] sm:$0xff] %v3384
        %3417 = vst [vmem:[%s246 + $0xf8] sm:$0xff] %v3385
        %v3418 = vld [vmem:[%s246] sm:$0xff]
        %v3419 = vld [vmem:[%s246 + $0x8] sm:$0xff]
        %v3420 = vld [vmem:[%s246 + $0x10] sm:$0xff]
        %v3421 = vld [vmem:[%s246 + $0x18] sm:$0xff]
        %v3422 = vld [vmem:[%s246 + $0x20] sm:$0xff]
        %v3423 = vld [vmem:[%s246 + $0x28] sm:$0xff]
        %v3424 = vld [vmem:[%s246 + $0x30] sm:$0xff]
        %v3425 = vld [vmem:[%s246 + $0x38] sm:$0xff]
        %v3426 = vld [vmem:[%s246 + $0x40] sm:$0xff]
        %v3427 = vld [vmem:[%s246 + $0x48] sm:$0xff]
        %v3428 = vld [vmem:[%s246 + $0x50] sm:$0xff]
        %v3429 = vld [vmem:[%s246 + $0x58] sm:$0xff]
        %v3430 = vld [vmem:[%s246 + $0x60] sm:$0xff]
        %v3431 = vld [vmem:[%s246 + $0x68] sm:$0xff]
        %v3432 = vld [vmem:[%s246 + $0x70] sm:$0xff]
        %v3433 = vld [vmem:[%s246 + $0x78] sm:$0xff]
        %v3434 = vld [vmem:[%s246 + $0x80] sm:$0xff]
        %v3435 = vld [vmem:[%s246 + $0x88] sm:$0xff]
        %v3436 = vld [vmem:[%s246 + $0x90] sm:$0xff]
        %v3437 = vld [vmem:[%s246 + $0x98] sm:$0xff]
        %v3438 = vld [vmem:[%s246 + $0xa0] sm:$0xff]
        %v3439 = vld [vmem:[%s246 + $0xa8] sm:$0xff]
        %v3440 = vld [vmem:[%s246 + $0xb0] sm:$0xff]
        %v3441 = vld [vmem:[%s246 + $0xb8] sm:$0xff]
        %v3442 = vld [vmem:[%s246 + $0xc0] sm:$0xff]
        %v3443 = vld [vmem:[%s246 + $0xc8] sm:$0xff]
        %v3444 = vld [vmem:[%s246 + $0xd0] sm:$0xff]
        %v3445 = vld [vmem:[%s246 + $0xd8] sm:$0xff]
        %v3446 = vld [vmem:[%s246 + $0xe0] sm:$0xff]
        %v3447 = vld [vmem:[%s246 + $0xe8] sm:$0xff]
        %v3448 = vld [vmem:[%s246 + $0xf0] sm:$0xff]
        %v3449 = vld [vmem:[%s246 + $0xf8] sm:$0xff]
        %v3450 = vld [vmem:[%s3] sm:$0x1]
        %v3452 = vperm.slane %v3450, 0
        %v3454 = vmul.f32 %v3418, %v3452
        %v3455 = vmul.f32 %v3419, %v3452
        %v3456 = vmul.f32 %v3420, %v3452
        %v3457 = vmul.f32 %v3421, %v3452
        %v3458 = vmul.f32 %v3422, %v3452
        %v3459 = vmul.f32 %v3423, %v3452
        %v3460 = vmul.f32 %v3424, %v3452
        %v3461 = vmul.f32 %v3425, %v3452
        %v3462 = vmul.f32 %v3426, %v3452
        %v3463 = vmul.f32 %v3427, %v3452
        %v3464 = vmul.f32 %v3428, %v3452
        %v3465 = vmul.f32 %v3429, %v3452
        %v3466 = vmul.f32 %v3430, %v3452
        %v3467 = vmul.f32 %v3431, %v3452
        %v3468 = vmul.f32 %v3432, %v3452
        %v3469 = vmul.f32 %v3433, %v3452
        %v3470 = vmul.f32 %v3434, %v3452
        %v3471 = vmul.f32 %v3435, %v3452
        %v3472 = vmul.f32 %v3436, %v3452
        %v3473 = vmul.f32 %v3437, %v3452
        %v3474 = vmul.f32 %v3438, %v3452
        %v3475 = vmul.f32 %v3439, %v3452
        %v3476 = vmul.f32 %v3440, %v3452
        %v3477 = vmul.f32 %v3441, %v3452
        %v3478 = vmul.f32 %v3442, %v3452
        %v3479 = vmul.f32 %v3443, %v3452
        %v3480 = vmul.f32 %v3444, %v3452
        %v3481 = vmul.f32 %v3445, %v3452
        %v3482 = vmul.f32 %v3446, %v3452
        %v3483 = vmul.f32 %v3447, %v3452
        %v3484 = vmul.f32 %v3448, %v3452
        %v3485 = vmul.f32 %v3449, %v3452
        %3486 = vst [vmem:[%s246] sm:$0xff] %v3454
        %3487 = vst [vmem:[%s246 + $0x8] sm:$0xff] %v3455
        %3488 = vst [vmem:[%s246 + $0x10] sm:$0xff] %v3456
        %3489 = vst [vmem:[%s246 + $0x18] sm:$0xff] %v3457
        %3490 = vst [vmem:[%s246 + $0x20] sm:$0xff] %v3458
        %3491 = vst [vmem:[%s246 + $0x28] sm:$0xff] %v3459
        %3492 = vst [vmem:[%s246 + $0x30] sm:$0xff] %v3460
        %3493 = vst [vmem:[%s246 + $0x38] sm:$0xff] %v3461
        %3494 = vst [vmem:[%s246 + $0x40] sm:$0xff] %v3462
        %3495 = vst [vmem:[%s246 + $0x48] sm:$0xff] %v3463
        %3496 = vst [vmem:[%s246 + $0x50] sm:$0xff] %v3464
        %3497 = vst [vmem:[%s246 + $0x58] sm:$0xff] %v3465
        %3498 = vst [vmem:[%s246 + $0x60] sm:$0xff] %v3466
        %3499 = vst [vmem:[%s246 + $0x68] sm:$0xff] %v3467
        %3500 = vst [vmem:[%s246 + $0x70] sm:$0xff] %v3468
        %3501 = vst [vmem:[%s246 + $0x78] sm:$0xff] %v3469
        %3502 = vst [vmem:[%s246 + $0x80] sm:$0xff] %v3470
        %3503 = vst [vmem:[%s246 + $0x88] sm:$0xff] %v3471
        %3504 = vst [vmem:[%s246 + $0x90] sm:$0xff] %v3472
        %3505 = vst [vmem:[%s246 + $0x98] sm:$0xff] %v3473
        %3506 = vst [vmem:[%s246 + $0xa0] sm:$0xff] %v3474
        %3507 = vst [vmem:[%s246 + $0xa8] sm:$0xff] %v3475
        %3508 = vst [vmem:[%s246 + $0xb0] sm:$0xff] %v3476
        %3509 = vst [vmem:[%s246 + $0xb8] sm:$0xff] %v3477
        %3510 = vst [vmem:[%s246 + $0xc0] sm:$0xff] %v3478
        %3511 = vst [vmem:[%s246 + $0xc8] sm:$0xff] %v3479
        %3512 = vst [vmem:[%s246 + $0xd0] sm:$0xff] %v3480
        %3513 = vst [vmem:[%s246 + $0xd8] sm:$0xff] %v3481
        %3514 = vst [vmem:[%s246 + $0xe0] sm:$0xff] %v3482
        %3515 = vst [vmem:[%s246 + $0xe8] sm:$0xff] %v3483
        %3516 = vst [vmem:[%s246 + $0xf0] sm:$0xff] %v3484
        %3517 = vst [vmem:[%s246 + $0xf8] sm:$0xff] %v3485
        %v3518 = vld [vmem:[%s246] sm:$0xff]
        %v3519 = vld [vmem:[%s246 + $0x8] sm:$0xff]
        %v3520 = vld [vmem:[%s246 + $0x10] sm:$0xff]
        %v3521 = vld [vmem:[%s246 + $0x18] sm:$0xff]
        %v3522 = vld [vmem:[%s246 + $0x20] sm:$0xff]
        %v3523 = vld [vmem:[%s246 + $0x28] sm:$0xff]
        %v3524 = vld [vmem:[%s246 + $0x30] sm:$0xff]
        %v3525 = vld [vmem:[%s246 + $0x38] sm:$0xff]
        %v3526 = vld [vmem:[%s246 + $0x40] sm:$0xff]
        %v3527 = vld [vmem:[%s246 + $0x48] sm:$0xff]
        %v3528 = vld [vmem:[%s246 + $0x50] sm:$0xff]
        %v3529 = vld [vmem:[%s246 + $0x58] sm:$0xff]
        %v3530 = vld [vmem:[%s246 + $0x60] sm:$0xff]
        %v3531 = vld [vmem:[%s246 + $0x68] sm:$0xff]
        %v3532 = vld [vmem:[%s246 + $0x70] sm:$0xff]
        %v3533 = vld [vmem:[%s246 + $0x78] sm:$0xff]
        %v3534 = vld [vmem:[%s246 + $0x80] sm:$0xff]
        %v3535 = vld [vmem:[%s246 + $0x88] sm:$0xff]
        %v3536 = vld [vmem:[%s246 + $0x90] sm:$0xff]
        %v3537 = vld [vmem:[%s246 + $0x98] sm:$0xff]
        %v3538 = vld [vmem:[%s246 + $0xa0] sm:$0xff]
        %v3539 = vld [vmem:[%s246 + $0xa8] sm:$0xff]
        %v3540 = vld [vmem:[%s246 + $0xb0] sm:$0xff]
        %v3541 = vld [vmem:[%s246 + $0xb8] sm:$0xff]
        %v3542 = vld [vmem:[%s246 + $0xc0] sm:$0xff]
        %v3543 = vld [vmem:[%s246 + $0xc8] sm:$0xff]
        %v3544 = vld [vmem:[%s246 + $0xd0] sm:$0xff]
        %v3545 = vld [vmem:[%s246 + $0xd8] sm:$0xff]
        %v3546 = vld [vmem:[%s246 + $0xe0] sm:$0xff]
        %v3547 = vld [vmem:[%s246 + $0xe8] sm:$0xff]
        %v3548 = vld [vmem:[%s246 + $0xf0] sm:$0xff]
        %v3549 = vld [vmem:[%s246 + $0xf8] sm:$0xff]
        %3550 = vadd.xlane.f32.xlu0 %v3518
        %v3551 = vpop.xlane.xlu0 %3550
        %3552 = vadd.xlane.f32.xlu0 %v3519
        %v3553 = vpop.xlane.xlu0 %3552
        %3554 = vadd.xlane.f32.xlu0 %v3520
        %v3555 = vpop.xlane.xlu0 %3554
        %3556 = vadd.xlane.f32.xlu0 %v3521
        %v3557 = vpop.xlane.xlu0 %3556
        %3558 = vadd.xlane.f32.xlu0 %v3522
        %v3559 = vpop.xlane.xlu0 %3558
        %3560 = vadd.xlane.f32.xlu0 %v3523
        %v3561 = vpop.xlane.xlu0 %3560
        %3562 = vadd.xlane.f32.xlu0 %v3524
        %v3563 = vpop.xlane.xlu0 %3562
        %3564 = vadd.xlane.f32.xlu0 %v3525
        %v3565 = vpop.xlane.xlu0 %3564
        %3566 = vadd.xlane.f32.xlu0 %v3526
        %v3567 = vpop.xlane.xlu0 %3566
        %3568 = vadd.xlane.f32.xlu0 %v3527
        %v3569 = vpop.xlane.xlu0 %3568
        %3570 = vadd.xlane.f32.xlu0 %v3528
        %v3571 = vpop.xlane.xlu0 %3570
        %3572 = vadd.xlane.f32.xlu0 %v3529
        %v3573 = vpop.xlane.xlu0 %3572
        %3574 = vadd.xlane.f32.xlu0 %v3530
        %v3575 = vpop.xlane.xlu0 %3574
        %3576 = vadd.xlane.f32.xlu0 %v3531
        %v3577 = vpop.xlane.xlu0 %3576
        %3578 = vadd.xlane.f32.xlu0 %v3532
        %v3579 = vpop.xlane.xlu0 %3578
        %3580 = vadd.xlane.f32.xlu0 %v3533
        %v3581 = vpop.xlane.xlu0 %3580
        %3582 = vadd.xlane.f32.xlu0 %v3534
        %v3583 = vpop.xlane.xlu0 %3582
        %3584 = vadd.xlane.f32.xlu0 %v3535
        %v3585 = vpop.xlane.xlu0 %3584
        %3586 = vadd.xlane.f32.xlu0 %v3536
        %v3587 = vpop.xlane.xlu0 %3586
        %3588 = vadd.xlane.f32.xlu0 %v3537
        %v3589 = vpop.xlane.xlu0 %3588
        %3590 = vadd.xlane.f32.xlu0 %v3538
        %v3591 = vpop.xlane.xlu0 %3590
        %3592 = vadd.xlane.f32.xlu0 %v3539
        %v3593 = vpop.xlane.xlu0 %3592
        %3594 = vadd.xlane.f32.xlu0 %v3540
        %v3595 = vpop.xlane.xlu0 %3594
        %3596 = vadd.xlane.f32.xlu0 %v3541
        %v3597 = vpop.xlane.xlu0 %3596
        %3598 = vadd.xlane.f32.xlu0 %v3542
        %v3599 = vpop.xlane.xlu0 %3598
        %3600 = vadd.xlane.f32.xlu0 %v3543
        %v3601 = vpop.xlane.xlu0 %3600
        %3602 = vadd.xlane.f32.xlu0 %v3544
        %v3603 = vpop.xlane.xlu0 %3602
        %3604 = vadd.xlane.f32.xlu0 %v3545
        %v3605 = vpop.xlane.xlu0 %3604
        %3606 = vadd.xlane.f32.xlu0 %v3546
        %v3607 = vpop.xlane.xlu0 %3606
        %3608 = vadd.xlane.f32.xlu0 %v3547
        %v3609 = vpop.xlane.xlu0 %3608
        %3610 = vadd.xlane.f32.xlu0 %v3548
        %v3611 = vpop.xlane.xlu0 %3610
        %3612 = vadd.xlane.f32.xlu0 %v3549
        %v3613 = vpop.xlane.xlu0 %3612
        %v3614 = vmul.f32 %v3518, %v3518
        %v3615 = vmul.f32 %v3519, %v3519
        %v3616 = vmul.f32 %v3520, %v3520
        %v3617 = vmul.f32 %v3521, %v3521
        %v3618 = vmul.f32 %v3522, %v3522
        %v3619 = vmul.f32 %v3523, %v3523
        %v3620 = vmul.f32 %v3524, %v3524
        %v3621 = vmul.f32 %v3525, %v3525
        %v3622 = vmul.f32 %v3526, %v3526
        %v3623 = vmul.f32 %v3527, %v3527
        %v3624 = vmul.f32 %v3528, %v3528
        %v3625 = vmul.f32 %v3529, %v3529
        %v3626 = vmul.f32 %v3530, %v3530
        %v3627 = vmul.f32 %v3531, %v3531
        %v3628 = vmul.f32 %v3532, %v3532
        %v3629 = vmul.f32 %v3533, %v3533
        %v3630 = vmul.f32 %v3534, %v3534
        %v3631 = vmul.f32 %v3535, %v3535
        %v3632 = vmul.f32 %v3536, %v3536
        %v3633 = vmul.f32 %v3537, %v3537
        %v3634 = vmul.f32 %v3538, %v3538
        %v3635 = vmul.f32 %v3539, %v3539
        %v3636 = vmul.f32 %v3540, %v3540
        %v3637 = vmul.f32 %v3541, %v3541
        %v3638 = vmul.f32 %v3542, %v3542
        %v3639 = vmul.f32 %v3543, %v3543
        %v3640 = vmul.f32 %v3544, %v3544
        %v3641 = vmul.f32 %v3545, %v3545
        %v3642 = vmul.f32 %v3546, %v3546
        %v3643 = vmul.f32 %v3547, %v3547
        %v3644 = vmul.f32 %v3548, %v3548
        %v3645 = vmul.f32 %v3549, %v3549
        %3646 = vadd.xlane.f32.xlu0 %v3614
        %v3647 = vpop.xlane.xlu0 %3646
        %3648 = vadd.xlane.f32.xlu0 %v3615
        %v3649 = vpop.xlane.xlu0 %3648
        %3650 = vadd.xlane.f32.xlu0 %v3616
        %v3651 = vpop.xlane.xlu0 %3650
        %3652 = vadd.xlane.f32.xlu0 %v3617
        %v3653 = vpop.xlane.xlu0 %3652
        %3654 = vadd.xlane.f32.xlu0 %v3618
        %v3655 = vpop.xlane.xlu0 %3654
        %3656 = vadd.xlane.f32.xlu0 %v3619
        %v3657 = vpop.xlane.xlu0 %3656
        %3658 = vadd.xlane.f32.xlu0 %v3620
        %v3659 = vpop.xlane.xlu0 %3658
        %3660 = vadd.xlane.f32.xlu0 %v3621
        %v3661 = vpop.xlane.xlu0 %3660
        %3662 = vadd.xlane.f32.xlu0 %v3622
        %v3663 = vpop.xlane.xlu0 %3662
        %3664 = vadd.xlane.f32.xlu0 %v3623
        %v3665 = vpop.xlane.xlu0 %3664
        %3666 = vadd.xlane.f32.xlu0 %v3624
        %v3667 = vpop.xlane.xlu0 %3666
        %3668 = vadd.xlane.f32.xlu0 %v3625
        %v3669 = vpop.xlane.xlu0 %3668
        %3670 = vadd.xlane.f32.xlu0 %v3626
        %v3671 = vpop.xlane.xlu0 %3670
        %3672 = vadd.xlane.f32.xlu0 %v3627
        %v3673 = vpop.xlane.xlu0 %3672
        %3674 = vadd.xlane.f32.xlu0 %v3628
        %v3675 = vpop.xlane.xlu0 %3674
        %3676 = vadd.xlane.f32.xlu0 %v3629
        %v3677 = vpop.xlane.xlu0 %3676
        %3678 = vadd.xlane.f32.xlu0 %v3630
        %v3679 = vpop.xlane.xlu0 %3678
        %3680 = vadd.xlane.f32.xlu0 %v3631
        %v3681 = vpop.xlane.xlu0 %3680
        %3682 = vadd.xlane.f32.xlu0 %v3632
        %v3683 = vpop.xlane.xlu0 %3682
        %3684 = vadd.xlane.f32.xlu0 %v3633
        %v3685 = vpop.xlane.xlu0 %3684
        %3686 = vadd.xlane.f32.xlu0 %v3634
        %v3687 = vpop.xlane.xlu0 %3686
        %3688 = vadd.xlane.f32.xlu0 %v3635
        %v3689 = vpop.xlane.xlu0 %3688
        %3690 = vadd.xlane.f32.xlu0 %v3636
        %v3691 = vpop.xlane.xlu0 %3690
        %3692 = vadd.xlane.f32.xlu0 %v3637
        %v3693 = vpop.xlane.xlu0 %3692
        %3694 = vadd.xlane.f32.xlu0 %v3638
        %v3695 = vpop.xlane.xlu0 %3694
        %3696 = vadd.xlane.f32.xlu0 %v3639
        %v3697 = vpop.xlane.xlu0 %3696
        %3698 = vadd.xlane.f32.xlu0 %v3640
        %v3699 = vpop.xlane.xlu0 %3698
        %3700 = vadd.xlane.f32.xlu0 %v3641
        %v3701 = vpop.xlane.xlu0 %3700
        %3702 = vadd.xlane.f32.xlu0 %v3642
        %v3703 = vpop.xlane.xlu0 %3702
        %3704 = vadd.xlane.f32.xlu0 %v3643
        %v3705 = vpop.xlane.xlu0 %3704
        %3706 = vadd.xlane.f32.xlu0 %v3644
        %v3707 = vpop.xlane.xlu0 %3706
        %3708 = vadd.xlane.f32.xlu0 %v3645
        %v3709 = vpop.xlane.xlu0 %3708
        %v3710 = vmul.f32 %v3551, 0.015625
        %v3711 = vmul.f32 %v3553, 0.015625
        %v3712 = vmul.f32 %v3555, 0.015625
        %v3713 = vmul.f32 %v3557, 0.015625
        %v3714 = vmul.f32 %v3559, 0.015625
        %v3715 = vmul.f32 %v3561, 0.015625
        %v3716 = vmul.f32 %v3563, 0.015625
        %v3717 = vmul.f32 %v3565, 0.015625
        %v3718 = vmul.f32 %v3567, 0.015625
        %v3719 = vmul.f32 %v3569, 0.015625
        %v3720 = vmul.f32 %v3571, 0.015625
        %v3721 = vmul.f32 %v3573, 0.015625
        %v3722 = vmul.f32 %v3575, 0.015625
        %v3723 = vmul.f32 %v3577, 0.015625
        %v3724 = vmul.f32 %v3579, 0.015625
        %v3725 = vmul.f32 %v3581, 0.015625
        %v3726 = vmul.f32 %v3583, 0.015625
        %v3727 = vmul.f32 %v3585, 0.015625
        %v3728 = vmul.f32 %v3587, 0.015625
        %v3729 = vmul.f32 %v3589, 0.015625
        %v3730 = vmul.f32 %v3591, 0.015625
        %v3731 = vmul.f32 %v3593, 0.015625
        %v3732 = vmul.f32 %v3595, 0.015625
        %v3733 = vmul.f32 %v3597, 0.015625
        %v3734 = vmul.f32 %v3599, 0.015625
        %v3735 = vmul.f32 %v3601, 0.015625
        %v3736 = vmul.f32 %v3603, 0.015625
        %v3737 = vmul.f32 %v3605, 0.015625
        %v3738 = vmul.f32 %v3607, 0.015625
        %v3739 = vmul.f32 %v3609, 0.015625
        %v3740 = vmul.f32 %v3611, 0.015625
        %v3741 = vmul.f32 %v3613, 0.015625
        %v3742 = vmul.f32 %v3647, 0.015625
        %v3743 = vmul.f32 %v3649, 0.015625
        %v3744 = vmul.f32 %v3651, 0.015625
        %v3745 = vmul.f32 %v3653, 0.015625
        %v3746 = vmul.f32 %v3655, 0.015625
        %v3747 = vmul.f32 %v3657, 0.015625
        %v3748 = vmul.f32 %v3659, 0.015625
        %v3749 = vmul.f32 %v3661, 0.015625
        %v3750 = vmul.f32 %v3663, 0.015625
        %v3751 = vmul.f32 %v3665, 0.015625
        %v3752 = vmul.f32 %v3667, 0.015625
        %v3753 = vmul.f32 %v3669, 0.015625
        %v3754 = vmul.f32 %v3671, 0.015625
        %v3755 = vmul.f32 %v3673, 0.015625
        %v3756 = vmul.f32 %v3675, 0.015625
        %v3757 = vmul.f32 %v3677, 0.015625
        %v3758 = vmul.f32 %v3679, 0.015625
        %v3759 = vmul.f32 %v3681, 0.015625
        %v3760 = vmul.f32 %v3683, 0.015625
        %v3761 = vmul.f32 %v3685, 0.015625
        %v3762 = vmul.f32 %v3687, 0.015625
        %v3763 = vmul.f32 %v3689, 0.015625
        %v3764 = vmul.f32 %v3691, 0.015625
        %v3765 = vmul.f32 %v3693, 0.015625
        %v3766 = vmul.f32 %v3695, 0.015625
        %v3767 = vmul.f32 %v3697, 0.015625
        %v3768 = vmul.f32 %v3699, 0.015625
        %v3769 = vmul.f32 %v3701, 0.015625
        %v3770 = vmul.f32 %v3703, 0.015625
        %v3771 = vmul.f32 %v3705, 0.015625
        %v3772 = vmul.f32 %v3707, 0.015625
        %v3773 = vmul.f32 %v3709, 0.015625
        %v3774 = vmul.f32 %v3710, %v3710
        %v3775 = vmul.f32 %v3711, %v3711
        %v3776 = vmul.f32 %v3712, %v3712
        %v3777 = vmul.f32 %v3713, %v3713
        %v3778 = vmul.f32 %v3714, %v3714
        %v3779 = vmul.f32 %v3715, %v3715
        %v3780 = vmul.f32 %v3716, %v3716
        %v3781 = vmul.f32 %v3717, %v3717
        %v3782 = vmul.f32 %v3718, %v3718
        %v3783 = vmul.f32 %v3719, %v3719
        %v3784 = vmul.f32 %v3720, %v3720
        %v3785 = vmul.f32 %v3721, %v3721
        %v3786 = vmul.f32 %v3722, %v3722
        %v3787 = vmul.f32 %v3723, %v3723
        %v3788 = vmul.f32 %v3724, %v3724
        %v3789 = vmul.f32 %v3725, %v3725
        %v3790 = vmul.f32 %v3726, %v3726
        %v3791 = vmul.f32 %v3727, %v3727
        %v3792 = vmul.f32 %v3728, %v3728
        %v3793 = vmul.f32 %v3729, %v3729
        %v3794 = vmul.f32 %v3730, %v3730
        %v3795 = vmul.f32 %v3731, %v3731
        %v3796 = vmul.f32 %v3732, %v3732
        %v3797 = vmul.f32 %v3733, %v3733
        %v3798 = vmul.f32 %v3734, %v3734
        %v3799 = vmul.f32 %v3735, %v3735
        %v3800 = vmul.f32 %v3736, %v3736
        %v3801 = vmul.f32 %v3737, %v3737
        %v3802 = vmul.f32 %v3738, %v3738
        %v3803 = vmul.f32 %v3739, %v3739
        %v3804 = vmul.f32 %v3740, %v3740
        %v3805 = vmul.f32 %v3741, %v3741
        %v3806 = vsub.f32 %v3742, %v3774
        %v3807 = vsub.f32 %v3743, %v3775
        %v3808 = vsub.f32 %v3744, %v3776
        %v3809 = vsub.f32 %v3745, %v3777
        %v3810 = vsub.f32 %v3746, %v3778
        %v3811 = vsub.f32 %v3747, %v3779
        %v3812 = vsub.f32 %v3748, %v3780
        %v3813 = vsub.f32 %v3749, %v3781
        %v3814 = vsub.f32 %v3750, %v3782
        %v3815 = vsub.f32 %v3751, %v3783
        %v3816 = vsub.f32 %v3752, %v3784
        %v3817 = vsub.f32 %v3753, %v3785
        %v3818 = vsub.f32 %v3754, %v3786
        %v3819 = vsub.f32 %v3755, %v3787
        %v3820 = vsub.f32 %v3756, %v3788
        %v3821 = vsub.f32 %v3757, %v3789
        %v3822 = vsub.f32 %v3758, %v3790
        %v3823 = vsub.f32 %v3759, %v3791
        %v3824 = vsub.f32 %v3760, %v3792
        %v3825 = vsub.f32 %v3761, %v3793
        %v3826 = vsub.f32 %v3762, %v3794
        %v3827 = vsub.f32 %v3763, %v3795
        %v3828 = vsub.f32 %v3764, %v3796
        %v3829 = vsub.f32 %v3765, %v3797
        %v3830 = vsub.f32 %v3766, %v3798
        %v3831 = vsub.f32 %v3767, %v3799
        %v3832 = vsub.f32 %v3768, %v3800
        %v3833 = vsub.f32 %v3769, %v3801
        %v3834 = vsub.f32 %v3770, %v3802
        %v3835 = vsub.f32 %v3771, %v3803
        %v3836 = vsub.f32 %v3772, %v3804
        %v3837 = vsub.f32 %v3773, %v3805
        %v3838 = vmax.f32 %v3806, 0.0
        %v3839 = vmax.f32 %v3807, 0.0
        %v3840 = vmax.f32 %v3808, 0.0
        %v3841 = vmax.f32 %v3809, 0.0
        %v3842 = vmax.f32 %v3810, 0.0
        %v3843 = vmax.f32 %v3811, 0.0
        %v3844 = vmax.f32 %v3812, 0.0
        %v3845 = vmax.f32 %v3813, 0.0
        %v3846 = vmax.f32 %v3814, 0.0
        %v3847 = vmax.f32 %v3815, 0.0
        %v3848 = vmax.f32 %v3816, 0.0
        %v3849 = vmax.f32 %v3817, 0.0
        %v3850 = vmax.f32 %v3818, 0.0
        %v3851 = vmax.f32 %v3819, 0.0
        %v3852 = vmax.f32 %v3820, 0.0
        %v3853 = vmax.f32 %v3821, 0.0
        %v3854 = vmax.f32 %v3822, 0.0
        %v3855 = vmax.f32 %v3823, 0.0
        %v3856 = vmax.f32 %v3824, 0.0
        %v3857 = vmax.f32 %v3825, 0.0
        %v3858 = vmax.f32 %v3826, 0.0
        %v3859 = vmax.f32 %v3827, 0.0
        %v3860 = vmax.f32 %v3828, 0.0
        %v3861 = vmax.f32 %v3829, 0.0
        %v3862 = vmax.f32 %v3830, 0.0
        %v3863 = vmax.f32 %v3831, 0.0
        %v3864 = vmax.f32 %v3832, 0.0
        %v3865 = vmax.f32 %v3833, 0.0
        %v3866 = vmax.f32 %v3834, 0.0
        %v3867 = vmax.f32 %v3835, 0.0
        %v3868 = vmax.f32 %v3836, 0.0
        %v3869 = vmax.f32 %v3837, 0.0
        %v3870 = vld [vmem:[%s266] sm:$0xff]
        %v3871 = vld [vmem:[%s266 + $0x8] sm:$0xff]
        %v3872 = vld [vmem:[%s266 + $0x10] sm:$0xff]
        %v3873 = vld [vmem:[%s266 + $0x18] sm:$0xff]
        %v3874 = vld [vmem:[%s266 + $0x20] sm:$0xff]
        %v3875 = vld [vmem:[%s266 + $0x28] sm:$0xff]
        %v3876 = vld [vmem:[%s266 + $0x30] sm:$0xff]
        %v3877 = vld [vmem:[%s266 + $0x38] sm:$0xff]
        %v3878 = vld [vmem:[%s266 + $0x40] sm:$0xff]
        %v3879 = vld [vmem:[%s266 + $0x48] sm:$0xff]
        %v3880 = vld [vmem:[%s266 + $0x50] sm:$0xff]
        %v3881 = vld [vmem:[%s266 + $0x58] sm:$0xff]
        %v3882 = vld [vmem:[%s266 + $0x60] sm:$0xff]
        %v3883 = vld [vmem:[%s266 + $0x68] sm:$0xff]
        %v3884 = vld [vmem:[%s266 + $0x70] sm:$0xff]
        %v3885 = vld [vmem:[%s266 + $0x78] sm:$0xff]
        %v3886 = vld [vmem:[%s266 + $0x80] sm:$0xff]
        %v3887 = vld [vmem:[%s266 + $0x88] sm:$0xff]
        %v3888 = vld [vmem:[%s266 + $0x90] sm:$0xff]
        %v3889 = vld [vmem:[%s266 + $0x98] sm:$0xff]
        %v3890 = vld [vmem:[%s266 + $0xa0] sm:$0xff]
        %v3891 = vld [vmem:[%s266 + $0xa8] sm:$0xff]
        %v3892 = vld [vmem:[%s266 + $0xb0] sm:$0xff]
        %v3893 = vld [vmem:[%s266 + $0xb8] sm:$0xff]
        %v3894 = vld [vmem:[%s266 + $0xc0] sm:$0xff]
        %v3895 = vld [vmem:[%s266 + $0xc8] sm:$0xff]
        %v3896 = vld [vmem:[%s266 + $0xd0] sm:$0xff]
        %v3897 = vld [vmem:[%s266 + $0xd8] sm:$0xff]
        %v3898 = vld [vmem:[%s266 + $0xe0] sm:$0xff]
        %v3899 = vld [vmem:[%s266 + $0xe8] sm:$0xff]
        %v3900 = vld [vmem:[%s266 + $0xf0] sm:$0xff]
        %v3901 = vld [vmem:[%s266 + $0xf8] sm:$0xff]
        %v3902 = vadd.f32 %v3838, 1e-05
        %v3903 = vadd.f32 %v3839, 1e-05
        %v3904 = vadd.f32 %v3840, 1e-05
        %v3905 = vadd.f32 %v3841, 1e-05
        %v3906 = vadd.f32 %v3842, 1e-05
        %v3907 = vadd.f32 %v3843, 1e-05
        %v3908 = vadd.f32 %v3844, 1e-05
        %v3909 = vadd.f32 %v3845, 1e-05
        %v3910 = vadd.f32 %v3846, 1e-05
        %v3911 = vadd.f32 %v3847, 1e-05
        %v3912 = vadd.f32 %v3848, 1e-05
        %v3913 = vadd.f32 %v3849, 1e-05
        %v3914 = vadd.f32 %v3850, 1e-05
        %v3915 = vadd.f32 %v3851, 1e-05
        %v3916 = vadd.f32 %v3852, 1e-05
        %v3917 = vadd.f32 %v3853, 1e-05
        %v3918 = vadd.f32 %v3854, 1e-05
        %v3919 = vadd.f32 %v3855, 1e-05
        %v3920 = vadd.f32 %v3856, 1e-05
        %v3921 = vadd.f32 %v3857, 1e-05
        %v3922 = vadd.f32 %v3858, 1e-05
        %v3923 = vadd.f32 %v3859, 1e-05
        %v3924 = vadd.f32 %v3860, 1e-05
        %v3925 = vadd.f32 %v3861, 1e-05
        %v3926 = vadd.f32 %v3862, 1e-05
        %v3927 = vadd.f32 %v3863, 1e-05
        %v3928 = vadd.f32 %v3864, 1e-05
        %v3929 = vadd.f32 %v3865, 1e-05
        %v3930 = vadd.f32 %v3866, 1e-05
        %v3931 = vadd.f32 %v3867, 1e-05
        %v3932 = vadd.f32 %v3868, 1e-05
        %v3933 = vadd.f32 %v3869, 1e-05
        %v3934 = vrsqrt.pop %v3902
        %v3935 = vmul.f32 %v3934, %v3902
        %v3936 = vmul.f32 %v3935, %v3934
        %v3937 = vmul.f32 0.5, %v3936
        %v3938 = vsub.f32 1.5, %v3937
        %v3939 = vmul.f32 %v3934, %v3938
        %vm3940 = vweird.f32 %v3902
        %vm3941 = vweird.f32 %v3934
        %vm3942 = vmor %vm3940, %vm3941
        %v3943 = vsel %vm3942, %v3934, %v3939
        %v3944 = vrsqrt.pop %v3903
        %v3945 = vmul.f32 %v3944, %v3903
        %v3946 = vmul.f32 %v3945, %v3944
        %v3947 = vmul.f32 0.5, %v3946
        %v3948 = vsub.f32 1.5, %v3947
        %v3949 = vmul.f32 %v3944, %v3948
        %vm3950 = vweird.f32 %v3903
        %vm3951 = vweird.f32 %v3944
        %vm3952 = vmor %vm3950, %vm3951
        %v3953 = vsel %vm3952, %v3944, %v3949
        %v3954 = vrsqrt.pop %v3904
        %v3955 = vmul.f32 %v3954, %v3904
        %v3956 = vmul.f32 %v3955, %v3954
        %v3957 = vmul.f32 0.5, %v3956
        %v3958 = vsub.f32 1.5, %v3957
        %v3959 = vmul.f32 %v3954, %v3958
        %vm3960 = vweird.f32 %v3904
        %vm3961 = vweird.f32 %v3954
        %vm3962 = vmor %vm3960, %vm3961
        %v3963 = vsel %vm3962, %v3954, %v3959
        %v3964 = vrsqrt.pop %v3905
        %v3965 = vmul.f32 %v3964, %v3905
        %v3966 = vmul.f32 %v3965, %v3964
        %v3967 = vmul.f32 0.5, %v3966
        %v3968 = vsub.f32 1.5, %v3967
        %v3969 = vmul.f32 %v3964, %v3968
        %vm3970 = vweird.f32 %v3905
        %vm3971 = vweird.f32 %v3964
        %vm3972 = vmor %vm3970, %vm3971
        %v3973 = vsel %vm3972, %v3964, %v3969
        %v3974 = vrsqrt.pop %v3906
        %v3975 = vmul.f32 %v3974, %v3906
        %v3976 = vmul.f32 %v3975, %v3974
        %v3977 = vmul.f32 0.5, %v3976
        %v3978 = vsub.f32 1.5, %v3977
        %v3979 = vmul.f32 %v3974, %v3978
        %vm3980 = vweird.f32 %v3906
        %vm3981 = vweird.f32 %v3974
        %vm3982 = vmor %vm3980, %vm3981
        %v3983 = vsel %vm3982, %v3974, %v3979
        %v3984 = vrsqrt.pop %v3907
        %v3985 = vmul.f32 %v3984, %v3907
        %v3986 = vmul.f32 %v3985, %v3984
        %v3987 = vmul.f32 0.5, %v3986
        %v3988 = vsub.f32 1.5, %v3987
        %v3989 = vmul.f32 %v3984, %v3988
        %vm3990 = vweird.f32 %v3907
        %vm3991 = vweird.f32 %v3984
        %vm3992 = vmor %vm3990, %vm3991
        %v3993 = vsel %vm3992, %v3984, %v3989
        %v3994 = vrsqrt.pop %v3908
        %v3995 = vmul.f32 %v3994, %v3908
        %v3996 = vmul.f32 %v3995, %v3994
        %v3997 = vmul.f32 0.5, %v3996
        %v3998 = vsub.f32 1.5, %v3997
        %v3999 = vmul.f32 %v3994, %v3998
        %vm4000 = vweird.f32 %v3908
        %vm4001 = vweird.f32 %v3994
        %vm4002 = vmor %vm4000, %vm4001
        %v4003 = vsel %vm4002, %v3994, %v3999
        %v4004 = vrsqrt.pop %v3909
        %v4005 = vmul.f32 %v4004, %v3909
        %v4006 = vmul.f32 %v4005, %v4004
        %v4007 = vmul.f32 0.5, %v4006
        %v4008 = vsub.f32 1.5, %v4007
        %v4009 = vmul.f32 %v4004, %v4008
        %vm4010 = vweird.f32 %v3909
        %vm4011 = vweird.f32 %v4004
        %vm4012 = vmor %vm4010, %vm4011
        %v4013 = vsel %vm4012, %v4004, %v4009
        %v4014 = vrsqrt.pop %v3910
        %v4015 = vmul.f32 %v4014, %v3910
        %v4016 = vmul.f32 %v4015, %v4014
        %v4017 = vmul.f32 0.5, %v4016
        %v4018 = vsub.f32 1.5, %v4017
        %v4019 = vmul.f32 %v4014, %v4018
        %vm4020 = vweird.f32 %v3910
        %vm4021 = vweird.f32 %v4014
        %vm4022 = vmor %vm4020, %vm4021
        %v4023 = vsel %vm4022, %v4014, %v4019
        %v4024 = vrsqrt.pop %v3911
        %v4025 = vmul.f32 %v4024, %v3911
        %v4026 = vmul.f32 %v4025, %v4024
        %v4027 = vmul.f32 0.5, %v4026
        %v4028 = vsub.f32 1.5, %v4027
        %v4029 = vmul.f32 %v4024, %v4028
        %vm4030 = vweird.f32 %v3911
        %vm4031 = vweird.f32 %v4024
        %vm4032 = vmor %vm4030, %vm4031
        %v4033 = vsel %vm4032, %v4024, %v4029
        %v4034 = vrsqrt.pop %v3912
        %v4035 = vmul.f32 %v4034, %v3912
        %v4036 = vmul.f32 %v4035, %v4034
        %v4037 = vmul.f32 0.5, %v4036
        %v4038 = vsub.f32 1.5, %v4037
        %v4039 = vmul.f32 %v4034, %v4038
        %vm4040 = vweird.f32 %v3912
        %vm4041 = vweird.f32 %v4034
        %vm4042 = vmor %vm4040, %vm4041
        %v4043 = vsel %vm4042, %v4034, %v4039
        %v4044 = vrsqrt.pop %v3913
        %v4045 = vmul.f32 %v4044, %v3913
        %v4046 = vmul.f32 %v4045, %v4044
        %v4047 = vmul.f32 0.5, %v4046
        %v4048 = vsub.f32 1.5, %v4047
        %v4049 = vmul.f32 %v4044, %v4048
        %vm4050 = vweird.f32 %v3913
        %vm4051 = vweird.f32 %v4044
        %vm4052 = vmor %vm4050, %vm4051
        %v4053 = vsel %vm4052, %v4044, %v4049
        %v4054 = vrsqrt.pop %v3914
        %v4055 = vmul.f32 %v4054, %v3914
        %v4056 = vmul.f32 %v4055, %v4054
        %v4057 = vmul.f32 0.5, %v4056
        %v4058 = vsub.f32 1.5, %v4057
        %v4059 = vmul.f32 %v4054, %v4058
        %vm4060 = vweird.f32 %v3914
        %vm4061 = vweird.f32 %v4054
        %vm4062 = vmor %vm4060, %vm4061
        %v4063 = vsel %vm4062, %v4054, %v4059
        %v4064 = vrsqrt.pop %v3915
        %v4065 = vmul.f32 %v4064, %v3915
        %v4066 = vmul.f32 %v4065, %v4064
        %v4067 = vmul.f32 0.5, %v4066
        %v4068 = vsub.f32 1.5, %v4067
        %v4069 = vmul.f32 %v4064, %v4068
        %vm4070 = vweird.f32 %v3915
        %vm4071 = vweird.f32 %v4064
        %vm4072 = vmor %vm4070, %vm4071
        %v4073 = vsel %vm4072, %v4064, %v4069
        %v4074 = vrsqrt.pop %v3916
        %v4075 = vmul.f32 %v4074, %v3916
        %v4076 = vmul.f32 %v4075, %v4074
        %v4077 = vmul.f32 0.5, %v4076
        %v4078 = vsub.f32 1.5, %v4077
        %v4079 = vmul.f32 %v4074, %v4078
        %vm4080 = vweird.f32 %v3916
        %vm4081 = vweird.f32 %v4074
        %vm4082 = vmor %vm4080, %vm4081
        %v4083 = vsel %vm4082, %v4074, %v4079
        %v4084 = vrsqrt.pop %v3917
        %v4085 = vmul.f32 %v4084, %v3917
        %v4086 = vmul.f32 %v4085, %v4084
        %v4087 = vmul.f32 0.5, %v4086
        %v4088 = vsub.f32 1.5, %v4087
        %v4089 = vmul.f32 %v4084, %v4088
        %vm4090 = vweird.f32 %v3917
        %vm4091 = vweird.f32 %v4084
        %vm4092 = vmor %vm4090, %vm4091
        %v4093 = vsel %vm4092, %v4084, %v4089
        %v4094 = vrsqrt.pop %v3918
        %v4095 = vmul.f32 %v4094, %v3918
        %v4096 = vmul.f32 %v4095, %v4094
        %v4097 = vmul.f32 0.5, %v4096
        %v4098 = vsub.f32 1.5, %v4097
        %v4099 = vmul.f32 %v4094, %v4098
        %vm4100 = vweird.f32 %v3918
        %vm4101 = vweird.f32 %v4094
        %vm4102 = vmor %vm4100, %vm4101
        %v4103 = vsel %vm4102, %v4094, %v4099
        %v4104 = vrsqrt.pop %v3919
        %v4105 = vmul.f32 %v4104, %v3919
        %v4106 = vmul.f32 %v4105, %v4104
        %v4107 = vmul.f32 0.5, %v4106
        %v4108 = vsub.f32 1.5, %v4107
        %v4109 = vmul.f32 %v4104, %v4108
        %vm4110 = vweird.f32 %v3919
        %vm4111 = vweird.f32 %v4104
        %vm4112 = vmor %vm4110, %vm4111
        %v4113 = vsel %vm4112, %v4104, %v4109
        %v4114 = vrsqrt.pop %v3920
        %v4115 = vmul.f32 %v4114, %v3920
        %v4116 = vmul.f32 %v4115, %v4114
        %v4117 = vmul.f32 0.5, %v4116
        %v4118 = vsub.f32 1.5, %v4117
        %v4119 = vmul.f32 %v4114, %v4118
        %vm4120 = vweird.f32 %v3920
        %vm4121 = vweird.f32 %v4114
        %vm4122 = vmor %vm4120, %vm4121
        %v4123 = vsel %vm4122, %v4114, %v4119
        %v4124 = vrsqrt.pop %v3921
        %v4125 = vmul.f32 %v4124, %v3921
        %v4126 = vmul.f32 %v4125, %v4124
        %v4127 = vmul.f32 0.5, %v4126
        %v4128 = vsub.f32 1.5, %v4127
        %v4129 = vmul.f32 %v4124, %v4128
        %vm4130 = vweird.f32 %v3921
        %vm4131 = vweird.f32 %v4124
        %vm4132 = vmor %vm4130, %vm4131
        %v4133 = vsel %vm4132, %v4124, %v4129
        %v4134 = vrsqrt.pop %v3922
        %v4135 = vmul.f32 %v4134, %v3922
        %v4136 = vmul.f32 %v4135, %v4134
        %v4137 = vmul.f32 0.5, %v4136
        %v4138 = vsub.f32 1.5, %v4137
        %v4139 = vmul.f32 %v4134, %v4138
        %vm4140 = vweird.f32 %v3922
        %vm4141 = vweird.f32 %v4134
        %vm4142 = vmor %vm4140, %vm4141
        %v4143 = vsel %vm4142, %v4134, %v4139
        %v4144 = vrsqrt.pop %v3923
        %v4145 = vmul.f32 %v4144, %v3923
        %v4146 = vmul.f32 %v4145, %v4144
        %v4147 = vmul.f32 0.5, %v4146
        %v4148 = vsub.f32 1.5, %v4147
        %v4149 = vmul.f32 %v4144, %v4148
        %vm4150 = vweird.f32 %v3923
        %vm4151 = vweird.f32 %v4144
        %vm4152 = vmor %vm4150, %vm4151
        %v4153 = vsel %vm4152, %v4144, %v4149
        %v4154 = vrsqrt.pop %v3924
        %v4155 = vmul.f32 %v4154, %v3924
        %v4156 = vmul.f32 %v4155, %v4154
        %v4157 = vmul.f32 0.5, %v4156
        %v4158 = vsub.f32 1.5, %v4157
        %v4159 = vmul.f32 %v4154, %v4158
        %vm4160 = vweird.f32 %v3924
        %vm4161 = vweird.f32 %v4154
        %vm4162 = vmor %vm4160, %vm4161
        %v4163 = vsel %vm4162, %v4154, %v4159
        %v4164 = vrsqrt.pop %v3925
        %v4165 = vmul.f32 %v4164, %v3925
        %v4166 = vmul.f32 %v4165, %v4164
        %v4167 = vmul.f32 0.5, %v4166
        %v4168 = vsub.f32 1.5, %v4167
        %v4169 = vmul.f32 %v4164, %v4168
        %vm4170 = vweird.f32 %v3925
        %vm4171 = vweird.f32 %v4164
        %vm4172 = vmor %vm4170, %vm4171
        %v4173 = vsel %vm4172, %v4164, %v4169
        %v4174 = vrsqrt.pop %v3926
        %v4175 = vmul.f32 %v4174, %v3926
        %v4176 = vmul.f32 %v4175, %v4174
        %v4177 = vmul.f32 0.5, %v4176
        %v4178 = vsub.f32 1.5, %v4177
        %v4179 = vmul.f32 %v4174, %v4178
        %vm4180 = vweird.f32 %v3926
        %vm4181 = vweird.f32 %v4174
        %vm4182 = vmor %vm4180, %vm4181
        %v4183 = vsel %vm4182, %v4174, %v4179
        %v4184 = vrsqrt.pop %v3927
        %v4185 = vmul.f32 %v4184, %v3927
        %v4186 = vmul.f32 %v4185, %v4184
        %v4187 = vmul.f32 0.5, %v4186
        %v4188 = vsub.f32 1.5, %v4187
        %v4189 = vmul.f32 %v4184, %v4188
        %vm4190 = vweird.f32 %v3927
        %vm4191 = vweird.f32 %v4184
        %vm4192 = vmor %vm4190, %vm4191
        %v4193 = vsel %vm4192, %v4184, %v4189
        %v4194 = vrsqrt.pop %v3928
        %v4195 = vmul.f32 %v4194, %v3928
        %v4196 = vmul.f32 %v4195, %v4194
        %v4197 = vmul.f32 0.5, %v4196
        %v4198 = vsub.f32 1.5, %v4197
        %v4199 = vmul.f32 %v4194, %v4198
        %vm4200 = vweird.f32 %v3928
        %vm4201 = vweird.f32 %v4194
        %vm4202 = vmor %vm4200, %vm4201
        %v4203 = vsel %vm4202, %v4194, %v4199
        %v4204 = vrsqrt.pop %v3929
        %v4205 = vmul.f32 %v4204, %v3929
        %v4206 = vmul.f32 %v4205, %v4204
        %v4207 = vmul.f32 0.5, %v4206
        %v4208 = vsub.f32 1.5, %v4207
        %v4209 = vmul.f32 %v4204, %v4208
        %vm4210 = vweird.f32 %v3929
        %vm4211 = vweird.f32 %v4204
        %vm4212 = vmor %vm4210, %vm4211
        %v4213 = vsel %vm4212, %v4204, %v4209
        %v4214 = vrsqrt.pop %v3930
        %v4215 = vmul.f32 %v4214, %v3930
        %v4216 = vmul.f32 %v4215, %v4214
        %v4217 = vmul.f32 0.5, %v4216
        %v4218 = vsub.f32 1.5, %v4217
        %v4219 = vmul.f32 %v4214, %v4218
        %vm4220 = vweird.f32 %v3930
        %vm4221 = vweird.f32 %v4214
        %vm4222 = vmor %vm4220, %vm4221
        %v4223 = vsel %vm4222, %v4214, %v4219
        %v4224 = vrsqrt.pop %v3931
        %v4225 = vmul.f32 %v4224, %v3931
        %v4226 = vmul.f32 %v4225, %v4224
        %v4227 = vmul.f32 0.5, %v4226
        %v4228 = vsub.f32 1.5, %v4227
        %v4229 = vmul.f32 %v4224, %v4228
        %vm4230 = vweird.f32 %v3931
        %vm4231 = vweird.f32 %v4224
        %vm4232 = vmor %vm4230, %vm4231
        %v4233 = vsel %vm4232, %v4224, %v4229
        %v4234 = vrsqrt.pop %v3932
        %v4235 = vmul.f32 %v4234, %v3932
        %v4236 = vmul.f32 %v4235, %v4234
        %v4237 = vmul.f32 0.5, %v4236
        %v4238 = vsub.f32 1.5, %v4237
        %v4239 = vmul.f32 %v4234, %v4238
        %vm4240 = vweird.f32 %v3932
        %vm4241 = vweird.f32 %v4234
        %vm4242 = vmor %vm4240, %vm4241
        %v4243 = vsel %vm4242, %v4234, %v4239
        %v4244 = vrsqrt.pop %v3933
        %v4245 = vmul.f32 %v4244, %v3933
        %v4246 = vmul.f32 %v4245, %v4244
        %v4247 = vmul.f32 0.5, %v4246
        %v4248 = vsub.f32 1.5, %v4247
        %v4249 = vmul.f32 %v4244, %v4248
        %vm4250 = vweird.f32 %v3933
        %vm4251 = vweird.f32 %v4244
        %vm4252 = vmor %vm4250, %vm4251
        %v4253 = vsel %vm4252, %v4244, %v4249
        %v4254 = vmul.f32 %v3870, %v3943
        %v4255 = vmul.f32 %v3871, %v3953
        %v4256 = vmul.f32 %v3872, %v3963
        %v4257 = vmul.f32 %v3873, %v3973
        %v4258 = vmul.f32 %v3874, %v3983
        %v4259 = vmul.f32 %v3875, %v3993
        %v4260 = vmul.f32 %v3876, %v4003
        %v4261 = vmul.f32 %v3877, %v4013
        %v4262 = vmul.f32 %v3878, %v4023
        %v4263 = vmul.f32 %v3879, %v4033
        %v4264 = vmul.f32 %v3880, %v4043
        %v4265 = vmul.f32 %v3881, %v4053
        %v4266 = vmul.f32 %v3882, %v4063
        %v4267 = vmul.f32 %v3883, %v4073
        %v4268 = vmul.f32 %v3884, %v4083
        %v4269 = vmul.f32 %v3885, %v4093
        %v4270 = vmul.f32 %v3886, %v4103
        %v4271 = vmul.f32 %v3887, %v4113
        %v4272 = vmul.f32 %v3888, %v4123
        %v4273 = vmul.f32 %v3889, %v4133
        %v4274 = vmul.f32 %v3890, %v4143
        %v4275 = vmul.f32 %v3891, %v4153
        %v4276 = vmul.f32 %v3892, %v4163
        %v4277 = vmul.f32 %v3893, %v4173
        %v4278 = vmul.f32 %v3894, %v4183
        %v4279 = vmul.f32 %v3895, %v4193
        %v4280 = vmul.f32 %v3896, %v4203
        %v4281 = vmul.f32 %v3897, %v4213
        %v4282 = vmul.f32 %v3898, %v4223
        %v4283 = vmul.f32 %v3899, %v4233
        %v4284 = vmul.f32 %v3900, %v4243
        %v4285 = vmul.f32 %v3901, %v4253
        %v4286 = vmul.f32 %v3710, %v4254
        %v4287 = vmul.f32 %v3711, %v4255
        %v4288 = vmul.f32 %v3712, %v4256
        %v4289 = vmul.f32 %v3713, %v4257
        %v4290 = vmul.f32 %v3714, %v4258
        %v4291 = vmul.f32 %v3715, %v4259
        %v4292 = vmul.f32 %v3716, %v4260
        %v4293 = vmul.f32 %v3717, %v4261
        %v4294 = vmul.f32 %v3718, %v4262
        %v4295 = vmul.f32 %v3719, %v4263
        %v4296 = vmul.f32 %v3720, %v4264
        %v4297 = vmul.f32 %v3721, %v4265
        %v4298 = vmul.f32 %v3722, %v4266
        %v4299 = vmul.f32 %v3723, %v4267
        %v4300 = vmul.f32 %v3724, %v4268
        %v4301 = vmul.f32 %v3725, %v4269
        %v4302 = vmul.f32 %v3726, %v4270
        %v4303 = vmul.f32 %v3727, %v4271
        %v4304 = vmul.f32 %v3728, %v4272
        %v4305 = vmul.f32 %v3729, %v4273
        %v4306 = vmul.f32 %v3730, %v4274
        %v4307 = vmul.f32 %v3731, %v4275
        %v4308 = vmul.f32 %v3732, %v4276
        %v4309 = vmul.f32 %v3733, %v4277
        %v4310 = vmul.f32 %v3734, %v4278
        %v4311 = vmul.f32 %v3735, %v4279
        %v4312 = vmul.f32 %v3736, %v4280
        %v4313 = vmul.f32 %v3737, %v4281
        %v4314 = vmul.f32 %v3738, %v4282
        %v4315 = vmul.f32 %v3739, %v4283
        %v4316 = vmul.f32 %v3740, %v4284
        %v4317 = vmul.f32 %v3741, %v4285
        %4350 = vrot.lane.b32.xlu0 %v4286, 1
        %v4351 = vpop.permute.xlu0 %4350
        %4352 = vrot.lane.b32.xlu0 %v4287, 1
        %v4353 = vpop.permute.xlu0 %4352
        %4354 = vrot.lane.b32.xlu0 %v4288, 1
        %v4355 = vpop.permute.xlu0 %4354
        %4356 = vrot.lane.b32.xlu0 %v4289, 1
        %v4357 = vpop.permute.xlu0 %4356
        %4358 = vrot.lane.b32.xlu0 %v4290, 1
        %v4359 = vpop.permute.xlu0 %4358
        %4360 = vrot.lane.b32.xlu0 %v4291, 1
        %v4361 = vpop.permute.xlu0 %4360
        %4362 = vrot.lane.b32.xlu0 %v4292, 1
        %v4363 = vpop.permute.xlu0 %4362
        %4364 = vrot.lane.b32.xlu0 %v4293, 1
        %v4365 = vpop.permute.xlu0 %4364
        %4366 = vrot.lane.b32.xlu0 %v4294, 1
        %v4367 = vpop.permute.xlu0 %4366
        %4368 = vrot.lane.b32.xlu0 %v4295, 1
        %v4369 = vpop.permute.xlu0 %4368
        %4370 = vrot.lane.b32.xlu0 %v4296, 1
        %v4371 = vpop.permute.xlu0 %4370
        %4372 = vrot.lane.b32.xlu0 %v4297, 1
        %v4373 = vpop.permute.xlu0 %4372
        %4374 = vrot.lane.b32.xlu0 %v4298, 1
        %v4375 = vpop.permute.xlu0 %4374
        %4376 = vrot.lane.b32.xlu0 %v4299, 1
        %v4377 = vpop.permute.xlu0 %4376
        %4378 = vrot.lane.b32.xlu0 %v4300, 1
        %v4379 = vpop.permute.xlu0 %4378
        %4380 = vrot.lane.b32.xlu0 %v4301, 1
        %v4381 = vpop.permute.xlu0 %4380
        %4382 = vrot.lane.b32.xlu0 %v4302, 1
        %v4383 = vpop.permute.xlu0 %4382
        %4384 = vrot.lane.b32.xlu0 %v4303, 1
        %v4385 = vpop.permute.xlu0 %4384
        %4386 = vrot.lane.b32.xlu0 %v4304, 1
        %v4387 = vpop.permute.xlu0 %4386
        %4388 = vrot.lane.b32.xlu0 %v4305, 1
        %v4389 = vpop.permute.xlu0 %4388
        %4390 = vrot.lane.b32.xlu0 %v4306, 1
        %v4391 = vpop.permute.xlu0 %4390
        %4392 = vrot.lane.b32.xlu0 %v4307, 1
        %v4393 = vpop.permute.xlu0 %4392
        %4394 = vrot.lane.b32.xlu0 %v4308, 1
        %v4395 = vpop.permute.xlu0 %4394
        %4396 = vrot.lane.b32.xlu0 %v4309, 1
        %v4397 = vpop.permute.xlu0 %4396
        %4398 = vrot.lane.b32.xlu0 %v4310, 1
        %v4399 = vpop.permute.xlu0 %4398
        %4400 = vrot.lane.b32.xlu0 %v4311, 1
        %v4401 = vpop.permute.xlu0 %4400
        %4402 = vrot.lane.b32.xlu0 %v4312, 1
        %v4403 = vpop.permute.xlu0 %4402
        %4404 = vrot.lane.b32.xlu0 %v4313, 1
        %v4405 = vpop.permute.xlu0 %4404
        %4406 = vrot.lane.b32.xlu0 %v4314, 1
        %v4407 = vpop.permute.xlu0 %4406
        %4408 = vrot.lane.b32.xlu0 %v4315, 1
        %v4409 = vpop.permute.xlu0 %4408
        %4410 = vrot.lane.b32.xlu0 %v4316, 1
        %v4411 = vpop.permute.xlu0 %4410
        %4412 = vrot.lane.b32.xlu0 %v4317, 1
        %v4413 = vpop.permute.xlu0 %4412
        %v4446 = vsub.f32 %v3870, %v4351
        %v4447 = vsub.f32 %v3871, %v4353
        %v4448 = vsub.f32 %v3872, %v4355
        %v4449 = vsub.f32 %v3873, %v4357
        %v4450 = vsub.f32 %v3874, %v4359
        %v4451 = vsub.f32 %v3875, %v4361
        %v4452 = vsub.f32 %v3876, %v4363
        %v4453 = vsub.f32 %v3877, %v4365
        %v4454 = vsub.f32 %v3878, %v4367
        %v4455 = vsub.f32 %v3879, %v4369
        %v4456 = vsub.f32 %v3880, %v4371
        %v4457 = vsub.f32 %v3881, %v4373
        %v4458 = vsub.f32 %v3882, %v4375
        %v4459 = vsub.f32 %v3883, %v4377
        %v4460 = vsub.f32 %v3884, %v4379
        %v4461 = vsub.f32 %v3885, %v4381
        %v4462 = vsub.f32 %v3886, %v4383
        %v4463 = vsub.f32 %v3887, %v4385
        %v4464 = vsub.f32 %v3888, %v4387
        %v4465 = vsub.f32 %v3889, %v4389
        %v4466 = vsub.f32 %v3890, %v4391
        %v4467 = vsub.f32 %v3891, %v4393
        %v4468 = vsub.f32 %v3892, %v4395
        %v4469 = vsub.f32 %v3893, %v4397
        %v4470 = vsub.f32 %v3894, %v4399
        %v4471 = vsub.f32 %v3895, %v4401
        %v4472 = vsub.f32 %v3896, %v4403
        %v4473 = vsub.f32 %v3897, %v4405
        %v4474 = vsub.f32 %v3898, %v4407
        %v4475 = vsub.f32 %v3899, %v4409
        %v4476 = vsub.f32 %v3900, %v4411
        %v4477 = vsub.f32 %v3901, %v4413
        %4479 = vset.pattern.permute.xlu0 0
        %4480 = vperm.xlu0 %4479, %v4254
        %v4481 = vpop.permute.xlu0 %4480
        %4484 = vset.pattern.permute.xlu0 0
        %4485 = vperm.xlu0 %4484, %v4255
        %v4486 = vpop.permute.xlu0 %4485
        %4489 = vset.pattern.permute.xlu0 0
        %4490 = vperm.xlu0 %4489, %v4256
        %v4491 = vpop.permute.xlu0 %4490
        %4494 = vset.pattern.permute.xlu0 0
        %4495 = vperm.xlu0 %4494, %v4257
        %v4496 = vpop.permute.xlu0 %4495
        %4499 = vset.pattern.permute.xlu0 0
        %4500 = vperm.xlu0 %4499, %v4258
        %v4501 = vpop.permute.xlu0 %4500
        %4504 = vset.pattern.permute.xlu0 0
        %4505 = vperm.xlu0 %4504, %v4259
        %v4506 = vpop.permute.xlu0 %4505
        %4509 = vset.pattern.permute.xlu0 0
        %4510 = vperm.xlu0 %4509, %v4260
        %v4511 = vpop.permute.xlu0 %4510
        %4514 = vset.pattern.permute.xlu0 0
        %4515 = vperm.xlu0 %4514, %v4261
        %v4516 = vpop.permute.xlu0 %4515
        %4519 = vset.pattern.permute.xlu0 0
        %4520 = vperm.xlu0 %4519, %v4262
        %v4521 = vpop.permute.xlu0 %4520
        %4524 = vset.pattern.permute.xlu0 0
        %4525 = vperm.xlu0 %4524, %v4263
        %v4526 = vpop.permute.xlu0 %4525
        %4529 = vset.pattern.permute.xlu0 0
        %4530 = vperm.xlu0 %4529, %v4264
        %v4531 = vpop.permute.xlu0 %4530
        %4534 = vset.pattern.permute.xlu0 0
        %4535 = vperm.xlu0 %4534, %v4265
        %v4536 = vpop.permute.xlu0 %4535
        %4539 = vset.pattern.permute.xlu0 0
        %4540 = vperm.xlu0 %4539, %v4266
        %v4541 = vpop.permute.xlu0 %4540
        %4544 = vset.pattern.permute.xlu0 0
        %4545 = vperm.xlu0 %4544, %v4267
        %v4546 = vpop.permute.xlu0 %4545
        %4549 = vset.pattern.permute.xlu0 0
        %4550 = vperm.xlu0 %4549, %v4268
        %v4551 = vpop.permute.xlu0 %4550
        %4554 = vset.pattern.permute.xlu0 0
        %4555 = vperm.xlu0 %4554, %v4269
        %v4556 = vpop.permute.xlu0 %4555
        %4559 = vset.pattern.permute.xlu0 0
        %4560 = vperm.xlu0 %4559, %v4270
        %v4561 = vpop.permute.xlu0 %4560
        %4564 = vset.pattern.permute.xlu0 0
        %4565 = vperm.xlu0 %4564, %v4271
        %v4566 = vpop.permute.xlu0 %4565
        %4569 = vset.pattern.permute.xlu0 0
        %4570 = vperm.xlu0 %4569, %v4272
        %v4571 = vpop.permute.xlu0 %4570
        %4574 = vset.pattern.permute.xlu0 0
        %4575 = vperm.xlu0 %4574, %v4273
        %v4576 = vpop.permute.xlu0 %4575
        %4579 = vset.pattern.permute.xlu0 0
        %4580 = vperm.xlu0 %4579, %v4274
        %v4581 = vpop.permute.xlu0 %4580
        %4584 = vset.pattern.permute.xlu0 0
        %4585 = vperm.xlu0 %4584, %v4275
        %v4586 = vpop.permute.xlu0 %4585
        %4589 = vset.pattern.permute.xlu0 0
        %4590 = vperm.xlu0 %4589, %v4276
        %v4591 = vpop.permute.xlu0 %4590
        %4594 = vset.pattern.permute.xlu0 0
        %4595 = vperm.xlu0 %4594, %v4277
        %v4596 = vpop.permute.xlu0 %4595
        %4599 = vset.pattern.permute.xlu0 0
        %4600 = vperm.xlu0 %4599, %v4278
        %v4601 = vpop.permute.xlu0 %4600
        %4604 = vset.pattern.permute.xlu0 0
        %4605 = vperm.xlu0 %4604, %v4279
        %v4606 = vpop.permute.xlu0 %4605
        %4609 = vset.pattern.permute.xlu0 0
        %4610 = vperm.xlu0 %4609, %v4280
        %v4611 = vpop.permute.xlu0 %4610
        %4614 = vset.pattern.permute.xlu0 0
        %4615 = vperm.xlu0 %4614, %v4281
        %v4616 = vpop.permute.xlu0 %4615
        %4619 = vset.pattern.permute.xlu0 0
        %4620 = vperm.xlu0 %4619, %v4282
        %v4621 = vpop.permute.xlu0 %4620
        %4624 = vset.pattern.permute.xlu0 0
        %4625 = vperm.xlu0 %4624, %v4283
        %v4626 = vpop.permute.xlu0 %4625
        %4629 = vset.pattern.permute.xlu0 0
        %4630 = vperm.xlu0 %4629, %v4284
        %v4631 = vpop.permute.xlu0 %4630
        %4634 = vset.pattern.permute.xlu0 0
        %4635 = vperm.xlu0 %4634, %v4285
        %v4636 = vpop.permute.xlu0 %4635
        %v4638 = vmul.f32 %v3518, %v4481
        %v4639 = vmul.f32 %v3519, %v4486
        %v4640 = vmul.f32 %v3520, %v4491
        %v4641 = vmul.f32 %v3521, %v4496
        %v4642 = vmul.f32 %v3522, %v4501
        %v4643 = vmul.f32 %v3523, %v4506
        %v4644 = vmul.f32 %v3524, %v4511
        %v4645 = vmul.f32 %v3525, %v4516
        %v4646 = vmul.f32 %v3526, %v4521
        %v4647 = vmul.f32 %v3527, %v4526
        %v4648 = vmul.f32 %v3528, %v4531
        %v4649 = vmul.f32 %v3529, %v4536
        %v4650 = vmul.f32 %v3530, %v4541
        %v4651 = vmul.f32 %v3531, %v4546
        %v4652 = vmul.f32 %v3532, %v4551
        %v4653 = vmul.f32 %v3533, %v4556
        %v4654 = vmul.f32 %v3534, %v4561
        %v4655 = vmul.f32 %v3535, %v4566
        %v4656 = vmul.f32 %v3536, %v4571
        %v4657 = vmul.f32 %v3537, %v4576
        %v4658 = vmul.f32 %v3538, %v4581
        %v4659 = vmul.f32 %v3539, %v4586
        %v4660 = vmul.f32 %v3540, %v4591
        %v4661 = vmul.f32 %v3541, %v4596
        %v4662 = vmul.f32 %v3542, %v4601
        %v4663 = vmul.f32 %v3543, %v4606
        %v4664 = vmul.f32 %v3544, %v4611
        %v4665 = vmul.f32 %v3545, %v4616
        %v4666 = vmul.f32 %v3546, %v4621
        %v4667 = vmul.f32 %v3547, %v4626
        %v4668 = vmul.f32 %v3548, %v4631
        %v4669 = vmul.f32 %v3549, %v4636
        %4671 = vset.pattern.permute.xlu0 1
        %4672 = vperm.xlu0 %4671, %v4446
        %v4673 = vpop.permute.xlu0 %4672
        %4676 = vset.pattern.permute.xlu0 1
        %4677 = vperm.xlu0 %4676, %v4447
        %v4678 = vpop.permute.xlu0 %4677
        %4681 = vset.pattern.permute.xlu0 1
        %4682 = vperm.xlu0 %4681, %v4448
        %v4683 = vpop.permute.xlu0 %4682
        %4686 = vset.pattern.permute.xlu0 1
        %4687 = vperm.xlu0 %4686, %v4449
        %v4688 = vpop.permute.xlu0 %4687
        %4691 = vset.pattern.permute.xlu0 1
        %4692 = vperm.xlu0 %4691, %v4450
        %v4693 = vpop.permute.xlu0 %4692
        %4696 = vset.pattern.permute.xlu0 1
        %4697 = vperm.xlu0 %4696, %v4451
        %v4698 = vpop.permute.xlu0 %4697
        %4701 = vset.pattern.permute.xlu0 1
        %4702 = vperm.xlu0 %4701, %v4452
        %v4703 = vpop.permute.xlu0 %4702
        %4706 = vset.pattern.permute.xlu0 1
        %4707 = vperm.xlu0 %4706, %v4453
        %v4708 = vpop.permute.xlu0 %4707
        %4711 = vset.pattern.permute.xlu0 1
        %4712 = vperm.xlu0 %4711, %v4454
        %v4713 = vpop.permute.xlu0 %4712
        %4716 = vset.pattern.permute.xlu0 1
        %4717 = vperm.xlu0 %4716, %v4455
        %v4718 = vpop.permute.xlu0 %4717
        %4721 = vset.pattern.permute.xlu0 1
        %4722 = vperm.xlu0 %4721, %v4456
        %v4723 = vpop.permute.xlu0 %4722
        %4726 = vset.pattern.permute.xlu0 1
        %4727 = vperm.xlu0 %4726, %v4457
        %v4728 = vpop.permute.xlu0 %4727
        %4731 = vset.pattern.permute.xlu0 1
        %4732 = vperm.xlu0 %4731, %v4458
        %v4733 = vpop.permute.xlu0 %4732
        %4736 = vset.pattern.permute.xlu0 1
        %4737 = vperm.xlu0 %4736, %v4459
        %v4738 = vpop.permute.xlu0 %4737
        %4741 = vset.pattern.permute.xlu0 1
        %4742 = vperm.xlu0 %4741, %v4460
        %v4743 = vpop.permute.xlu0 %4742
        %4746 = vset.pattern.permute.xlu0 1
        %4747 = vperm.xlu0 %4746, %v4461
        %v4748 = vpop.permute.xlu0 %4747
        %4751 = vset.pattern.permute.xlu0 1
        %4752 = vperm.xlu0 %4751, %v4462
        %v4753 = vpop.permute.xlu0 %4752
        %4756 = vset.pattern.permute.xlu0 1
        %4757 = vperm.xlu0 %4756, %v4463
        %v4758 = vpop.permute.xlu0 %4757
        %4761 = vset.pattern.permute.xlu0 1
        %4762 = vperm.xlu0 %4761, %v4464
        %v4763 = vpop.permute.xlu0 %4762
        %4766 = vset.pattern.permute.xlu0 1
        %4767 = vperm.xlu0 %4766, %v4465
        %v4768 = vpop.permute.xlu0 %4767
        %4771 = vset.pattern.permute.xlu0 1
        %4772 = vperm.xlu0 %4771, %v4466
        %v4773 = vpop.permute.xlu0 %4772
        %4776 = vset.pattern.permute.xlu0 1
        %4777 = vperm.xlu0 %4776, %v4467
        %v4778 = vpop.permute.xlu0 %4777
        %4781 = vset.pattern.permute.xlu0 1
        %4782 = vperm.xlu0 %4781, %v4468
        %v4783 = vpop.permute.xlu0 %4782
        %4786 = vset.pattern.permute.xlu0 1
        %4787 = vperm.xlu0 %4786, %v4469
        %v4788 = vpop.permute.xlu0 %4787
        %4791 = vset.pattern.permute.xlu0 1
        %4792 = vperm.xlu0 %4791, %v4470
        %v4793 = vpop.permute.xlu0 %4792
        %4796 = vset.pattern.permute.xlu0 1
        %4797 = vperm.xlu0 %4796, %v4471
        %v4798 = vpop.permute.xlu0 %4797
        %4801 = vset.pattern.permute.xlu0 1
        %4802 = vperm.xlu0 %4801, %v4472
        %v4803 = vpop.permute.xlu0 %4802
        %4806 = vset.pattern.permute.xlu0 1
        %4807 = vperm.xlu0 %4806, %v4473
        %v4808 = vpop.permute.xlu0 %4807
        %4811 = vset.pattern.permute.xlu0 1
        %4812 = vperm.xlu0 %4811, %v4474
        %v4813 = vpop.permute.xlu0 %4812
        %4816 = vset.pattern.permute.xlu0 1
        %4817 = vperm.xlu0 %4816, %v4475
        %v4818 = vpop.permute.xlu0 %4817
        %4821 = vset.pattern.permute.xlu0 1
        %4822 = vperm.xlu0 %4821, %v4476
        %v4823 = vpop.permute.xlu0 %4822
        %4826 = vset.pattern.permute.xlu0 1
        %4827 = vperm.xlu0 %4826, %v4477
        %v4828 = vpop.permute.xlu0 %4827
        %v4830 = vadd.f32 %v4638, %v4673
        %v4831 = vadd.f32 %v4639, %v4678
        %v4832 = vadd.f32 %v4640, %v4683
        %v4833 = vadd.f32 %v4641, %v4688
        %v4834 = vadd.f32 %v4642, %v4693
        %v4835 = vadd.f32 %v4643, %v4698
        %v4836 = vadd.f32 %v4644, %v4703
        %v4837 = vadd.f32 %v4645, %v4708
        %v4838 = vadd.f32 %v4646, %v4713
        %v4839 = vadd.f32 %v4647, %v4718
        %v4840 = vadd.f32 %v4648, %v4723
        %v4841 = vadd.f32 %v4649, %v4728
        %v4842 = vadd.f32 %v4650, %v4733
        %v4843 = vadd.f32 %v4651, %v4738
        %v4844 = vadd.f32 %v4652, %v4743
        %v4845 = vadd.f32 %v4653, %v4748
        %v4846 = vadd.f32 %v4654, %v4753
        %v4847 = vadd.f32 %v4655, %v4758
        %v4848 = vadd.f32 %v4656, %v4763
        %v4849 = vadd.f32 %v4657, %v4768
        %v4850 = vadd.f32 %v4658, %v4773
        %v4851 = vadd.f32 %v4659, %v4778
        %v4852 = vadd.f32 %v4660, %v4783
        %v4853 = vadd.f32 %v4661, %v4788
        %v4854 = vadd.f32 %v4662, %v4793
        %v4855 = vadd.f32 %v4663, %v4798
        %v4856 = vadd.f32 %v4664, %v4803
        %v4857 = vadd.f32 %v4665, %v4808
        %v4858 = vadd.f32 %v4666, %v4813
        %v4859 = vadd.f32 %v4667, %v4818
        %v4860 = vadd.f32 %v4668, %v4823
        %v4861 = vadd.f32 %v4669, %v4828
        %v4862 = vmax.f32 %v4830, 0.0
        %v4863 = vmax.f32 %v4831, 0.0
        %v4864 = vmax.f32 %v4832, 0.0
        %v4865 = vmax.f32 %v4833, 0.0
        %v4866 = vmax.f32 %v4834, 0.0
        %v4867 = vmax.f32 %v4835, 0.0
        %v4868 = vmax.f32 %v4836, 0.0
        %v4869 = vmax.f32 %v4837, 0.0
        %v4870 = vmax.f32 %v4838, 0.0
        %v4871 = vmax.f32 %v4839, 0.0
        %v4872 = vmax.f32 %v4840, 0.0
        %v4873 = vmax.f32 %v4841, 0.0
        %v4874 = vmax.f32 %v4842, 0.0
        %v4875 = vmax.f32 %v4843, 0.0
        %v4876 = vmax.f32 %v4844, 0.0
        %v4877 = vmax.f32 %v4845, 0.0
        %v4878 = vmax.f32 %v4846, 0.0
        %v4879 = vmax.f32 %v4847, 0.0
        %v4880 = vmax.f32 %v4848, 0.0
        %v4881 = vmax.f32 %v4849, 0.0
        %v4882 = vmax.f32 %v4850, 0.0
        %v4883 = vmax.f32 %v4851, 0.0
        %v4884 = vmax.f32 %v4852, 0.0
        %v4885 = vmax.f32 %v4853, 0.0
        %v4886 = vmax.f32 %v4854, 0.0
        %v4887 = vmax.f32 %v4855, 0.0
        %v4888 = vmax.f32 %v4856, 0.0
        %v4889 = vmax.f32 %v4857, 0.0
        %v4890 = vmax.f32 %v4858, 0.0
        %v4891 = vmax.f32 %v4859, 0.0
        %v4892 = vmax.f32 %v4860, 0.0
        %v4893 = vmax.f32 %v4861, 0.0
        %4894 = vst [vmem:[%s246] sm:$0xff] %v4862
        %4895 = vst [vmem:[%s246 + $0x8] sm:$0xff] %v4863
        %4896 = vst [vmem:[%s246 + $0x10] sm:$0xff] %v4864
        %4897 = vst [vmem:[%s246 + $0x18] sm:$0xff] %v4865
        %4898 = vst [vmem:[%s246 + $0x20] sm:$0xff] %v4866
        %4899 = vst [vmem:[%s246 + $0x28] sm:$0xff] %v4867
        %4900 = vst [vmem:[%s246 + $0x30] sm:$0xff] %v4868
        %4901 = vst [vmem:[%s246 + $0x38] sm:$0xff] %v4869
        %4902 = vst [vmem:[%s246 + $0x40] sm:$0xff] %v4870
        %4903 = vst [vmem:[%s246 + $0x48] sm:$0xff] %v4871
        %4904 = vst [vmem:[%s246 + $0x50] sm:$0xff] %v4872
        %4905 = vst [vmem:[%s246 + $0x58] sm:$0xff] %v4873
        %4906 = vst [vmem:[%s246 + $0x60] sm:$0xff] %v4874
        %4907 = vst [vmem:[%s246 + $0x68] sm:$0xff] %v4875
        %4908 = vst [vmem:[%s246 + $0x70] sm:$0xff] %v4876
        %4909 = vst [vmem:[%s246 + $0x78] sm:$0xff] %v4877
        %4910 = vst [vmem:[%s246 + $0x80] sm:$0xff] %v4878
        %4911 = vst [vmem:[%s246 + $0x88] sm:$0xff] %v4879
        %4912 = vst [vmem:[%s246 + $0x90] sm:$0xff] %v4880
        %4913 = vst [vmem:[%s246 + $0x98] sm:$0xff] %v4881
        %4914 = vst [vmem:[%s246 + $0xa0] sm:$0xff] %v4882
        %4915 = vst [vmem:[%s246 + $0xa8] sm:$0xff] %v4883
        %4916 = vst [vmem:[%s246 + $0xb0] sm:$0xff] %v4884
        %4917 = vst [vmem:[%s246 + $0xb8] sm:$0xff] %v4885
        %4918 = vst [vmem:[%s246 + $0xc0] sm:$0xff] %v4886
        %4919 = vst [vmem:[%s246 + $0xc8] sm:$0xff] %v4887
        %4920 = vst [vmem:[%s246 + $0xd0] sm:$0xff] %v4888
        %4921 = vst [vmem:[%s246 + $0xd8] sm:$0xff] %v4889
        %4922 = vst [vmem:[%s246 + $0xe0] sm:$0xff] %v4890
        %4923 = vst [vmem:[%s246 + $0xe8] sm:$0xff] %v4891
        %4924 = vst [vmem:[%s246 + $0xf0] sm:$0xff] %v4892
        %4925 = vst [vmem:[%s246 + $0xf8] sm:$0xff] %v4893
        %s4926 = sand.u32 %s141, 1
        %s4927 = scalar_lea.sflag [#allocation3], %s4926
        %s4928 = sand.u32 %s141, 1
        %s4929 = smul.addr %s4928, 256
        %s4930 = scalar_lea.vmem [#allocation2], %s4929
        // Predicated region
        $region37: #{tpu_custom_call.1} parent=35 // pred_check
          %p4931 = pneg %p151
        $region38: #{tpu_custom_call.1} parent=35 // pred_check_branch
          %4933 = sbr.rel (%p4931) target = $region40
        $region39: #{tpu_custom_call.1} parent=35 // pred_region
          %s4934 = smul.u32 32, %s23
          %4936 = vsyncadd %s4927, 0
          %s4937 = smul.addr %s22, 32
          %s4938 = sadd.s32 %s4934, %s4937
          %s4939 = smul.addr %s4938, 8
          %s4940 = scalar_lea.hbm %s4, %s4939
          %s4941 = sshll.u32 %s4930, 4
          %s4942 = int_to_ptr.vmem [resolvable:$true] %s4941
          %s4943 = sshll.u32 %s4940, 4
          %s4944 = int_to_ptr.hbm [resolvable:$true] %s4943
          %4949 = dma.vmem_to_hbm [thread:$0]  %s4942, 4096, %s4944, %s4927, 128, 128, 8
        $region40: #{tpu_custom_call.1} parent=35 // pred_fallthru
          _
      $region36: #{tpu_custom_call.1} parent=5 // pred_fallthru
        _
      %p4950 = scmp.le.s32.totalorder 2, %s13
      // Predicated region
      $region41: #{tpu_custom_call.1} parent=5 // pred_check
        %p4951 = pneg %p4950
      $region42: #{tpu_custom_call.1} parent=5 // pred_check_branch
        %4953 = sbr.rel (%p4951) target = $region44
      $region43: #{tpu_custom_call.1} parent=5 // pred_region
        %s4954 = ssub.s32 %s13, 2
        // Predicated region
        $region45: #{tpu_custom_call.1} parent=43 // pred_check
          %p4955 = pneg %p157
        $region46: #{tpu_custom_call.1} parent=43 // pred_check_branch
          %4957 = sbr.rel (%p4955) target = $region48
        $region47: #{tpu_custom_call.1} parent=43 // pred_region
          %s4958 = sand.u32 %s142, 1
          %s4959 = scalar_lea.sflag [#allocation3], %s4958
          %s4960 = sand.u32 %s142, 1
          %s4961 = smul.addr %s4960, 256
          %s4962 = scalar_lea.vmem [#allocation2], %s4961
          %4964 = dma.done %s4959, 4096
        $region48: #{tpu_custom_call.1} parent=43 // pred_fallthru
          _
      $region44: #{tpu_custom_call.1} parent=5 // pred_fallthru
        _
    $region6: #{tpu_custom_call.1} parent=1 // loop_footer
      %s17 = sadd.s32 1, %s13
    $region7: #{tpu_custom_call.1} parent=1 // loop_footer_branch
      %12 = sbr.rel target = $region3
    $region8: #{tpu_custom_call.1} parent=1 // loop_exit
      _
    %4965 = vsyncpa [#allocation3], 1
    %s4966 = scalar_lea.sflag [#allocation3], 1
    %4967 = vsyncpa %s4966, 1

</llo_original>
